<compile_context>
chip_gen: v6e
topology: v6e:2x2x1
jax: 0.10.0
libtpu: 0.0.40
codegen_flags: <defaults>
</compile_context>

<pallas_src>
import functools

import jax
import jax.numpy as jnp
from jax.experimental import pallas as pl
from jax.experimental.pallas import tpu as pltpu

BN_EPS = 0.8  # nn.BatchNorm2d(in_features, 0.8) -> eps = 0.8


# ---------------------------------------------------------------------------
# In-kernel helpers
# ---------------------------------------------------------------------------
def _stage_padded(pad_ref, interior_bf16):
    """Write `interior` into the centre of the (tn, H+2, W+2, C) bf16 halo
    scratch, zeroing only the 1-pixel border (the interior is fully rewritten
    every grid step, so no full-buffer clear is needed)."""
    tn, Hp, Wp, C = pad_ref.shape
    H, W = Hp - 2, Wp - 2
    zrow = jnp.zeros((tn, 1, Wp, C), pad_ref.dtype)
    zcol = jnp.zeros((tn, H, 1, C), pad_ref.dtype)
    pad_ref[:, 0:1, :, :] = zrow                               # top halo row
    pad_ref[:, H + 1:H + 2, :, :] = zrow                       # bottom halo row
    pad_ref[:, 1:H + 1, :, :] = jnp.concatenate(               # interior + L/R halo
        [zcol, interior_bf16, zcol], axis=2)


def _conv3x3_grouped(pad_ref, w_ref):
    """3x3 'same' conv of the staged bf16 tile as three grouped-K
    (M, 3C) x (3C, C) MXU matmuls (one per kernel row), f32 accumulation.

    Avoids the full (M, 9C) im2col buffer while keeping MXU contraction depth
    at 3C.  w_ref is (3, 3C, C): w_ref[dh] stacks the three dw taps' (C, C)
    matrices along K."""
    tn, Hp, Wp, C = pad_ref.shape
    H, W = Hp - 2, Wp - 2
    M = tn * H * W
    pad = pad_ref[...]                                          # bf16
    acc = jnp.zeros((M, C), jnp.float32)
    for dh in range(3):
        row = pad[:, dh:dh + H, :, :]                           # (tn, H, W+2, C)
        lhs = jnp.concatenate(
            [row[:, :, dw:dw + W, :].reshape(M, C) for dw in range(3)],
            axis=-1)                                            # (M, 3C) bf16
        acc = acc + jnp.dot(lhs, w_ref[dh],
                            preferred_element_type=jnp.float32)
    return acc                                                  # (M, C) f32


def _write_partial_stats(stats_ref, acc):
    """Per-tile column sum / sum-of-squares via a ones-row MXU matmul (keeps
    the cross-sublane reduction off the VPU/XLU path)."""
    M, C = acc.shape
    ones_row = jnp.ones((1, M), jnp.float32)
    s = jnp.dot(ones_row, acc, preferred_element_type=jnp.float32)         # (1, C)
    ss = jnp.dot(ones_row, acc * acc, preferred_element_type=jnp.float32)  # (1, C)
    stats_ref[...] = jnp.concatenate([s, ss], axis=0).reshape(1, 2, C)


# ---------------------------------------------------------------------------
# Kernels (one grid step == one batch tile)
# ---------------------------------------------------------------------------
def conv1_stats_kernel(x_ref, w1_ref, h1_ref, stats_ref, pad_ref):
    """Pass 1: h1 = conv1(x) (bias dropped — cancelled by training-mode BN);
    emit per-tile BN1 partial statistics."""
    tn, H, W, C = x_ref.shape
    _stage_padded(pad_ref, x_ref[...].astype(jnp.bfloat16))
    acc = _conv3x3_grouped(pad_ref, w1_ref)
    _write_partial_stats(stats_ref, acc)
    h1_ref[...] = acc.reshape(tn, H, W, C)


def bn1_prelu_conv2_kernel(h1_ref, scale1_ref, shift1_ref, alpha_ref, w2_ref,
                           h2_ref, stats_ref, pad_ref):
    """Pass 2: h2 = conv2(PReLU(bn1(h1))); emit per-tile BN2 partial stats."""
    tn, H, W, C = h1_ref.shape
    a = (h1_ref[...] * scale1_ref[...].reshape(1, 1, 1, C)
         + shift1_ref[...].reshape(1, 1, 1, C))
    a = jnp.where(a > 0, a, a * alpha_ref[...].reshape(1, 1, 1, C))  # PReLU
    _stage_padded(pad_ref, a.astype(jnp.bfloat16))
    acc = _conv3x3_grouped(pad_ref, w2_ref)
    _write_partial_stats(stats_ref, acc)
    h2_ref[...] = acc.reshape(tn, H, W, C)


def bn2_residual_kernel(x_ref, h2_ref, scale2_ref, shift2_ref, out_ref):
    """Pass 3: y = x + bn2(h2)."""
    C = x_ref.shape[-1]
    out_ref[...] = (x_ref[...]
                    + h2_ref[...] * scale2_ref[...].reshape(1, 1, 1, C)
                    + shift2_ref[...].reshape(1, 1, 1, C))


# ---------------------------------------------------------------------------
# Host-side helpers
# ---------------------------------------------------------------------------
def _bn_affine(partial_stats, gamma, beta, m_total):
    """Fold per-tile [sum, sumsq] into the training-mode (biased-variance)
    BatchNorm affine:  bn(h) = h * scale + shift.  O(C) work in plain JAX."""
    s = jnp.sum(partial_stats[:, 0, :], axis=0)
    ss = jnp.sum(partial_stats[:, 1, :], axis=0)
    mean = s / m_total
    # E[x^2] - E[x]^2 in f32; clamp guards tiny negative values.
    # TODO(synk): switch to a centered / Welford-style combine if eps shrinks.
    var = jnp.maximum(ss / m_total - mean * mean, 0.0)
    scale = gamma.reshape(-1) * jax.lax.rsqrt(var + BN_EPS)
    shift = beta.reshape(-1) - mean * scale
    return scale.reshape(1, -1), shift.reshape(1, -1)


def _vmem_limit_bytes(tile_n, H, W, C):
    """Per-step footprint (double-buffered tiles + resident weights + bf16 halo
    scratch + grouped-K staging + f32 temporaries), capped by device VMEM."""
    try:
        cap = int(pltpu.get_tpu_info().vmem_capacity_bytes)
    except Exception:  # interpret mode / older runtimes
        cap = 64 * 1024 * 1024
    act_f32 = tile_n * H * W * C * 4
    pad_bf16 = tile_n * (H + 2) * (W + 2) * C * 2
    lhs_bf16 = tile_n * H * W * 3 * C * 2
    w_bf16 = 2 * 3 * 3 * C * C * 2
    est = 4 * (4 * act_f32 + w_bf16 + pad_bf16 + 2 * lhs_bf16 + 4 * act_f32)
    return int(min(max(est, 16 * 1024 * 1024), int(cap * 0.9)))


@functools.partial(jax.jit, static_argnames=("tile_n",))
def residual_block_nhwc(x, params, *, tile_n=1):
    """Residual block on an NHWC activation (keep activations NHWC across a
    stack of blocks; convert layout only at the model boundary)."""
    N, H, W, C = x.shape
    assert N % tile_n == 0, "batch must be divisible by tile_n"
    T = N // tile_n
    x = x.astype(jnp.float32)

    # HWIO (3, 3, Cin, Cout) -> grouped-K (3, 3*Cin, Cout), bf16 MXU weights.
    w1 = params["w1"].reshape(3, 3 * C, C).astype(jnp.bfloat16)
    w2 = params["w2"].reshape(3, 3 * C, C).astype(jnp.bfloat16)
    alpha_vec = jnp.broadcast_to(params["alpha"].reshape(1, 1), (1, C))
    alpha_vec = alpha_vec.astype(jnp.float32)

    act_spec = pl.BlockSpec((tile_n, H, W, C), lambda t: (t, 0, 0, 0))
    w_spec = pl.BlockSpec((3, 3 * C, C), lambda t: (0, 0, 0))      # resident
    vec_spec = pl.BlockSpec((1, C), lambda t: (0, 0))              # resident
    stats_spec = pl.BlockSpec((1, 2, C), lambda t: (t, 0, 0))

    pad_scratch = pltpu.VMEM((tile_n, H + 2, W + 2, C), jnp.bfloat16)
    cparams = pltpu.CompilerParams(
        dimension_semantics=("parallel",),
        vmem_limit_bytes=_vmem_limit_bytes(tile_n, H, W, C))

    act_f32 = jax.ShapeDtypeStruct((N, H, W, C), jnp.float32)
    stats_f32 = jax.ShapeDtypeStruct((T, 2, C), jnp.float32)

    # ---- pass 1: conv1 + per-tile BN1 partial statistics --------------------
    h1, stats1 = pl.pallas_call(
        conv1_stats_kernel,
        grid=(T,),
        in_specs=[act_spec, w_spec],
        out_specs=(act_spec, stats_spec),
        out_shape=(act_f32, stats_f32),
        scratch_shapes=[pad_scratch],
        compiler_params=cparams,
    )(x, w1)
    scale1, shift1 = _bn_affine(stats1, params["g1"], params["beta1"], N * H * W)

    # ---- pass 2: BN1 apply + PReLU + conv2 + per-tile BN2 partial stats -----
    h2, stats2 = pl.pallas_call(
        bn1_prelu_conv2_kernel,
        grid=(T,),
        in_specs=[act_spec, vec_spec, vec_spec, vec_spec, w_spec],
        out_specs=(act_spec, stats_spec),
        out_shape=(act_f32, stats_f32),
        scratch_shapes=[pad_scratch],
        compiler_params=cparams,
    )(h1, scale1, shift1, alpha_vec, w2)
    scale2, shift2 = _bn_affine(stats2, params["g2"], params["beta2"], N * H * W)

    # ---- pass 3: BN2 apply + residual add ------------------------------------
    y = pl.pallas_call(
        bn2_residual_kernel,
        grid=(T,),
        in_specs=[act_spec, act_spec, vec_spec, vec_spec],
        out_specs=act_spec,
        out_shape=act_f32,
        compiler_params=cparams,
    )(x, h2, scale2, shift2)
    return y


@functools.partial(jax.jit, static_argnames=("tile_n",))
def residual_block(x_nchw, params, *, tile_n=1):
    """PyTorch-layout (NCHW) entry point; layout conversion only at the edge."""
    x = jnp.transpose(x_nchw, (0, 2, 3, 1))
    y = residual_block_nhwc(x, params, tile_n=tile_n)
    return jnp.transpose(y, (0, 3, 1, 2))


# ---------------------------------------------------------------------------
# Pure-JAX reference (mirrors the PyTorch module in training mode, f32)
# ---------------------------------------------------------------------------
def reference_forward(x_nchw, params):
    x = jnp.transpose(x_nchw, (0, 2, 3, 1)).astype(jnp.float32)
    C = x.shape[-1]

    def conv(inp, w, b):
        out = jax.lax.conv_general_dilated(
            inp, w, (1, 1), "SAME",
            dimension_numbers=("NHWC", "HWIO", "NHWC"),
            precision=jax.lax.Precision.HIGHEST)
        return out + b.reshape(1, 1, 1, C)

    def bn(h, g, b):
        mean = jnp.mean(h, axis=(0, 1, 2), keepdims=True)
        var = jnp.mean((h - mean) ** 2, axis=(0, 1, 2), keepdims=True)
        return ((h - mean) * jax.lax.rsqrt(var + BN_EPS)
                * g.reshape(1, 1, 1, C) + b.reshape(1, 1, 1, C))

    h = bn(conv(x, params["w1"], params["b1"]), params["g1"], params["beta1"])
    h = jnp.where(h > 0, h, h * params["alpha"][0, 0])
    h = bn(conv(h, params["w2"], params["b2"]), params["g2"], params["beta2"])
    return jnp.transpose(x + h, (0, 3, 1, 2))


def make_params(key, C):
    ks = jax.random.split(key, 8)
    return {
        # conv weights stored HWIO: [dh, dw, ci, co]
        "w1": 0.05 * jax.random.normal(ks[0], (3, 3, C, C), jnp.float32),
        "b1": 0.1 * jax.random.normal(ks[1], (1, C), jnp.float32),
        "g1": 1.0 + 0.1 * jax.random.normal(ks[2], (1, C), jnp.float32),
        "beta1": 0.05 * jax.random.normal(ks[3], (1, C), jnp.float32),
        "alpha": jnp.full((1, 1), 0.25, jnp.float32),  # PReLU default init
        "w2": 0.05 * jax.random.normal(ks[4], (3, 3, C, C), jnp.float32),
        "b2": 0.1 * jax.random.normal(ks[5], (1, C), jnp.float32),
        "g2": 1.0 + 0.1 * jax.random.normal(ks[6], (1, C), jnp.float32),
        "beta2": 0.05 * jax.random.normal(ks[7], (1, C), jnp.float32),
    }


if __name__ == "__main__":
    # Small shapes: batch=4, in_features=64 (SRGAN default), spatial 16x16.
    # tile_n=1 -> a 4-step "parallel" grid per pass (pipelined batch tiles).
    N, C, H, W = 4, 64, 16, 16
    key = jax.random.PRNGKey(0)
    kx, kp = jax.random.split(key)
    x = jax.random.normal(kx, (N, C, H, W), jnp.float32)  # NCHW, like PyTorch
    params = make_params(kp, C)

    y = residual_block(x, params, tile_n=1)
    y = jax.block_until_ready(y)

    y_ref = reference_forward(x, params)
    assert y.shape == (N, C, H, W)
    err = float(jnp.max(jnp.abs(y - y_ref)))
    # Tolerance accounts for bf16 MXU inputs (f32 accumulation) vs f32 ref.
    assert jnp.allclose(y, y_ref, rtol=3e-2, atol=3e-2), (
        f"mismatch vs pure-JAX reference: max abs err = {err}")
    print("KERNEL_OK")
</pallas_src>

<mosaic_0001>
module attributes {stable_mosaic.version = 11 : i64} {
  func.func @conv1_stats_kernel(%arg0: i32, %arg1: memref<1x16x16x64xf32, #tpu.memory_space<vmem>>, %arg2: memref<3x192x64xbf16, #tpu.memory_space<vmem>>, %arg3: memref<1x16x16x64xf32, #tpu.memory_space<vmem>>, %arg4: memref<1x2x64xf32, #tpu.memory_space<vmem>>, %arg5: memref<1x18x18x64xbf16, #tpu.memory_space<vmem>>) attributes {dimension_semantics = [#tpu.dimension_semantics<parallel>], iteration_bounds = array<i64: 4>, scalar_prefetch = 0 : i64, scratch_operands = 1 : i64, tpu.core_type = #tpu.core_type<tc>, window_params = [{transform_indices = @transform_0, window_bounds = array<i64: 1, 16, 16, 64>}, {pipeline_mode = #tpu.pipeline_mode<synchronous>, transform_indices = @transform_1, window_bounds = array<i64: 3, 192, 64>}, {transform_indices = @transform_2, window_bounds = array<i64: 1, 16, 16, 64>}, {transform_indices = @transform_3, window_bounds = array<i64: 1, 2, 64>}]} {
    %c0 = arith.constant 0 : index
    %c0_0 = arith.constant 0 : index
    %c0_1 = arith.constant 0 : index
    %c0_2 = arith.constant 0 : index
    %0 = vector.load %arg1[%c0, %c0_0, %c0_1, %c0_2] : memref<1x16x16x64xf32, #tpu.memory_space<vmem>>, vector<1x16x16x64xf32>
    %1 = arith.truncf %0 : vector<1x16x16x64xf32> to vector<1x16x16x64xbf16>
    %cst = arith.constant 0.000000e+00 : bf16
    %2 = vector.broadcast %cst : bf16 to vector<1x1x18x64xbf16>
    %cst_3 = arith.constant 0.000000e+00 : bf16
    %3 = vector.broadcast %cst_3 : bf16 to vector<1x16x1x64xbf16>
    %c0_4 = arith.constant 0 : index
    %c0_5 = arith.constant 0 : index
    %c0_6 = arith.constant 0 : index
    %c0_7 = arith.constant 0 : index
    %4 = vector.load %arg5[%c0_4, %c0_5, %c0_6, %c0_7] : memref<1x18x18x64xbf16, #tpu.memory_space<vmem>>, vector<1x1x18x64xbf16>
    tpu.vector_store %arg5[%c0_4, %c0_5, %c0_6, %c0_7], %2 {strides = array<i32>} : memref<1x18x18x64xbf16, #tpu.memory_space<vmem>>, vector<1x1x18x64xbf16>,
    %c0_8 = arith.constant 0 : index
    %c17 = arith.constant 17 : index
    %c0_9 = arith.constant 0 : index
    %c0_10 = arith.constant 0 : index
    %5 = vector.load %arg5[%c0_8, %c17, %c0_9, %c0_10] : memref<1x18x18x64xbf16, #tpu.memory_space<vmem>>, vector<1x1x18x64xbf16>
    tpu.vector_store %arg5[%c0_8, %c17, %c0_9, %c0_10], %2 {strides = array<i32>} : memref<1x18x18x64xbf16, #tpu.memory_space<vmem>>, vector<1x1x18x64xbf16>,
    %6 = tpu.concatenate %3, %1, %3 in 2 : vector<1x16x1x64xbf16>, vector<1x16x16x64xbf16>, vector<1x16x1x64xbf16> -> vector<1x16x18x64xbf16>
    %c0_11 = arith.constant 0 : index
    %c1 = arith.constant 1 : index
    %c0_12 = arith.constant 0 : index
    %c0_13 = arith.constant 0 : index
    %7 = vector.load %arg5[%c0_11, %c1, %c0_12, %c0_13] : memref<1x18x18x64xbf16, #tpu.memory_space<vmem>>, vector<1x16x18x64xbf16>
    tpu.vector_store %arg5[%c0_11, %c1, %c0_12, %c0_13], %6 {strides = array<i32>} : memref<1x18x18x64xbf16, #tpu.memory_space<vmem>>, vector<1x16x18x64xbf16>,
    %c0_14 = arith.constant 0 : index
    %c0_15 = arith.constant 0 : index
    %c0_16 = arith.constant 0 : index
    %c0_17 = arith.constant 0 : index
    %8 = vector.load %arg5[%c0_14, %c0_15, %c0_16, %c0_17] : memref<1x18x18x64xbf16, #tpu.memory_space<vmem>>, vector<1x18x18x64xbf16>
    %cst_18 = arith.constant 0.000000e+00 : f32
    %9 = vector.broadcast %cst_18 : f32 to vector<256x64xf32>
    %10 = vector.extract_strided_slice %8 {offsets = [0, 0, 0, 0], sizes = [1, 16, 18, 64], strides = [1, 1, 1, 1]} : vector<1x18x18x64xbf16> to vector<1x16x18x64xbf16>
    %11 = vector.extract_strided_slice %10 {offsets = [0, 0, 0, 0], sizes = [1, 16, 16, 64], strides = [1, 1, 1, 1]} : vector<1x16x18x64xbf16> to vector<1x16x16x64xbf16>
    %12 = vector.shape_cast %11 : vector<1x16x16x64xbf16> to vector<256x64xbf16>
    %13 = vector.extract_strided_slice %10 {offsets = [0, 0, 1, 0], sizes = [1, 16, 16, 64], strides = [1, 1, 1, 1]} : vector<1x16x18x64xbf16> to vector<1x16x16x64xbf16>
    %14 = vector.shape_cast %13 : vector<1x16x16x64xbf16> to vector<256x64xbf16>
    %15 = vector.extract_strided_slice %10 {offsets = [0, 0, 2, 0], sizes = [1, 16, 16, 64], strides = [1, 1, 1, 1]} : vector<1x16x18x64xbf16> to vector<1x16x16x64xbf16>
    %16 = vector.shape_cast %15 : vector<1x16x16x64xbf16> to vector<256x64xbf16>
    %17 = tpu.concatenate %12, %14, %16 in 1 : vector<256x64xbf16>, vector<256x64xbf16>, vector<256x64xbf16> -> vector<256x192xbf16>
    %c0_19 = arith.constant 0 : index
    %c0_20 = arith.constant 0 : index
    %c0_21 = arith.constant 0 : index
    %18 = vector.load %arg2[%c0_19, %c0_20, %c0_21] : memref<3x192x64xbf16, #tpu.memory_space<vmem>>, vector<1x192x64xbf16>
    %19 = vector.shape_cast %18 : vector<1x192x64xbf16> to vector<192x64xbf16>
    %cst_22 = arith.constant dense<0.000000e+00> : vector<256x64xf32>
    %20 = tpu.matmul %17, %19, %cst_22 {dimension_numbers = #tpu.dot_dimension_numbers<[1], [0], [0], [1], [0, 0, 1, 1], [], []>} : vector<256x192xbf16>, vector<192x64xbf16>, vector<256x64xf32> -> vector<256x64xf32>
    %21 = arith.addf %9, %20 : vector<256x64xf32>
    %22 = vector.extract_strided_slice %8 {offsets = [0, 1, 0, 0], sizes = [1, 16, 18, 64], strides = [1, 1, 1, 1]} : vector<1x18x18x64xbf16> to vector<1x16x18x64xbf16>
    %23 = vector.extract_strided_slice %22 {offsets = [0, 0, 0, 0], sizes = [1, 16, 16, 64], strides = [1, 1, 1, 1]} : vector<1x16x18x64xbf16> to vector<1x16x16x64xbf16>
    %24 = vector.shape_cast %23 : vector<1x16x16x64xbf16> to vector<256x64xbf16>
    %25 = vector.extract_strided_slice %22 {offsets = [0, 0, 1, 0], sizes = [1, 16, 16, 64], strides = [1, 1, 1, 1]} : vector<1x16x18x64xbf16> to vector<1x16x16x64xbf16>
    %26 = vector.shape_cast %25 : vector<1x16x16x64xbf16> to vector<256x64xbf16>
    %27 = vector.extract_strided_slice %22 {offsets = [0, 0, 2, 0], sizes = [1, 16, 16, 64], strides = [1, 1, 1, 1]} : vector<1x16x18x64xbf16> to vector<1x16x16x64xbf16>
    %28 = vector.shape_cast %27 : vector<1x16x16x64xbf16> to vector<256x64xbf16>
    %29 = tpu.concatenate %24, %26, %28 in 1 : vector<256x64xbf16>, vector<256x64xbf16>, vector<256x64xbf16> -> vector<256x192xbf16>
    %c1_23 = arith.constant 1 : index
    %c0_24 = arith.constant 0 : index
    %c0_25 = arith.constant 0 : index
    %30 = vector.load %arg2[%c1_23, %c0_24, %c0_25] : memref<3x192x64xbf16, #tpu.memory_space<vmem>>, vector<1x192x64xbf16>
    %31 = vector.shape_cast %30 : vector<1x192x64xbf16> to vector<192x64xbf16>
    %cst_26 = arith.constant dense<0.000000e+00> : vector<256x64xf32>
    %32 = tpu.matmul %29, %31, %cst_26 {dimension_numbers = #tpu.dot_dimension_numbers<[1], [0], [0], [1], [0, 0, 1, 1], [], []>} : vector<256x192xbf16>, vector<192x64xbf16>, vector<256x64xf32> -> vector<256x64xf32>
    %33 = arith.addf %21, %32 : vector<256x64xf32>
    %34 = vector.extract_strided_slice %8 {offsets = [0, 2, 0, 0], sizes = [1, 16, 18, 64], strides = [1, 1, 1, 1]} : vector<1x18x18x64xbf16> to vector<1x16x18x64xbf16>
    %35 = vector.extract_strided_slice %34 {offsets = [0, 0, 0, 0], sizes = [1, 16, 16, 64], strides = [1, 1, 1, 1]} : vector<1x16x18x64xbf16> to vector<1x16x16x64xbf16>
    %36 = vector.shape_cast %35 : vector<1x16x16x64xbf16> to vector<256x64xbf16>
    %37 = vector.extract_strided_slice %34 {offsets = [0, 0, 1, 0], sizes = [1, 16, 16, 64], strides = [1, 1, 1, 1]} : vector<1x16x18x64xbf16> to vector<1x16x16x64xbf16>
    %38 = vector.shape_cast %37 : vector<1x16x16x64xbf16> to vector<256x64xbf16>
    %39 = vector.extract_strided_slice %34 {offsets = [0, 0, 2, 0], sizes = [1, 16, 16, 64], strides = [1, 1, 1, 1]} : vector<1x16x18x64xbf16> to vector<1x16x16x64xbf16>
    %40 = vector.shape_cast %39 : vector<1x16x16x64xbf16> to vector<256x64xbf16>
    %41 = tpu.concatenate %36, %38, %40 in 1 : vector<256x64xbf16>, vector<256x64xbf16>, vector<256x64xbf16> -> vector<256x192xbf16>
    %c2 = arith.constant 2 : index
    %c0_27 = arith.constant 0 : index
    %c0_28 = arith.constant 0 : index
    %42 = vector.load %arg2[%c2, %c0_27, %c0_28] : memref<3x192x64xbf16, #tpu.memory_space<vmem>>, vector<1x192x64xbf16>
    %43 = vector.shape_cast %42 : vector<1x192x64xbf16> to vector<192x64xbf16>
    %cst_29 = arith.constant dense<0.000000e+00> : vector<256x64xf32>
    %44 = tpu.matmul %41, %43, %cst_29 {dimension_numbers = #tpu.dot_dimension_numbers<[1], [0], [0], [1], [0, 0, 1, 1], [], []>} : vector<256x192xbf16>, vector<192x64xbf16>, vector<256x64xf32> -> vector<256x64xf32>
    %45 = arith.addf %33, %44 : vector<256x64xf32>
    %cst_30 = arith.constant 1.000000e+00 : f32
    %46 = vector.broadcast %cst_30 : f32 to vector<1x256xf32>
    %cst_31 = arith.constant dense<0.000000e+00> : vector<1x64xf32>
    %47 = tpu.matmul %46, %45, %cst_31 {dimension_numbers = #tpu.dot_dimension_numbers<[1], [0], [0], [1], [0, 0, 1, 1], [], []>} : vector<1x256xf32>, vector<256x64xf32>, vector<1x64xf32> -> vector<1x64xf32>
    %48 = arith.mulf %45, %45 : vector<256x64xf32>
    %cst_32 = arith.constant dense<0.000000e+00> : vector<1x64xf32>
    %49 = tpu.matmul %46, %48, %cst_32 {dimension_numbers = #tpu.dot_dimension_numbers<[1], [0], [0], [1], [0, 0, 1, 1], [], []>} : vector<1x256xf32>, vector<256x64xf32>, vector<1x64xf32> -> vector<1x64xf32>
    %50 = tpu.concatenate %47, %49 in 0 : vector<1x64xf32>, vector<1x64xf32> -> vector<2x64xf32>
    %51 = vector.shape_cast %50 : vector<2x64xf32> to vector<1x2x64xf32>
    %c0_33 = arith.constant 0 : index
    %c0_34 = arith.constant 0 : index
    %c0_35 = arith.constant 0 : index
    %52 = vector.load %arg4[%c0_33, %c0_34, %c0_35] : memref<1x2x64xf32, #tpu.memory_space<vmem>>, vector<1x2x64xf32>
    tpu.vector_store %arg4[%c0_33, %c0_34, %c0_35], %51 {strides = array<i32>} : memref<1x2x64xf32, #tpu.memory_space<vmem>>, vector<1x2x64xf32>,
    %53 = vector.shape_cast %45 : vector<256x64xf32> to vector<1x16x16x64xf32>
    %c0_36 = arith.constant 0 : index
    %c0_37 = arith.constant 0 : index
    %c0_38 = arith.constant 0 : index
    %c0_39 = arith.constant 0 : index
    %54 = vector.load %arg3[%c0_36, %c0_37, %c0_38, %c0_39] : memref<1x16x16x64xf32, #tpu.memory_space<vmem>>, vector<1x16x16x64xf32>
    tpu.vector_store %arg3[%c0_36, %c0_37, %c0_38, %c0_39], %53 {strides = array<i32>} : memref<1x16x16x64xf32, #tpu.memory_space<vmem>>, vector<1x16x16x64xf32>,
    return
  }
  func.func @transform_0(%arg0: i32) -> (i32, i32, i32, i32) {
    %c0_i32 = arith.constant 0 : i32
    %c0_i32_0 = arith.constant 0 : i32
    %c0_i32_1 = arith.constant 0 : i32
    %c0_i32_2 = arith.constant 0 : i32
    return %arg0, %c0_i32, %c0_i32_0, %c0_i32_1 : i32, i32, i32, i32
  }
  func.func @transform_1(%arg0: i32) -> (i32, i32, i32) {
    %c0_i32 = arith.constant 0 : i32
    %c0_i32_0 = arith.constant 0 : i32
    %c0_i32_1 = arith.constant 0 : i32
    %c0_i32_2 = arith.constant 0 : i32
    return %c0_i32, %c0_i32_0, %c0_i32_1 : i32, i32, i32
  }
  func.func @transform_2(%arg0: i32) -> (i32, i32, i32, i32) {
    %c0_i32 = arith.constant 0 : i32
    %c0_i32_0 = arith.constant 0 : i32
    %c0_i32_1 = arith.constant 0 : i32
    %c0_i32_2 = arith.constant 0 : i32
    return %arg0, %c0_i32, %c0_i32_0, %c0_i32_1 : i32, i32, i32, i32
  }
  func.func @transform_3(%arg0: i32) -> (i32, i32, i32) {
    %c0_i32 = arith.constant 0 : i32
    %c0_i32_0 = arith.constant 0 : i32
    %c0_i32_1 = arith.constant 0 : i32
    return %arg0, %c0_i32, %c0_i32_0 : i32, i32, i32
  }
}

module attributes {stable_mosaic.version = 11 : i64} {
  func.func @bn1_prelu_conv2_kernel(%arg0: i32, %arg1: memref<1x16x16x64xf32, #tpu.memory_space<vmem>>, %arg2: memref<1x64xf32, #tpu.memory_space<vmem>>, %arg3: memref<1x64xf32, #tpu.memory_space<vmem>>, %arg4: memref<1x64xf32, #tpu.memory_space<vmem>>, %arg5: memref<3x192x64xbf16, #tpu.memory_space<vmem>>, %arg6: memref<1x16x16x64xf32, #tpu.memory_space<vmem>>, %arg7: memref<1x2x64xf32, #tpu.memory_space<vmem>>, %arg8: memref<1x18x18x64xbf16, #tpu.memory_space<vmem>>) attributes {dimension_semantics = [#tpu.dimension_semantics<parallel>], iteration_bounds = array<i64: 4>, scalar_prefetch = 0 : i64, scratch_operands = 1 : i64, tpu.core_type = #tpu.core_type<tc>, window_params = [{transform_indices = @transform_0, window_bounds = array<i64: 1, 16, 16, 64>}, {pipeline_mode = #tpu.pipeline_mode<synchronous>, transform_indices = @transform_1, window_bounds = array<i64: 1, 64>}, {pipeline_mode = #tpu.pipeline_mode<synchronous>, transform_indices = @transform_2, window_bounds = array<i64: 1, 64>}, {pipeline_mode = #tpu.pipeline_mode<synchronous>, transform_indices = @transform_3, window_bounds = array<i64: 1, 64>}, {pipeline_mode = #tpu.pipeline_mode<synchronous>, transform_indices = @transform_4, window_bounds = array<i64: 3, 192, 64>}, {transform_indices = @transform_5, window_bounds = array<i64: 1, 16, 16, 64>}, {transform_indices = @transform_6, window_bounds = array<i64: 1, 2, 64>}]} {
    %c0 = arith.constant 0 : index
    %c0_0 = arith.constant 0 : index
    %c0_1 = arith.constant 0 : index
    %c0_2 = arith.constant 0 : index
    %0 = vector.load %arg1[%c0, %c0_0, %c0_1, %c0_2] : memref<1x16x16x64xf32, #tpu.memory_space<vmem>>, vector<1x16x16x64xf32>
    %c0_3 = arith.constant 0 : index
    %c0_4 = arith.constant 0 : index
    %1 = vector.load %arg2[%c0_3, %c0_4] : memref<1x64xf32, #tpu.memory_space<vmem>>, vector<1x64xf32>
    %2 = vector.shape_cast %1 : vector<1x64xf32> to vector<1x1x1x64xf32>
    %3 = vector.broadcast %2 : vector<1x1x1x64xf32> to vector<1x16x16x64xf32>
    %4 = arith.mulf %0, %3 : vector<1x16x16x64xf32>
    %c0_5 = arith.constant 0 : index
    %c0_6 = arith.constant 0 : index
    %5 = vector.load %arg3[%c0_5, %c0_6] : memref<1x64xf32, #tpu.memory_space<vmem>>, vector<1x64xf32>
    %6 = vector.shape_cast %5 : vector<1x64xf32> to vector<1x1x1x64xf32>
    %7 = vector.broadcast %6 : vector<1x1x1x64xf32> to vector<1x16x16x64xf32>
    %8 = arith.addf %4, %7 : vector<1x16x16x64xf32>
    %cst = arith.constant 0.000000e+00 : f32
    %9 = vector.broadcast %cst : f32 to vector<1x16x16x64xf32>
    %10 = arith.cmpf ogt, %8, %9 : vector<1x16x16x64xf32>
    %c0_7 = arith.constant 0 : index
    %c0_8 = arith.constant 0 : index
    %11 = vector.load %arg4[%c0_7, %c0_8] : memref<1x64xf32, #tpu.memory_space<vmem>>, vector<1x64xf32>
    %12 = vector.shape_cast %11 : vector<1x64xf32> to vector<1x1x1x64xf32>
    %13 = vector.broadcast %12 : vector<1x1x1x64xf32> to vector<1x16x16x64xf32>
    %14 = arith.mulf %8, %13 : vector<1x16x16x64xf32>
    %15 = arith.select %10, %8, %14 : vector<1x16x16x64xi1>, vector<1x16x16x64xf32>
    %16 = arith.truncf %15 : vector<1x16x16x64xf32> to vector<1x16x16x64xbf16>
    %cst_9 = arith.constant 0.000000e+00 : bf16
    %17 = vector.broadcast %cst_9 : bf16 to vector<1x1x18x64xbf16>
    %cst_10 = arith.constant 0.000000e+00 : bf16
    %18 = vector.broadcast %cst_10 : bf16 to vector<1x16x1x64xbf16>
    %c0_11 = arith.constant 0 : index
    %c0_12 = arith.constant 0 : index
    %c0_13 = arith.constant 0 : index
    %c0_14 = arith.constant 0 : index
    %19 = vector.load %arg8[%c0_11, %c0_12, %c0_13, %c0_14] : memref<1x18x18x64xbf16, #tpu.memory_space<vmem>>, vector<1x1x18x64xbf16>
    tpu.vector_store %arg8[%c0_11, %c0_12, %c0_13, %c0_14], %17 {strides = array<i32>} : memref<1x18x18x64xbf16, #tpu.memory_space<vmem>>, vector<1x1x18x64xbf16>,
    %c0_15 = arith.constant 0 : index
    %c17 = arith.constant 17 : index
    %c0_16 = arith.constant 0 : index
    %c0_17 = arith.constant 0 : index
    %20 = vector.load %arg8[%c0_15, %c17, %c0_16, %c0_17] : memref<1x18x18x64xbf16, #tpu.memory_space<vmem>>, vector<1x1x18x64xbf16>
    tpu.vector_store %arg8[%c0_15, %c17, %c0_16, %c0_17], %17 {strides = array<i32>} : memref<1x18x18x64xbf16, #tpu.memory_space<vmem>>, vector<1x1x18x64xbf16>,
    %21 = tpu.concatenate %18, %16, %18 in 2 : vector<1x16x1x64xbf16>, vector<1x16x16x64xbf16>, vector<1x16x1x64xbf16> -> vector<1x16x18x64xbf16>
    %c0_18 = arith.constant 0 : index
    %c1 = arith.constant 1 : index
    %c0_19 = arith.constant 0 : index
    %c0_20 = arith.constant 0 : index
    %22 = vector.load %arg8[%c0_18, %c1, %c0_19, %c0_20] : memref<1x18x18x64xbf16, #tpu.memory_space<vmem>>, vector<1x16x18x64xbf16>
    tpu.vector_store %arg8[%c0_18, %c1, %c0_19, %c0_20], %21 {strides = array<i32>} : memref<1x18x18x64xbf16, #tpu.memory_space<vmem>>, vector<1x16x18x64xbf16>,
    %c0_21 = arith.constant 0 : index
    %c0_22 = arith.constant 0 : index
    %c0_23 = arith.constant 0 : index
    %c0_24 = arith.constant 0 : index
    %23 = vector.load %arg8[%c0_21, %c0_22, %c0_23, %c0_24] : memref<1x18x18x64xbf16, #tpu.memory_space<vmem>>, vector<1x18x18x64xbf16>
    %cst_25 = arith.constant 0.000000e+00 : f32
    %24 = vector.broadcast %cst_25 : f32 to vector<256x64xf32>
    %25 = vector.extract_strided_slice %23 {offsets = [0, 0, 0, 0], sizes = [1, 16, 18, 64], strides = [1, 1, 1, 1]} : vector<1x18x18x64xbf16> to vector<1x16x18x64xbf16>
    %26 = vector.extract_strided_slice %25 {offsets = [0, 0, 0, 0], sizes = [1, 16, 16, 64], strides = [1, 1, 1, 1]} : vector<1x16x18x64xbf16> to vector<1x16x16x64xbf16>
    %27 = vector.shape_cast %26 : vector<1x16x16x64xbf16> to vector<256x64xbf16>
    %28 = vector.extract_strided_slice %25 {offsets = [0, 0, 1, 0], sizes = [1, 16, 16, 64], strides = [1, 1, 1, 1]} : vector<1x16x18x64xbf16> to vector<1x16x16x64xbf16>
    %29 = vector.shape_cast %28 : vector<1x16x16x64xbf16> to vector<256x64xbf16>
    %30 = vector.extract_strided_slice %25 {offsets = [0, 0, 2, 0], sizes = [1, 16, 16, 64], strides = [1, 1, 1, 1]} : vector<1x16x18x64xbf16> to vector<1x16x16x64xbf16>
    %31 = vector.shape_cast %30 : vector<1x16x16x64xbf16> to vector<256x64xbf16>
    %32 = tpu.concatenate %27, %29, %31 in 1 : vector<256x64xbf16>, vector<256x64xbf16>, vector<256x64xbf16> -> vector<256x192xbf16>
    %c0_26 = arith.constant 0 : index
    %c0_27 = arith.constant 0 : index
    %c0_28 = arith.constant 0 : index
    %33 = vector.load %arg5[%c0_26, %c0_27, %c0_28] : memref<3x192x64xbf16, #tpu.memory_space<vmem>>, vector<1x192x64xbf16>
    %34 = vector.shape_cast %33 : vector<1x192x64xbf16> to vector<192x64xbf16>
    %cst_29 = arith.constant dense<0.000000e+00> : vector<256x64xf32>
    %35 = tpu.matmul %32, %34, %cst_29 {dimension_numbers = #tpu.dot_dimension_numbers<[1], [0], [0], [1], [0, 0, 1, 1], [], []>} : vector<256x192xbf16>, vector<192x64xbf16>, vector<256x64xf32> -> vector<256x64xf32>
    %36 = arith.addf %24, %35 : vector<256x64xf32>
    %37 = vector.extract_strided_slice %23 {offsets = [0, 1, 0, 0], sizes = [1, 16, 18, 64], strides = [1, 1, 1, 1]} : vector<1x18x18x64xbf16> to vector<1x16x18x64xbf16>
    %38 = vector.extract_strided_slice %37 {offsets = [0, 0, 0, 0], sizes = [1, 16, 16, 64], strides = [1, 1, 1, 1]} : vector<1x16x18x64xbf16> to vector<1x16x16x64xbf16>
    %39 = vector.shape_cast %38 : vector<1x16x16x64xbf16> to vector<256x64xbf16>
    %40 = vector.extract_strided_slice %37 {offsets = [0, 0, 1, 0], sizes = [1, 16, 16, 64], strides = [1, 1, 1, 1]} : vector<1x16x18x64xbf16> to vector<1x16x16x64xbf16>
    %41 = vector.shape_cast %40 : vector<1x16x16x64xbf16> to vector<256x64xbf16>
    %42 = vector.extract_strided_slice %37 {offsets = [0, 0, 2, 0], sizes = [1, 16, 16, 64], strides = [1, 1, 1, 1]} : vector<1x16x18x64xbf16> to vector<1x16x16x64xbf16>
    %43 = vector.shape_cast %42 : vector<1x16x16x64xbf16> to vector<256x64xbf16>
    %44 = tpu.concatenate %39, %41, %43 in 1 : vector<256x64xbf16>, vector<256x64xbf16>, vector<256x64xbf16> -> vector<256x192xbf16>
    %c1_30 = arith.constant 1 : index
    %c0_31 = arith.constant 0 : index
    %c0_32 = arith.constant 0 : index
    %45 = vector.load %arg5[%c1_30, %c0_31, %c0_32] : memref<3x192x64xbf16, #tpu.memory_space<vmem>>, vector<1x192x64xbf16>
    %46 = vector.shape_cast %45 : vector<1x192x64xbf16> to vector<192x64xbf16>
    %cst_33 = arith.constant dense<0.000000e+00> : vector<256x64xf32>
    %47 = tpu.matmul %44, %46, %cst_33 {dimension_numbers = #tpu.dot_dimension_numbers<[1], [0], [0], [1], [0, 0, 1, 1], [], []>} : vector<256x192xbf16>, vector<192x64xbf16>, vector<256x64xf32> -> vector<256x64xf32>
    %48 = arith.addf %36, %47 : vector<256x64xf32>
    %49 = vector.extract_strided_slice %23 {offsets = [0, 2, 0, 0], sizes = [1, 16, 18, 64], strides = [1, 1, 1, 1]} : vector<1x18x18x64xbf16> to vector<1x16x18x64xbf16>
    %50 = vector.extract_strided_slice %49 {offsets = [0, 0, 0, 0], sizes = [1, 16, 16, 64], strides = [1, 1, 1, 1]} : vector<1x16x18x64xbf16> to vector<1x16x16x64xbf16>
    %51 = vector.shape_cast %50 : vector<1x16x16x64xbf16> to vector<256x64xbf16>
    %52 = vector.extract_strided_slice %49 {offsets = [0, 0, 1, 0], sizes = [1, 16, 16, 64], strides = [1, 1, 1, 1]} : vector<1x16x18x64xbf16> to vector<1x16x16x64xbf16>
    %53 = vector.shape_cast %52 : vector<1x16x16x64xbf16> to vector<256x64xbf16>
    %54 = vector.extract_strided_slice %49 {offsets = [0, 0, 2, 0], sizes = [1, 16, 16, 64], strides = [1, 1, 1, 1]} : vector<1x16x18x64xbf16> to vector<1x16x16x64xbf16>
    %55 = vector.shape_cast %54 : vector<1x16x16x64xbf16> to vector<256x64xbf16>
    %56 = tpu.concatenate %51, %53, %55 in 1 : vector<256x64xbf16>, vector<256x64xbf16>, vector<256x64xbf16> -> vector<256x192xbf16>
    %c2 = arith.constant 2 : index
    %c0_34 = arith.constant 0 : index
    %c0_35 = arith.constant 0 : index
    %57 = vector.load %arg5[%c2, %c0_34, %c0_35] : memref<3x192x64xbf16, #tpu.memory_space<vmem>>, vector<1x192x64xbf16>
    %58 = vector.shape_cast %57 : vector<1x192x64xbf16> to vector<192x64xbf16>
    %cst_36 = arith.constant dense<0.000000e+00> : vector<256x64xf32>
    %59 = tpu.matmul %56, %58, %cst_36 {dimension_numbers = #tpu.dot_dimension_numbers<[1], [0], [0], [1], [0, 0, 1, 1], [], []>} : vector<256x192xbf16>, vector<192x64xbf16>, vector<256x64xf32> -> vector<256x64xf32>
    %60 = arith.addf %48, %59 : vector<256x64xf32>
    %cst_37 = arith.constant 1.000000e+00 : f32
    %61 = vector.broadcast %cst_37 : f32 to vector<1x256xf32>
    %cst_38 = arith.constant dense<0.000000e+00> : vector<1x64xf32>
    %62 = tpu.matmul %61, %60, %cst_38 {dimension_numbers = #tpu.dot_dimension_numbers<[1], [0], [0], [1], [0, 0, 1, 1], [], []>} : vector<1x256xf32>, vector<256x64xf32>, vector<1x64xf32> -> vector<1x64xf32>
    %63 = arith.mulf %60, %60 : vector<256x64xf32>
    %cst_39 = arith.constant dense<0.000000e+00> : vector<1x64xf32>
    %64 = tpu.matmul %61, %63, %cst_39 {dimension_numbers = #tpu.dot_dimension_numbers<[1], [0], [0], [1], [0, 0, 1, 1], [], []>} : vector<1x256xf32>, vector<256x64xf32>, vector<1x64xf32> -> vector<1x64xf32>
    %65 = tpu.concatenate %62, %64 in 0 : vector<1x64xf32>, vector<1x64xf32> -> vector<2x64xf32>
    %66 = vector.shape_cast %65 : vector<2x64xf32> to vector<1x2x64xf32>
    %c0_40 = arith.constant 0 : index
    %c0_41 = arith.constant 0 : index
    %c0_42 = arith.constant 0 : index
    %67 = vector.load %arg7[%c0_40, %c0_41, %c0_42] : memref<1x2x64xf32, #tpu.memory_space<vmem>>, vector<1x2x64xf32>
    tpu.vector_store %arg7[%c0_40, %c0_41, %c0_42], %66 {strides = array<i32>} : memref<1x2x64xf32, #tpu.memory_space<vmem>>, vector<1x2x64xf32>,
    %68 = vector.shape_cast %60 : vector<256x64xf32> to vector<1x16x16x64xf32>
    %c0_43 = arith.constant 0 : index
    %c0_44 = arith.constant 0 : index
    %c0_45 = arith.constant 0 : index
    %c0_46 = arith.constant 0 : index
    %69 = vector.load %arg6[%c0_43, %c0_44, %c0_45, %c0_46] : memref<1x16x16x64xf32, #tpu.memory_space<vmem>>, vector<1x16x16x64xf32>
    tpu.vector_store %arg6[%c0_43, %c0_44, %c0_45, %c0_46], %68 {strides = array<i32>} : memref<1x16x16x64xf32, #tpu.memory_space<vmem>>, vector<1x16x16x64xf32>,
    return
  }
  func.func @transform_0(%arg0: i32) -> (i32, i32, i32, i32) {
    %c0_i32 = arith.constant 0 : i32
    %c0_i32_0 = arith.constant 0 : i32
    %c0_i32_1 = arith.constant 0 : i32
    %c0_i32_2 = arith.constant 0 : i32
    return %arg0, %c0_i32, %c0_i32_0, %c0_i32_1 : i32, i32, i32, i32
  }
  func.func @transform_1(%arg0: i32) -> (i32, i32) {
    %c0_i32 = arith.constant 0 : i32
    %c0_i32_0 = arith.constant 0 : i32
    %c0_i32_1 = arith.constant 0 : i32
    return %c0_i32, %c0_i32_0 : i32, i32
  }
  func.func @transform_2(%arg0: i32) -> (i32, i32) {
    %c0_i32 = arith.constant 0 : i32
    %c0_i32_0 = arith.constant 0 : i32
    %c0_i32_1 = arith.constant 0 : i32
    return %c0_i32, %c0_i32_0 : i32, i32
  }
  func.func @transform_3(%arg0: i32) -> (i32, i32) {
    %c0_i32 = arith.constant 0 : i32
    %c0_i32_0 = arith.constant 0 : i32
    %c0_i32_1 = arith.constant 0 : i32
    return %c0_i32, %c0_i32_0 : i32, i32
  }
  func.func @transform_4(%arg0: i32) -> (i32, i32, i32) {
    %c0_i32 = arith.constant 0 : i32
    %c0_i32_0 = arith.constant 0 : i32
    %c0_i32_1 = arith.constant 0 : i32
    %c0_i32_2 = arith.constant 0 : i32
    return %c0_i32, %c0_i32_0, %c0_i32_1 : i32, i32, i32
  }
  func.func @transform_5(%arg0: i32) -> (i32, i32, i32, i32) {
    %c0_i32 = arith.constant 0 : i32
    %c0_i32_0 = arith.constant 0 : i32
    %c0_i32_1 = arith.constant 0 : i32
    %c0_i32_2 = arith.constant 0 : i32
    return %arg0, %c0_i32, %c0_i32_0, %c0_i32_1 : i32, i32, i32, i32
  }
  func.func @transform_6(%arg0: i32) -> (i32, i32, i32) {
    %c0_i32 = arith.constant 0 : i32
    %c0_i32_0 = arith.constant 0 : i32
    %c0_i32_1 = arith.constant 0 : i32
    return %arg0, %c0_i32, %c0_i32_0 : i32, i32, i32
  }
}

module attributes {stable_mosaic.version = 11 : i64} {
  func.func @bn2_residual_kernel(%arg0: i32, %arg1: memref<1x16x16x64xf32, #tpu.memory_space<vmem>>, %arg2: memref<1x16x16x64xf32, #tpu.memory_space<vmem>>, %arg3: memref<1x64xf32, #tpu.memory_space<vmem>>, %arg4: memref<1x64xf32, #tpu.memory_space<vmem>>, %arg5: memref<1x16x16x64xf32, #tpu.memory_space<vmem>>) attributes {dimension_semantics = [#tpu.dimension_semantics<parallel>], iteration_bounds = array<i64: 4>, scalar_prefetch = 0 : i64, scratch_operands = 0 : i64, tpu.core_type = #tpu.core_type<tc>, window_params = [{transform_indices = @transform_0, window_bounds = array<i64: 1, 16, 16, 64>}, {transform_indices = @transform_1, window_bounds = array<i64: 1, 16, 16, 64>}, {pipeline_mode = #tpu.pipeline_mode<synchronous>, transform_indices = @transform_2, window_bounds = array<i64: 1, 64>}, {pipeline_mode = #tpu.pipeline_mode<synchronous>, transform_indices = @transform_3, window_bounds = array<i64: 1, 64>}, {transform_indices = @transform_4, window_bounds = array<i64: 1, 16, 16, 64>}]} {
    %c0 = arith.constant 0 : index
    %c0_0 = arith.constant 0 : index
    %c0_1 = arith.constant 0 : index
    %c0_2 = arith.constant 0 : index
    %0 = vector.load %arg1[%c0, %c0_0, %c0_1, %c0_2] : memref<1x16x16x64xf32, #tpu.memory_space<vmem>>, vector<1x16x16x64xf32>
    %c0_3 = arith.constant 0 : index
    %c0_4 = arith.constant 0 : index
    %c0_5 = arith.constant 0 : index
    %c0_6 = arith.constant 0 : index
    %1 = vector.load %arg2[%c0_3, %c0_4, %c0_5, %c0_6] : memref<1x16x16x64xf32, #tpu.memory_space<vmem>>, vector<1x16x16x64xf32>
    %c0_7 = arith.constant 0 : index
    %c0_8 = arith.constant 0 : index
    %2 = vector.load %arg3[%c0_7, %c0_8] : memref<1x64xf32, #tpu.memory_space<vmem>>, vector<1x64xf32>
    %3 = vector.shape_cast %2 : vector<1x64xf32> to vector<1x1x1x64xf32>
    %4 = vector.broadcast %3 : vector<1x1x1x64xf32> to vector<1x16x16x64xf32>
    %5 = arith.mulf %1, %4 : vector<1x16x16x64xf32>
    %6 = arith.addf %0, %5 : vector<1x16x16x64xf32>
    %c0_9 = arith.constant 0 : index
    %c0_10 = arith.constant 0 : index
    %7 = vector.load %arg4[%c0_9, %c0_10] : memref<1x64xf32, #tpu.memory_space<vmem>>, vector<1x64xf32>
    %8 = vector.shape_cast %7 : vector<1x64xf32> to vector<1x1x1x64xf32>
    %9 = vector.broadcast %8 : vector<1x1x1x64xf32> to vector<1x16x16x64xf32>
    %10 = arith.addf %6, %9 : vector<1x16x16x64xf32>
    %c0_11 = arith.constant 0 : index
    %c0_12 = arith.constant 0 : index
    %c0_13 = arith.constant 0 : index
    %c0_14 = arith.constant 0 : index
    %11 = vector.load %arg5[%c0_11, %c0_12, %c0_13, %c0_14] : memref<1x16x16x64xf32, #tpu.memory_space<vmem>>, vector<1x16x16x64xf32>
    tpu.vector_store %arg5[%c0_11, %c0_12, %c0_13, %c0_14], %10 {strides = array<i32>} : memref<1x16x16x64xf32, #tpu.memory_space<vmem>>, vector<1x16x16x64xf32>,
    return
  }
  func.func @transform_0(%arg0: i32) -> (i32, i32, i32, i32) {
    %c0_i32 = arith.constant 0 : i32
    %c0_i32_0 = arith.constant 0 : i32
    %c0_i32_1 = arith.constant 0 : i32
    %c0_i32_2 = arith.constant 0 : i32
    return %arg0, %c0_i32, %c0_i32_0, %c0_i32_1 : i32, i32, i32, i32
  }
  func.func @transform_1(%arg0: i32) -> (i32, i32, i32, i32) {
    %c0_i32 = arith.constant 0 : i32
    %c0_i32_0 = arith.constant 0 : i32
    %c0_i32_1 = arith.constant 0 : i32
    %c0_i32_2 = arith.constant 0 : i32
    return %arg0, %c0_i32, %c0_i32_0, %c0_i32_1 : i32, i32, i32, i32
  }
  func.func @transform_2(%arg0: i32) -> (i32, i32) {
    %c0_i32 = arith.constant 0 : i32
    %c0_i32_0 = arith.constant 0 : i32
    %c0_i32_1 = arith.constant 0 : i32
    return %c0_i32, %c0_i32_0 : i32, i32
  }
  func.func @transform_3(%arg0: i32) -> (i32, i32) {
    %c0_i32 = arith.constant 0 : i32
    %c0_i32_0 = arith.constant 0 : i32
    %c0_i32_1 = arith.constant 0 : i32
    return %c0_i32, %c0_i32_0 : i32, i32
  }
  func.func @transform_4(%arg0: i32) -> (i32, i32, i32, i32) {
    %c0_i32 = arith.constant 0 : i32
    %c0_i32_0 = arith.constant 0 : i32
    %c0_i32_1 = arith.constant 0 : i32
    %c0_i32_2 = arith.constant 0 : i32
    return %arg0, %c0_i32, %c0_i32_0, %c0_i32_1 : i32, i32, i32, i32
  }
}

</mosaic_0001>

<llo_original>
// kernel: residual_block_nhwc.5
$region0: #{residual_block_nhwc.5}
  #allocation0 [shape = 'u32[]', space=smem, size = 0x4, offset = 0x4, fixed_abs, tag = 'smem constant byte address 0x4 - core index']
  #allocation1 [shape = 'u32[144,128]{1,0:T(1,128)}', space=vmem, size = 0x12000, scoped, tag = 'internal scratch']
  %s0 = inlined_call_operand.vmem [shape: f32[4,16,16,64], index: 0, kind: input, shape index: {}]
  %s1 = inlined_call_operand.vmem [shape: f32[4,16,16,64], index: 1, kind: input, shape index: {}]
  %s2 = inlined_call_operand.vmem [shape: f32[1,64], index: 2, kind: input, shape index: {}]
  %s3 = inlined_call_operand.vmem [shape: f32[1,64], index: 3, kind: input, shape index: {}]
  %s4 = inlined_call_operand.hbm [shape: f32[4,16,16,64], index: 4, kind: output, shape index: {}]
  %s5 = sld [smem:[#allocation0]]
  $region49: #{residual_block_nhwc.5} parent=0
    _
  %s7 = ssub.s32 1, %s5
  %s8 = scalar_select 0, %s7, %s5
  $region1: #{residual_block_nhwc.5} parent=0
    #allocation2 [shape = 'u8[262144]{0}', space=vmem, size = 0x40000, scoped, tag = 'output window, operand 0']
    #allocation3 [shape = 's32[2]{0}', space=sflag, size = 0x8, scoped, tag = 'scoped memory for residual_block_nhwc.5']
    %9 = vsyncpa [#allocation3], 0
    %s10 = scalar_lea.sflag [#allocation3], 1
    %11 = vsyncpa %s10, 0
    loop: start=0, step=1, limit=6
    $region2: #{residual_block_nhwc.5} parent=1 // loop_pre_header
      _
    $region3: #{residual_block_nhwc.5} parent=1 // loop_header
      %s13 = sphi 0, %s17
      %p14 = scmp.ge.s32.totalorder %s13, 6
      %s23 = sphi 0, %s25
      %s26 = sphi 0, %s23
      %s27 = sphi 0, %s26
      %s43 = sphi 0, %s27
      %s49 = sphi 0, %s51
      %s52 = sphi 0, %s49
      %s53 = sphi 0, %s52
      %s69 = sphi 0, %s53
      %s73 = sphi 0, %s73
      %s75 = sphi 0, %s73
      %s76 = sphi 0, %s75
      %s90 = sphi 0, %s76
      %s94 = sphi 0, %s94
      %s96 = sphi 0, %s94
      %s97 = sphi 0, %s96
      %s111 = sphi 0, %s97
      %s117 = sphi 0, %s119
      %s120 = sphi 0, %s117
      %s121 = sphi 0, %s120
      %s137 = sphi 0, %s121
    $region4: #{residual_block_nhwc.5} parent=1 // loop_header_branch
      %16 = sbr.rel (%p14) target = $region8
    $region5: #{residual_block_nhwc.5} parent=1 // loop_body
      %s18 = ssub.s32 %s13, 1
      %s19 = ssub.s32 %s13, 2
      %s20 = sadd.s32 %s13, 1
      %s21 = ssub.s32 %s13, %s20
      %p22 = scmp.eq.s32.totalorder %s21, 0
      %s24 = sadd.s32 %s23, 1
      %s25 = scalar_select %p22, %s23, %s24
      %p28 = pneg %p22
      %p29 = scmp.eq.s32.totalorder %s13, 3
      %p30 = por %p28, %p29
      %p31 = scmp.ne.s32.totalorder %s23, %s26
      %p32 = scmp.eq.s32.totalorder %s13, 0
      %p33 = por %p31, %p32
      %p34 = scmp.ne.s32.totalorder %s23, %s26
      %p35 = scmp.eq.s32.totalorder %s18, 3
      %p36 = por %p34, %p35
      %p37 = scmp.ne.s32.totalorder %s26, %s27
      %p38 = scmp.eq.s32.totalorder %s18, 0
      %p39 = por %p37, %p38
      %p40 = scmp.ne.s32.totalorder %s26, %s27
      %p41 = scmp.eq.s32.totalorder %s19, 3
      %p42 = por %p40, %p41
      %p44 = scmp.ne.s32.totalorder %s27, %s43
      %p45 = scmp.eq.s32.totalorder %s19, 0
      %p46 = por %p44, %p45
      %s47 = ssub.s32 %s13, %s20
      %p48 = scmp.eq.s32.totalorder %s47, 0
      %s50 = sadd.s32 %s49, 1
      %s51 = scalar_select %p48, %s49, %s50
      %p54 = pneg %p48
      %p55 = scmp.eq.s32.totalorder %s13, 3
      %p56 = por %p54, %p55
      %p57 = scmp.ne.s32.totalorder %s49, %s52
      %p58 = scmp.eq.s32.totalorder %s13, 0
      %p59 = por %p57, %p58
      %p60 = scmp.ne.s32.totalorder %s49, %s52
      %p61 = scmp.eq.s32.totalorder %s18, 3
      %p62 = por %p60, %p61
      %p63 = scmp.ne.s32.totalorder %s52, %s53
      %p64 = scmp.eq.s32.totalorder %s18, 0
      %p65 = por %p63, %p64
      %p66 = scmp.ne.s32.totalorder %s52, %s53
      %p67 = scmp.eq.s32.totalorder %s19, 3
      %p68 = por %p66, %p67
      %p70 = scmp.ne.s32.totalorder %s53, %s69
      %p71 = scmp.eq.s32.totalorder %s19, 0
      %p72 = por %p70, %p71
      %s74 = sadd.s32 %s73, 1
      %p77 = scmp.eq.s32.totalorder %s13, 3
      %p78 = scmp.ne.s32.totalorder %s73, %s75
      %p79 = scmp.eq.s32.totalorder %s13, 0
      %p80 = por %p78, %p79
      %p81 = scmp.ne.s32.totalorder %s73, %s75
      %p82 = scmp.eq.s32.totalorder %s18, 3
      %p83 = por %p81, %p82
      %p84 = scmp.ne.s32.totalorder %s75, %s76
      %p85 = scmp.eq.s32.totalorder %s18, 0
      %p86 = por %p84, %p85
      %p87 = scmp.ne.s32.totalorder %s75, %s76
      %p88 = scmp.eq.s32.totalorder %s19, 3
      %p89 = por %p87, %p88
      %p91 = scmp.ne.s32.totalorder %s76, %s90
      %p92 = scmp.eq.s32.totalorder %s19, 0
      %p93 = por %p91, %p92
      %s95 = sadd.s32 %s94, 1
      %p98 = scmp.eq.s32.totalorder %s13, 3
      %p99 = scmp.ne.s32.totalorder %s94, %s96
      %p100 = scmp.eq.s32.totalorder %s13, 0
      %p101 = por %p99, %p100
      %p102 = scmp.ne.s32.totalorder %s94, %s96
      %p103 = scmp.eq.s32.totalorder %s18, 3
      %p104 = por %p102, %p103
      %p105 = scmp.ne.s32.totalorder %s96, %s97
      %p106 = scmp.eq.s32.totalorder %s18, 0
      %p107 = por %p105, %p106
      %p108 = scmp.ne.s32.totalorder %s96, %s97
      %p109 = scmp.eq.s32.totalorder %s19, 3
      %p110 = por %p108, %p109
      %p112 = scmp.ne.s32.totalorder %s97, %s111
      %p113 = scmp.eq.s32.totalorder %s19, 0
      %p114 = por %p112, %p113
      %s115 = ssub.s32 %s13, %s20
      %p116 = scmp.eq.s32.totalorder %s115, 0
      %s118 = sadd.s32 %s117, 1
      %s119 = scalar_select %p116, %s117, %s118
      %p122 = pneg %p116
      %p123 = scmp.eq.s32.totalorder %s13, 3
      %p124 = por %p122, %p123
      %p125 = scmp.ne.s32.totalorder %s117, %s120
      %p126 = scmp.eq.s32.totalorder %s13, 0
      %p127 = por %p125, %p126
      %p128 = scmp.ne.s32.totalorder %s117, %s120
      %p129 = scmp.eq.s32.totalorder %s18, 3
      %p130 = por %p128, %p129
      %p131 = scmp.ne.s32.totalorder %s120, %s121
      %p132 = scmp.eq.s32.totalorder %s18, 0
      %p133 = por %p131, %p132
      %p134 = scmp.ne.s32.totalorder %s120, %s121
      %p135 = scmp.eq.s32.totalorder %s19, 3
      %p136 = por %p134, %p135
      %p138 = scmp.ne.s32.totalorder %s121, %s137
      %p139 = scmp.eq.s32.totalorder %s19, 0
      %p140 = por %p138, %p139
      %p141 = scmp.le.s32.totalorder 1, %s13
      %p142 = scmp.lt.s32.totalorder %s13, 5
      %p143 = pnand %p141, %p142
      %p144 = pneg %p143
      // Predicated region
      $region9: #{residual_block_nhwc.5} parent=5 // pred_check
        _
      $region10: #{residual_block_nhwc.5} parent=5 // pred_check_branch
        %146 = sbr.rel (%p143) target = $region12
      $region11: #{residual_block_nhwc.5} parent=5 // pred_region
        %s147 = ssub.s32 %s13, 1
        // Predicated region
        $region13: #{residual_block_nhwc.5} parent=11 // pred_check
          %p148 = pneg %p86
        $region14: #{residual_block_nhwc.5} parent=11 // pred_check_branch
          %150 = sbr.rel (%p148) target = $region16
        $region15: #{residual_block_nhwc.5} parent=11 // pred_region
          _
        $region16: #{residual_block_nhwc.5} parent=11 // pred_fallthru
          _
        // Predicated region
        $region17: #{residual_block_nhwc.5} parent=11 // pred_check
          %p151 = pneg %p107
        $region18: #{residual_block_nhwc.5} parent=11 // pred_check_branch
          %153 = sbr.rel (%p151) target = $region20
        $region19: #{residual_block_nhwc.5} parent=11 // pred_region
          _
        $region20: #{residual_block_nhwc.5} parent=11 // pred_fallthru
          _
      $region12: #{residual_block_nhwc.5} parent=5 // pred_fallthru
        _
      %p154 = scmp.lt.s32.totalorder %s13, 4
      // Predicated region
      $region21: #{residual_block_nhwc.5} parent=5 // pred_check
        %p155 = pneg %p154
      $region22: #{residual_block_nhwc.5} parent=5 // pred_check_branch
        %157 = sbr.rel (%p155) target = $region24
      $region23: #{residual_block_nhwc.5} parent=5 // pred_region
        // Predicated region
        $region25: #{residual_block_nhwc.5} parent=23 // pred_check
          %p158 = pneg %p33
        $region26: #{residual_block_nhwc.5} parent=23 // pred_check_branch
          %160 = sbr.rel (%p158) target = $region28
        $region27: #{residual_block_nhwc.5} parent=23 // pred_region
          %p161 = scmp.lt.s32.totalorder %s13, 3
          %s162 = scalar_select %p161, %s13, 3
          %s163 = smul.addr %s162, 32
          %s164 = smul.addr %s163, 8
          %s165 = scalar_lea.vmem %s0, %s164
        $region28: #{residual_block_nhwc.5} parent=23 // pred_fallthru
          _
        // Predicated region
        $region29: #{residual_block_nhwc.5} parent=23 // pred_check
          %p166 = pneg %p59
        $region30: #{residual_block_nhwc.5} parent=23 // pred_check_branch
          %168 = sbr.rel (%p166) target = $region32
        $region31: #{residual_block_nhwc.5} parent=23 // pred_region
          %p169 = scmp.lt.s32.totalorder %s13, 3
          %s170 = scalar_select %p169, %s13, 3
          %s171 = smul.addr %s170, 32
          %s172 = smul.addr %s171, 8
          %s173 = scalar_lea.vmem %s1, %s172
        $region32: #{residual_block_nhwc.5} parent=23 // pred_fallthru
          _
      $region24: #{residual_block_nhwc.5} parent=5 // pred_fallthru
        _
      %p174 = scmp.le.s32.totalorder 1, %s13
      %p175 = scmp.lt.s32.totalorder %s13, 5
      %p176 = pnand %p174, %p175
      %p177 = pneg %p176
      // Predicated region
      $region33: #{residual_block_nhwc.5} parent=5 // pred_check
        _
      $region34: #{residual_block_nhwc.5} parent=5 // pred_check_branch
        %179 = sbr.rel (%p176) target = $region36
      $region35: #{residual_block_nhwc.5} parent=5 // pred_region
        %s180 = ssub.s32 %s13, 1
        %p181 = scmp.lt.s32.totalorder %s18, 3
        %s182 = scalar_select %p181, %s18, 3
        %s183 = smul.addr %s182, 32
        %s184 = smul.addr %s183, 8
        %s185 = scalar_lea.vmem %s0, %s184
        %p186 = pneg %p39
        %p187 = pneg %p36
        %p188 = scmp.lt.s32.totalorder %s18, 3
        %s189 = scalar_select %p188, %s18, 3
        %s190 = smul.addr %s189, 32
        %s191 = smul.addr %s190, 8
        %s192 = scalar_lea.vmem %s1, %s191
        %p193 = pneg %p65
        %p194 = pneg %p62
        %p195 = pneg %p86
        %p196 = pneg %p83
        %p197 = pneg %p107
        %p198 = pneg %p104
        %p199 = pneg %p133
        %p200 = pneg %p130
        %s201 = sand.u32 %s120, 1
        %s202 = scalar_lea.sflag [#allocation3], %s201
        %s203 = sand.u32 %s120, 1
        %s204 = smul.addr %s203, 256
        %s205 = scalar_lea.vmem [#allocation2], %s204
        %p206 = scmp.lt.s32.totalorder %s18, 3
        %s207 = scalar_select %p206, %s18, 3
        %s208 = smul.addr %s207, 32
        %s209 = smul.addr %s208, 8
        %s210 = scalar_lea.vmem %s0, %s209
        %p211 = scmp.lt.s32.totalorder %s18, 3
        %s212 = scalar_select %p211, %s18, 3
        %s213 = smul.addr %s212, 32
        %s214 = smul.addr %s213, 8
        %s215 = scalar_lea.vmem %s1, %s214
        %v216 = vld [vmem:[%s210] sm:$0xff]
        %v217 = vld [vmem:[%s210 + $0x8] sm:$0xff]
        %v218 = vld [vmem:[%s210 + $0x10] sm:$0xff]
        %v219 = vld [vmem:[%s210 + $0x18] sm:$0xff]
        %v220 = vld [vmem:[%s210 + $0x20] sm:$0xff]
        %v221 = vld [vmem:[%s210 + $0x28] sm:$0xff]
        %v222 = vld [vmem:[%s210 + $0x30] sm:$0xff]
        %v223 = vld [vmem:[%s210 + $0x38] sm:$0xff]
        %v224 = vld [vmem:[%s210 + $0x40] sm:$0xff]
        %v225 = vld [vmem:[%s210 + $0x48] sm:$0xff]
        %v226 = vld [vmem:[%s210 + $0x50] sm:$0xff]
        %v227 = vld [vmem:[%s210 + $0x58] sm:$0xff]
        %v228 = vld [vmem:[%s210 + $0x60] sm:$0xff]
        %v229 = vld [vmem:[%s210 + $0x68] sm:$0xff]
        %v230 = vld [vmem:[%s210 + $0x70] sm:$0xff]
        %v231 = vld [vmem:[%s210 + $0x78] sm:$0xff]
        %v232 = vld [vmem:[%s210 + $0x80] sm:$0xff]
        %v233 = vld [vmem:[%s210 + $0x88] sm:$0xff]
        %v234 = vld [vmem:[%s210 + $0x90] sm:$0xff]
        %v235 = vld [vmem:[%s210 + $0x98] sm:$0xff]
        %v236 = vld [vmem:[%s210 + $0xa0] sm:$0xff]
        %v237 = vld [vmem:[%s210 + $0xa8] sm:$0xff]
        %v238 = vld [vmem:[%s210 + $0xb0] sm:$0xff]
        %v239 = vld [vmem:[%s210 + $0xb8] sm:$0xff]
        %v240 = vld [vmem:[%s210 + $0xc0] sm:$0xff]
        %v241 = vld [vmem:[%s210 + $0xc8] sm:$0xff]
        %v242 = vld [vmem:[%s210 + $0xd0] sm:$0xff]
        %v243 = vld [vmem:[%s210 + $0xd8] sm:$0xff]
        %v244 = vld [vmem:[%s210 + $0xe0] sm:$0xff]
        %v245 = vld [vmem:[%s210 + $0xe8] sm:$0xff]
        %v246 = vld [vmem:[%s210 + $0xf0] sm:$0xff]
        %v247 = vld [vmem:[%s210 + $0xf8] sm:$0xff]
        %v248 = vld [vmem:[%s215] sm:$0xff]
        %v249 = vld [vmem:[%s215 + $0x8] sm:$0xff]
        %v250 = vld [vmem:[%s215 + $0x10] sm:$0xff]
        %v251 = vld [vmem:[%s215 + $0x18] sm:$0xff]
        %v252 = vld [vmem:[%s215 + $0x20] sm:$0xff]
        %v253 = vld [vmem:[%s215 + $0x28] sm:$0xff]
        %v254 = vld [vmem:[%s215 + $0x30] sm:$0xff]
        %v255 = vld [vmem:[%s215 + $0x38] sm:$0xff]
        %v256 = vld [vmem:[%s215 + $0x40] sm:$0xff]
        %v257 = vld [vmem:[%s215 + $0x48] sm:$0xff]
        %v258 = vld [vmem:[%s215 + $0x50] sm:$0xff]
        %v259 = vld [vmem:[%s215 + $0x58] sm:$0xff]
        %v260 = vld [vmem:[%s215 + $0x60] sm:$0xff]
        %v261 = vld [vmem:[%s215 + $0x68] sm:$0xff]
        %v262 = vld [vmem:[%s215 + $0x70] sm:$0xff]
        %v263 = vld [vmem:[%s215 + $0x78] sm:$0xff]
        %v264 = vld [vmem:[%s215 + $0x80] sm:$0xff]
        %v265 = vld [vmem:[%s215 + $0x88] sm:$0xff]
        %v266 = vld [vmem:[%s215 + $0x90] sm:$0xff]
        %v267 = vld [vmem:[%s215 + $0x98] sm:$0xff]
        %v268 = vld [vmem:[%s215 + $0xa0] sm:$0xff]
        %v269 = vld [vmem:[%s215 + $0xa8] sm:$0xff]
        %v270 = vld [vmem:[%s215 + $0xb0] sm:$0xff]
        %v271 = vld [vmem:[%s215 + $0xb8] sm:$0xff]
        %v272 = vld [vmem:[%s215 + $0xc0] sm:$0xff]
        %v273 = vld [vmem:[%s215 + $0xc8] sm:$0xff]
        %v274 = vld [vmem:[%s215 + $0xd0] sm:$0xff]
        %v275 = vld [vmem:[%s215 + $0xd8] sm:$0xff]
        %v276 = vld [vmem:[%s215 + $0xe0] sm:$0xff]
        %v277 = vld [vmem:[%s215 + $0xe8] sm:$0xff]
        %v278 = vld [vmem:[%s215 + $0xf0] sm:$0xff]
        %v279 = vld [vmem:[%s215 + $0xf8] sm:$0xff]
        %v280 = vld [vmem:[%s2] sm:$0x1]
        %v282 = vlaneseq
        %v283 = vshrl.u32 %v282, 7
        %v284 = vsub.s32 0, %v283
        %v285 = vrot.slane %v280, %v284
        %v287 = vmul.f32 %v248, %v285
        %v288 = vmul.f32 %v249, %v285
        %v289 = vmul.f32 %v250, %v285
        %v290 = vmul.f32 %v251, %v285
        %v291 = vmul.f32 %v252, %v285
        %v292 = vmul.f32 %v253, %v285
        %v293 = vmul.f32 %v254, %v285
        %v294 = vmul.f32 %v255, %v285
        %v295 = vmul.f32 %v256, %v285
        %v296 = vmul.f32 %v257, %v285
        %v297 = vmul.f32 %v258, %v285
        %v298 = vmul.f32 %v259, %v285
        %v299 = vmul.f32 %v260, %v285
        %v300 = vmul.f32 %v261, %v285
        %v301 = vmul.f32 %v262, %v285
        %v302 = vmul.f32 %v263, %v285
        %v303 = vmul.f32 %v264, %v285
        %v304 = vmul.f32 %v265, %v285
        %v305 = vmul.f32 %v266, %v285
        %v306 = vmul.f32 %v267, %v285
        %v307 = vmul.f32 %v268, %v285
        %v308 = vmul.f32 %v269, %v285
        %v309 = vmul.f32 %v270, %v285
        %v310 = vmul.f32 %v271, %v285
        %v311 = vmul.f32 %v272, %v285
        %v312 = vmul.f32 %v273, %v285
        %v313 = vmul.f32 %v274, %v285
        %v314 = vmul.f32 %v275, %v285
        %v315 = vmul.f32 %v276, %v285
        %v316 = vmul.f32 %v277, %v285
        %v317 = vmul.f32 %v278, %v285
        %v318 = vmul.f32 %v279, %v285
        %v319 = vadd.f32 %v216, %v287
        %v320 = vadd.f32 %v217, %v288
        %v321 = vadd.f32 %v218, %v289
        %v322 = vadd.f32 %v219, %v290
        %v323 = vadd.f32 %v220, %v291
        %v324 = vadd.f32 %v221, %v292
        %v325 = vadd.f32 %v222, %v293
        %v326 = vadd.f32 %v223, %v294
        %v327 = vadd.f32 %v224, %v295
        %v328 = vadd.f32 %v225, %v296
        %v329 = vadd.f32 %v226, %v297
        %v330 = vadd.f32 %v227, %v298
        %v331 = vadd.f32 %v228, %v299
        %v332 = vadd.f32 %v229, %v300
        %v333 = vadd.f32 %v230, %v301
        %v334 = vadd.f32 %v231, %v302
        %v335 = vadd.f32 %v232, %v303
        %v336 = vadd.f32 %v233, %v304
        %v337 = vadd.f32 %v234, %v305
        %v338 = vadd.f32 %v235, %v306
        %v339 = vadd.f32 %v236, %v307
        %v340 = vadd.f32 %v237, %v308
        %v341 = vadd.f32 %v238, %v309
        %v342 = vadd.f32 %v239, %v310
        %v343 = vadd.f32 %v240, %v311
        %v344 = vadd.f32 %v241, %v312
        %v345 = vadd.f32 %v242, %v313
        %v346 = vadd.f32 %v243, %v314
        %v347 = vadd.f32 %v244, %v315
        %v348 = vadd.f32 %v245, %v316
        %v349 = vadd.f32 %v246, %v317
        %v350 = vadd.f32 %v247, %v318
        %v351 = vld [vmem:[%s3] sm:$0x1]
        %v353 = vlaneseq
        %v354 = vshrl.u32 %v353, 7
        %v355 = vsub.s32 0, %v354
        %v356 = vrot.slane %v351, %v355
        %v358 = vadd.f32 %v319, %v356
        %v359 = vadd.f32 %v320, %v356
        %v360 = vadd.f32 %v321, %v356
        %v361 = vadd.f32 %v322, %v356
        %v362 = vadd.f32 %v323, %v356
        %v363 = vadd.f32 %v324, %v356
        %v364 = vadd.f32 %v325, %v356
        %v365 = vadd.f32 %v326, %v356
        %v366 = vadd.f32 %v327, %v356
        %v367 = vadd.f32 %v328, %v356
        %v368 = vadd.f32 %v329, %v356
        %v369 = vadd.f32 %v330, %v356
        %v370 = vadd.f32 %v331, %v356
        %v371 = vadd.f32 %v332, %v356
        %v372 = vadd.f32 %v333, %v356
        %v373 = vadd.f32 %v334, %v356
        %v374 = vadd.f32 %v335, %v356
        %v375 = vadd.f32 %v336, %v356
        %v376 = vadd.f32 %v337, %v356
        %v377 = vadd.f32 %v338, %v356
        %v378 = vadd.f32 %v339, %v356
        %v379 = vadd.f32 %v340, %v356
        %v380 = vadd.f32 %v341, %v356
        %v381 = vadd.f32 %v342, %v356
        %v382 = vadd.f32 %v343, %v356
        %v383 = vadd.f32 %v344, %v356
        %v384 = vadd.f32 %v345, %v356
        %v385 = vadd.f32 %v346, %v356
        %v386 = vadd.f32 %v347, %v356
        %v387 = vadd.f32 %v348, %v356
        %v388 = vadd.f32 %v349, %v356
        %v389 = vadd.f32 %v350, %v356
        %vm390 = vcmask 523264
        %391 = vst.msk [vmem:[%s205] sm:$0xff] %vm390, %v358
        %392 = vst.msk [vmem:[%s205 + $0x8] sm:$0xff] %vm390, %v359
        %393 = vst.msk [vmem:[%s205 + $0x10] sm:$0xff] %vm390, %v360
        %394 = vst.msk [vmem:[%s205 + $0x18] sm:$0xff] %vm390, %v361
        %395 = vst.msk [vmem:[%s205 + $0x20] sm:$0xff] %vm390, %v362
        %396 = vst.msk [vmem:[%s205 + $0x28] sm:$0xff] %vm390, %v363
        %397 = vst.msk [vmem:[%s205 + $0x30] sm:$0xff] %vm390, %v364
        %398 = vst.msk [vmem:[%s205 + $0x38] sm:$0xff] %vm390, %v365
        %399 = vst.msk [vmem:[%s205 + $0x40] sm:$0xff] %vm390, %v366
        %400 = vst.msk [vmem:[%s205 + $0x48] sm:$0xff] %vm390, %v367
        %401 = vst.msk [vmem:[%s205 + $0x50] sm:$0xff] %vm390, %v368
        %402 = vst.msk [vmem:[%s205 + $0x58] sm:$0xff] %vm390, %v369
        %403 = vst.msk [vmem:[%s205 + $0x60] sm:$0xff] %vm390, %v370
        %404 = vst.msk [vmem:[%s205 + $0x68] sm:$0xff] %vm390, %v371
        %405 = vst.msk [vmem:[%s205 + $0x70] sm:$0xff] %vm390, %v372
        %406 = vst.msk [vmem:[%s205 + $0x78] sm:$0xff] %vm390, %v373
        %407 = vst.msk [vmem:[%s205 + $0x80] sm:$0xff] %vm390, %v374
        %408 = vst.msk [vmem:[%s205 + $0x88] sm:$0xff] %vm390, %v375
        %409 = vst.msk [vmem:[%s205 + $0x90] sm:$0xff] %vm390, %v376
        %410 = vst.msk [vmem:[%s205 + $0x98] sm:$0xff] %vm390, %v377
        %411 = vst.msk [vmem:[%s205 + $0xa0] sm:$0xff] %vm390, %v378
        %412 = vst.msk [vmem:[%s205 + $0xa8] sm:$0xff] %vm390, %v379
        %413 = vst.msk [vmem:[%s205 + $0xb0] sm:$0xff] %vm390, %v380
        %414 = vst.msk [vmem:[%s205 + $0xb8] sm:$0xff] %vm390, %v381
        %415 = vst.msk [vmem:[%s205 + $0xc0] sm:$0xff] %vm390, %v382
        %416 = vst.msk [vmem:[%s205 + $0xc8] sm:$0xff] %vm390, %v383
        %417 = vst.msk [vmem:[%s205 + $0xd0] sm:$0xff] %vm390, %v384
        %418 = vst.msk [vmem:[%s205 + $0xd8] sm:$0xff] %vm390, %v385
        %419 = vst.msk [vmem:[%s205 + $0xe0] sm:$0xff] %vm390, %v386
        %420 = vst.msk [vmem:[%s205 + $0xe8] sm:$0xff] %vm390, %v387
        %421 = vst.msk [vmem:[%s205 + $0xf0] sm:$0xff] %vm390, %v388
        %422 = vst.msk [vmem:[%s205 + $0xf8] sm:$0xff] %vm390, %v389
        %s423 = sand.u32 %s120, 1
        %s424 = scalar_lea.sflag [#allocation3], %s423
        %s425 = sand.u32 %s120, 1
        %s426 = smul.addr %s425, 256
        %s427 = scalar_lea.vmem [#allocation2], %s426
        // Predicated region
        $region37: #{residual_block_nhwc.5} parent=35 // pred_check
          %p428 = pneg %p130
        $region38: #{residual_block_nhwc.5} parent=35 // pred_check_branch
          %430 = sbr.rel (%p428) target = $region40
        $region39: #{residual_block_nhwc.5} parent=35 // pred_region
          %s432 = ssub.s32 4096, 4096
          %433 = vsyncadd %s424, %s432
          %s434 = smul.addr %s18, 32
          %s435 = smul.addr %s434, 128
          %s436 = scalar_lea.hbm %s4, %s435
          %s437 = sshll.u32 %s427, 4
          %s438 = int_to_ptr.vmem [resolvable:$true] %s437
          %443 = dma.vmem_to_hbm [thread:$0]  %s438, 4096, %s436, %s424, 128, 128, 8
        $region40: #{residual_block_nhwc.5} parent=35 // pred_fallthru
          _
      $region36: #{residual_block_nhwc.5} parent=5 // pred_fallthru
        _
      %p444 = scmp.le.s32.totalorder 2, %s13
      // Predicated region
      $region41: #{residual_block_nhwc.5} parent=5 // pred_check
        %p445 = pneg %p444
      $region42: #{residual_block_nhwc.5} parent=5 // pred_check_branch
        %447 = sbr.rel (%p445) target = $region44
      $region43: #{residual_block_nhwc.5} parent=5 // pred_region
        %s448 = ssub.s32 %s13, 2
        // Predicated region
        $region45: #{residual_block_nhwc.5} parent=43 // pred_check
          %p449 = pneg %p136
        $region46: #{residual_block_nhwc.5} parent=43 // pred_check_branch
          %451 = sbr.rel (%p449) target = $region48
        $region47: #{residual_block_nhwc.5} parent=43 // pred_region
          %s452 = sand.u32 %s121, 1
          %s453 = scalar_lea.sflag [#allocation3], %s452
          %s454 = sand.u32 %s121, 1
          %s455 = smul.addr %s454, 256
          %s456 = scalar_lea.vmem [#allocation2], %s455
          %457 = dma.done %s453, 4096
        $region48: #{residual_block_nhwc.5} parent=43 // pred_fallthru
          _
      $region44: #{residual_block_nhwc.5} parent=5 // pred_fallthru
        _
    $region6: #{residual_block_nhwc.5} parent=1 // loop_footer
      %s17 = sadd.s32 1, %s13
    $region7: #{residual_block_nhwc.5} parent=1 // loop_footer_branch
      %12 = sbr.rel target = $region3
    $region8: #{residual_block_nhwc.5} parent=1 // loop_exit
      _
    %458 = vsyncpa [#allocation3], 1
    %s459 = scalar_lea.sflag [#allocation3], 1
    %460 = vsyncpa %s459, 1

// kernel: residual_block_nhwc.4
$region0: #{residual_block_nhwc.4}
  #allocation0 [shape = 'u32[]', space=smem, size = 0x4, offset = 0x4, fixed_abs, tag = 'smem constant byte address 0x4 - core index']
  #allocation1 [shape = 'u32[144,128]{1,0:T(1,128)}', space=vmem, size = 0x12000, scoped, tag = 'internal scratch']
  #allocation2 [shape = 'bf16[1,18,18,64]{3,2,1,0:T(8,128)(2,1)}', space=vmem, size = 0x1b000, scoped, tag = 'scratch operand']
  %s0 = inlined_call_operand.vmem [shape: f32[4,16,16,64], index: 0, kind: input, shape index: {}]
  %s1 = inlined_call_operand.vmem [shape: f32[1,64], index: 1, kind: input, shape index: {}]
  %s2 = inlined_call_operand.vmem [shape: f32[1,64], index: 2, kind: input, shape index: {}]
  %s3 = inlined_call_operand.vmem [shape: f32[1,64], index: 3, kind: input, shape index: {}]
  %s4 = inlined_call_operand.vmem [shape: bf16[3,192,64], index: 4, kind: input, shape index: {}]
  %s5 = inlined_call_operand.vmem [shape: f32[4,16,16,64], index: 5, kind: output, shape index: {0}]
  %s6 = inlined_call_operand.vmem [shape: f32[4,2,64], index: 6, kind: output, shape index: {1}]
  %7 = xla_tuple %s5, %s6
  %s8 = sld [smem:[#allocation0]]
  $region61: #{residual_block_nhwc.4} parent=0
    _
  %s10 = ssub.s32 1, %s8
  %s11 = scalar_select 0, %s10, %s8
  loop: start=0, step=1, limit=6
  $region2: #{residual_block_nhwc.4} parent=0 // loop_pre_header
    _
  $region3: #{residual_block_nhwc.4} parent=0 // loop_header
    %s13 = sphi 0, %s17
    %p14 = scmp.ge.s32.totalorder %s13, 6
    %s23 = sphi 0, %s25
    %s26 = sphi 0, %s23
    %s27 = sphi 0, %s26
    %s43 = sphi 0, %s27
    %s47 = sphi 0, %s47
    %s49 = sphi 0, %s47
    %s50 = sphi 0, %s49
    %s64 = sphi 0, %s50
    %s68 = sphi 0, %s68
    %s70 = sphi 0, %s68
    %s71 = sphi 0, %s70
    %s85 = sphi 0, %s71
    %s89 = sphi 0, %s89
    %s91 = sphi 0, %s89
    %s92 = sphi 0, %s91
    %s106 = sphi 0, %s92
    %s110 = sphi 0, %s110
    %s112 = sphi 0, %s110
    %s113 = sphi 0, %s112
    %s127 = sphi 0, %s113
    %s133 = sphi 0, %s135
    %s136 = sphi 0, %s133
    %s137 = sphi 0, %s136
    %s153 = sphi 0, %s137
    %s159 = sphi 0, %s161
    %s162 = sphi 0, %s159
    %s163 = sphi 0, %s162
    %s179 = sphi 0, %s163
  $region4: #{residual_block_nhwc.4} parent=0 // loop_header_branch
    %16 = sbr.rel (%p14) target = $region8
  $region5: #{residual_block_nhwc.4} parent=0 // loop_body
    %s18 = ssub.s32 %s13, 1
    %s19 = ssub.s32 %s13, 2
    %s20 = sadd.s32 %s13, 1
    %s21 = ssub.s32 %s13, %s20
    %p22 = scmp.eq.s32.totalorder %s21, 0
    %s24 = sadd.s32 %s23, 1
    %s25 = scalar_select %p22, %s23, %s24
    %p28 = pneg %p22
    %p29 = scmp.eq.s32.totalorder %s13, 3
    %p30 = por %p28, %p29
    %p31 = scmp.ne.s32.totalorder %s23, %s26
    %p32 = scmp.eq.s32.totalorder %s13, 0
    %p33 = por %p31, %p32
    %p34 = scmp.ne.s32.totalorder %s23, %s26
    %p35 = scmp.eq.s32.totalorder %s18, 3
    %p36 = por %p34, %p35
    %p37 = scmp.ne.s32.totalorder %s26, %s27
    %p38 = scmp.eq.s32.totalorder %s18, 0
    %p39 = por %p37, %p38
    %p40 = scmp.ne.s32.totalorder %s26, %s27
    %p41 = scmp.eq.s32.totalorder %s19, 3
    %p42 = por %p40, %p41
    %p44 = scmp.ne.s32.totalorder %s27, %s43
    %p45 = scmp.eq.s32.totalorder %s19, 0
    %p46 = por %p44, %p45
    %s48 = sadd.s32 %s47, 1
    %p51 = scmp.eq.s32.totalorder %s13, 3
    %p52 = scmp.ne.s32.totalorder %s47, %s49
    %p53 = scmp.eq.s32.totalorder %s13, 0
    %p54 = por %p52, %p53
    %p55 = scmp.ne.s32.totalorder %s47, %s49
    %p56 = scmp.eq.s32.totalorder %s18, 3
    %p57 = por %p55, %p56
    %p58 = scmp.ne.s32.totalorder %s49, %s50
    %p59 = scmp.eq.s32.totalorder %s18, 0
    %p60 = por %p58, %p59
    %p61 = scmp.ne.s32.totalorder %s49, %s50
    %p62 = scmp.eq.s32.totalorder %s19, 3
    %p63 = por %p61, %p62
    %p65 = scmp.ne.s32.totalorder %s50, %s64
    %p66 = scmp.eq.s32.totalorder %s19, 0
    %p67 = por %p65, %p66
    %s69 = sadd.s32 %s68, 1
    %p72 = scmp.eq.s32.totalorder %s13, 3
    %p73 = scmp.ne.s32.totalorder %s68, %s70
    %p74 = scmp.eq.s32.totalorder %s13, 0
    %p75 = por %p73, %p74
    %p76 = scmp.ne.s32.totalorder %s68, %s70
    %p77 = scmp.eq.s32.totalorder %s18, 3
    %p78 = por %p76, %p77
    %p79 = scmp.ne.s32.totalorder %s70, %s71
    %p80 = scmp.eq.s32.totalorder %s18, 0
    %p81 = por %p79, %p80
    %p82 = scmp.ne.s32.totalorder %s70, %s71
    %p83 = scmp.eq.s32.totalorder %s19, 3
    %p84 = por %p82, %p83
    %p86 = scmp.ne.s32.totalorder %s71, %s85
    %p87 = scmp.eq.s32.totalorder %s19, 0
    %p88 = por %p86, %p87
    %s90 = sadd.s32 %s89, 1
    %p93 = scmp.eq.s32.totalorder %s13, 3
    %p94 = scmp.ne.s32.totalorder %s89, %s91
    %p95 = scmp.eq.s32.totalorder %s13, 0
    %p96 = por %p94, %p95
    %p97 = scmp.ne.s32.totalorder %s89, %s91
    %p98 = scmp.eq.s32.totalorder %s18, 3
    %p99 = por %p97, %p98
    %p100 = scmp.ne.s32.totalorder %s91, %s92
    %p101 = scmp.eq.s32.totalorder %s18, 0
    %p102 = por %p100, %p101
    %p103 = scmp.ne.s32.totalorder %s91, %s92
    %p104 = scmp.eq.s32.totalorder %s19, 3
    %p105 = por %p103, %p104
    %p107 = scmp.ne.s32.totalorder %s92, %s106
    %p108 = scmp.eq.s32.totalorder %s19, 0
    %p109 = por %p107, %p108
    %s111 = sadd.s32 %s110, 1
    %p114 = scmp.eq.s32.totalorder %s13, 3
    %p115 = scmp.ne.s32.totalorder %s110, %s112
    %p116 = scmp.eq.s32.totalorder %s13, 0
    %p117 = por %p115, %p116
    %p118 = scmp.ne.s32.totalorder %s110, %s112
    %p119 = scmp.eq.s32.totalorder %s18, 3
    %p120 = por %p118, %p119
    %p121 = scmp.ne.s32.totalorder %s112, %s113
    %p122 = scmp.eq.s32.totalorder %s18, 0
    %p123 = por %p121, %p122
    %p124 = scmp.ne.s32.totalorder %s112, %s113
    %p125 = scmp.eq.s32.totalorder %s19, 3
    %p126 = por %p124, %p125
    %p128 = scmp.ne.s32.totalorder %s113, %s127
    %p129 = scmp.eq.s32.totalorder %s19, 0
    %p130 = por %p128, %p129
    %s131 = ssub.s32 %s13, %s20
    %p132 = scmp.eq.s32.totalorder %s131, 0
    %s134 = sadd.s32 %s133, 1
    %s135 = scalar_select %p132, %s133, %s134
    %p138 = pneg %p132
    %p139 = scmp.eq.s32.totalorder %s13, 3
    %p140 = por %p138, %p139
    %p141 = scmp.ne.s32.totalorder %s133, %s136
    %p142 = scmp.eq.s32.totalorder %s13, 0
    %p143 = por %p141, %p142
    %p144 = scmp.ne.s32.totalorder %s133, %s136
    %p145 = scmp.eq.s32.totalorder %s18, 3
    %p146 = por %p144, %p145
    %p147 = scmp.ne.s32.totalorder %s136, %s137
    %p148 = scmp.eq.s32.totalorder %s18, 0
    %p149 = por %p147, %p148
    %p150 = scmp.ne.s32.totalorder %s136, %s137
    %p151 = scmp.eq.s32.totalorder %s19, 3
    %p152 = por %p150, %p151
    %p154 = scmp.ne.s32.totalorder %s137, %s153
    %p155 = scmp.eq.s32.totalorder %s19, 0
    %p156 = por %p154, %p155
    %s157 = ssub.s32 %s13, %s20
    %p158 = scmp.eq.s32.totalorder %s157, 0
    %s160 = sadd.s32 %s159, 1
    %s161 = scalar_select %p158, %s159, %s160
    %p164 = pneg %p158
    %p165 = scmp.eq.s32.totalorder %s13, 3
    %p166 = por %p164, %p165
    %p167 = scmp.ne.s32.totalorder %s159, %s162
    %p168 = scmp.eq.s32.totalorder %s13, 0
    %p169 = por %p167, %p168
    %p170 = scmp.ne.s32.totalorder %s159, %s162
    %p171 = scmp.eq.s32.totalorder %s18, 3
    %p172 = por %p170, %p171
    %p173 = scmp.ne.s32.totalorder %s162, %s163
    %p174 = scmp.eq.s32.totalorder %s18, 0
    %p175 = por %p173, %p174
    %p176 = scmp.ne.s32.totalorder %s162, %s163
    %p177 = scmp.eq.s32.totalorder %s19, 3
    %p178 = por %p176, %p177
    %p180 = scmp.ne.s32.totalorder %s163, %s179
    %p181 = scmp.eq.s32.totalorder %s19, 0
    %p182 = por %p180, %p181
    %p183 = scmp.le.s32.totalorder 1, %s13
    %p184 = scmp.lt.s32.totalorder %s13, 5
    %p185 = pnand %p183, %p184
    %p186 = pneg %p185
    // Predicated region
    $region9: #{residual_block_nhwc.4} parent=5 // pred_check
      _
    $region10: #{residual_block_nhwc.4} parent=5 // pred_check_branch
      %188 = sbr.rel (%p185) target = $region12
    $region11: #{residual_block_nhwc.4} parent=5 // pred_region
      %s189 = ssub.s32 %s13, 1
      // Predicated region
      $region13: #{residual_block_nhwc.4} parent=11 // pred_check
        %p190 = pneg %p60
      $region14: #{residual_block_nhwc.4} parent=11 // pred_check_branch
        %192 = sbr.rel (%p190) target = $region16
      $region15: #{residual_block_nhwc.4} parent=11 // pred_region
        _
      $region16: #{residual_block_nhwc.4} parent=11 // pred_fallthru
        _
      // Predicated region
      $region17: #{residual_block_nhwc.4} parent=11 // pred_check
        %p193 = pneg %p81
      $region18: #{residual_block_nhwc.4} parent=11 // pred_check_branch
        %195 = sbr.rel (%p193) target = $region20
      $region19: #{residual_block_nhwc.4} parent=11 // pred_region
        _
      $region20: #{residual_block_nhwc.4} parent=11 // pred_fallthru
        _
      // Predicated region
      $region21: #{residual_block_nhwc.4} parent=11 // pred_check
        %p196 = pneg %p102
      $region22: #{residual_block_nhwc.4} parent=11 // pred_check_branch
        %198 = sbr.rel (%p196) target = $region24
      $region23: #{residual_block_nhwc.4} parent=11 // pred_region
        _
      $region24: #{residual_block_nhwc.4} parent=11 // pred_fallthru
        _
      // Predicated region
      $region25: #{residual_block_nhwc.4} parent=11 // pred_check
        %p199 = pneg %p123
      $region26: #{residual_block_nhwc.4} parent=11 // pred_check_branch
        %201 = sbr.rel (%p199) target = $region28
      $region27: #{residual_block_nhwc.4} parent=11 // pred_region
        _
      $region28: #{residual_block_nhwc.4} parent=11 // pred_fallthru
        _
    $region12: #{residual_block_nhwc.4} parent=5 // pred_fallthru
      _
    %p202 = scmp.lt.s32.totalorder %s13, 4
    // Predicated region
    $region29: #{residual_block_nhwc.4} parent=5 // pred_check
      %p203 = pneg %p202
    $region30: #{residual_block_nhwc.4} parent=5 // pred_check_branch
      %205 = sbr.rel (%p203) target = $region32
    $region31: #{residual_block_nhwc.4} parent=5 // pred_region
      // Predicated region
      $region33: #{residual_block_nhwc.4} parent=31 // pred_check
        %p206 = pneg %p33
      $region34: #{residual_block_nhwc.4} parent=31 // pred_check_branch
        %208 = sbr.rel (%p206) target = $region36
      $region35: #{residual_block_nhwc.4} parent=31 // pred_region
        %p209 = scmp.lt.s32.totalorder %s13, 3
        %s210 = scalar_select %p209, %s13, 3
        %s211 = smul.addr %s210, 32
        %s212 = smul.addr %s211, 8
        %s213 = scalar_lea.vmem %s0, %s212
      $region36: #{residual_block_nhwc.4} parent=31 // pred_fallthru
        _
    $region32: #{residual_block_nhwc.4} parent=5 // pred_fallthru
      _
    %p214 = scmp.le.s32.totalorder 1, %s13
    %p215 = scmp.lt.s32.totalorder %s13, 5
    %p216 = pnand %p214, %p215
    %p217 = pneg %p216
    // Predicated region
    $region37: #{residual_block_nhwc.4} parent=5 // pred_check
      _
    $region38: #{residual_block_nhwc.4} parent=5 // pred_check_branch
      %219 = sbr.rel (%p216) target = $region40
    $region39: #{residual_block_nhwc.4} parent=5 // pred_region
      %s220 = ssub.s32 %s13, 1
      %p221 = scmp.lt.s32.totalorder %s18, 3
      %s222 = scalar_select %p221, %s18, 3
      %s223 = smul.addr %s222, 32
      %s224 = smul.addr %s223, 8
      %s225 = scalar_lea.vmem %s0, %s224
      %p226 = pneg %p39
      %p227 = pneg %p36
      %p228 = pneg %p60
      %p229 = pneg %p57
      %p230 = pneg %p81
      %p231 = pneg %p78
      %p232 = pneg %p102
      %p233 = pneg %p99
      %p234 = pneg %p123
      %p235 = pneg %p120
      %p236 = pneg %p149
      %p237 = pneg %p146
      %p238 = scmp.lt.s32.totalorder %s18, 3
      %s239 = scalar_select %p238, %s18, 3
      %s240 = smul.addr %s239, 32
      %s241 = smul.addr %s240, 8
      %s242 = scalar_lea.vmem %s5, %s241
      %p243 = pneg %p175
      %p244 = pneg %p172
      %p245 = scmp.lt.s32.totalorder %s18, 3
      %s246 = scalar_select %p245, %s18, 3
      %s247 = smul.addr %s246, 2
      %s248 = scalar_lea.vmem %s6, %s247
      %p249 = scmp.lt.s32.totalorder %s18, 3
      %s250 = scalar_select %p249, %s18, 3
      %s251 = smul.addr %s250, 32
      %s252 = smul.addr %s251, 8
      %s253 = scalar_lea.vmem %s0, %s252
      %p254 = scmp.lt.s32.totalorder %s18, 3
      %s255 = scalar_select %p254, %s18, 3
      %s256 = smul.addr %s255, 32
      %s257 = smul.addr %s256, 8
      %s258 = scalar_lea.vmem %s5, %s257
      %p259 = scmp.lt.s32.totalorder %s18, 3
      %s260 = scalar_select %p259, %s18, 3
      %s261 = smul.addr %s260, 2
      %s262 = scalar_lea.vmem %s6, %s261
      %v264 = vld [vmem:[%s253] sm:$0xff]
      %v265 = vld [vmem:[%s253 + $0x8] sm:$0xff]
      %v266 = vld [vmem:[%s253 + $0x10] sm:$0xff]
      %v267 = vld [vmem:[%s253 + $0x18] sm:$0xff]
      %v268 = vld [vmem:[%s253 + $0x20] sm:$0xff]
      %v269 = vld [vmem:[%s253 + $0x28] sm:$0xff]
      %v270 = vld [vmem:[%s253 + $0x30] sm:$0xff]
      %v271 = vld [vmem:[%s253 + $0x38] sm:$0xff]
      %v272 = vld [vmem:[%s253 + $0x40] sm:$0xff]
      %v273 = vld [vmem:[%s253 + $0x48] sm:$0xff]
      %v274 = vld [vmem:[%s253 + $0x50] sm:$0xff]
      %v275 = vld [vmem:[%s253 + $0x58] sm:$0xff]
      %v276 = vld [vmem:[%s253 + $0x60] sm:$0xff]
      %v277 = vld [vmem:[%s253 + $0x68] sm:$0xff]
      %v278 = vld [vmem:[%s253 + $0x70] sm:$0xff]
      %v279 = vld [vmem:[%s253 + $0x78] sm:$0xff]
      %v280 = vld [vmem:[%s253 + $0x80] sm:$0xff]
      %v281 = vld [vmem:[%s253 + $0x88] sm:$0xff]
      %v282 = vld [vmem:[%s253 + $0x90] sm:$0xff]
      %v283 = vld [vmem:[%s253 + $0x98] sm:$0xff]
      %v284 = vld [vmem:[%s253 + $0xa0] sm:$0xff]
      %v285 = vld [vmem:[%s253 + $0xa8] sm:$0xff]
      %v286 = vld [vmem:[%s253 + $0xb0] sm:$0xff]
      %v287 = vld [vmem:[%s253 + $0xb8] sm:$0xff]
      %v288 = vld [vmem:[%s253 + $0xc0] sm:$0xff]
      %v289 = vld [vmem:[%s253 + $0xc8] sm:$0xff]
      %v290 = vld [vmem:[%s253 + $0xd0] sm:$0xff]
      %v291 = vld [vmem:[%s253 + $0xd8] sm:$0xff]
      %v292 = vld [vmem:[%s253 + $0xe0] sm:$0xff]
      %v293 = vld [vmem:[%s253 + $0xe8] sm:$0xff]
      %v294 = vld [vmem:[%s253 + $0xf0] sm:$0xff]
      %v295 = vld [vmem:[%s253 + $0xf8] sm:$0xff]
      %v296 = vld [vmem:[%s1] sm:$0x1]
      %v298 = vlaneseq
      %v299 = vshrl.u32 %v298, 7
      %v300 = vsub.s32 0, %v299
      %v301 = vrot.slane %v296, %v300
      %v303 = vmul.f32 %v264, %v301
      %v304 = vmul.f32 %v265, %v301
      %v305 = vmul.f32 %v266, %v301
      %v306 = vmul.f32 %v267, %v301
      %v307 = vmul.f32 %v268, %v301
      %v308 = vmul.f32 %v269, %v301
      %v309 = vmul.f32 %v270, %v301
      %v310 = vmul.f32 %v271, %v301
      %v311 = vmul.f32 %v272, %v301
      %v312 = vmul.f32 %v273, %v301
      %v313 = vmul.f32 %v274, %v301
      %v314 = vmul.f32 %v275, %v301
      %v315 = vmul.f32 %v276, %v301
      %v316 = vmul.f32 %v277, %v301
      %v317 = vmul.f32 %v278, %v301
      %v318 = vmul.f32 %v279, %v301
      %v319 = vmul.f32 %v280, %v301
      %v320 = vmul.f32 %v281, %v301
      %v321 = vmul.f32 %v282, %v301
      %v322 = vmul.f32 %v283, %v301
      %v323 = vmul.f32 %v284, %v301
      %v324 = vmul.f32 %v285, %v301
      %v325 = vmul.f32 %v286, %v301
      %v326 = vmul.f32 %v287, %v301
      %v327 = vmul.f32 %v288, %v301
      %v328 = vmul.f32 %v289, %v301
      %v329 = vmul.f32 %v290, %v301
      %v330 = vmul.f32 %v291, %v301
      %v331 = vmul.f32 %v292, %v301
      %v332 = vmul.f32 %v293, %v301
      %v333 = vmul.f32 %v294, %v301
      %v334 = vmul.f32 %v295, %v301
      %v335 = vld [vmem:[%s2] sm:$0x1]
      %v337 = vlaneseq
      %v338 = vshrl.u32 %v337, 7
      %v339 = vsub.s32 0, %v338
      %v340 = vrot.slane %v335, %v339
      %v342 = vadd.f32 %v303, %v340
      %v343 = vadd.f32 %v304, %v340
      %v344 = vadd.f32 %v305, %v340
      %v345 = vadd.f32 %v306, %v340
      %v346 = vadd.f32 %v307, %v340
      %v347 = vadd.f32 %v308, %v340
      %v348 = vadd.f32 %v309, %v340
      %v349 = vadd.f32 %v310, %v340
      %v350 = vadd.f32 %v311, %v340
      %v351 = vadd.f32 %v312, %v340
      %v352 = vadd.f32 %v313, %v340
      %v353 = vadd.f32 %v314, %v340
      %v354 = vadd.f32 %v315, %v340
      %v355 = vadd.f32 %v316, %v340
      %v356 = vadd.f32 %v317, %v340
      %v357 = vadd.f32 %v318, %v340
      %v358 = vadd.f32 %v319, %v340
      %v359 = vadd.f32 %v320, %v340
      %v360 = vadd.f32 %v321, %v340
      %v361 = vadd.f32 %v322, %v340
      %v362 = vadd.f32 %v323, %v340
      %v363 = vadd.f32 %v324, %v340
      %v364 = vadd.f32 %v325, %v340
      %v365 = vadd.f32 %v326, %v340
      %v366 = vadd.f32 %v327, %v340
      %v367 = vadd.f32 %v328, %v340
      %v368 = vadd.f32 %v329, %v340
      %v369 = vadd.f32 %v330, %v340
      %v370 = vadd.f32 %v331, %v340
      %v371 = vadd.f32 %v332, %v340
      %v372 = vadd.f32 %v333, %v340
      %v373 = vadd.f32 %v334, %v340
      %vm374 = vcmp.gt.f32.partialorder %v342, 0.0
      %vm375 = vcmp.gt.f32.partialorder %v343, 0.0
      %vm376 = vcmp.gt.f32.partialorder %v344, 0.0
      %vm377 = vcmp.gt.f32.partialorder %v345, 0.0
      %vm378 = vcmp.gt.f32.partialorder %v346, 0.0
      %vm379 = vcmp.gt.f32.partialorder %v347, 0.0
      %vm380 = vcmp.gt.f32.partialorder %v348, 0.0
      %vm381 = vcmp.gt.f32.partialorder %v349, 0.0
      %vm382 = vcmp.gt.f32.partialorder %v350, 0.0
      %vm383 = vcmp.gt.f32.partialorder %v351, 0.0
      %vm384 = vcmp.gt.f32.partialorder %v352, 0.0
      %vm385 = vcmp.gt.f32.partialorder %v353, 0.0
      %vm386 = vcmp.gt.f32.partialorder %v354, 0.0
      %vm387 = vcmp.gt.f32.partialorder %v355, 0.0
      %vm388 = vcmp.gt.f32.partialorder %v356, 0.0
      %vm389 = vcmp.gt.f32.partialorder %v357, 0.0
      %vm390 = vcmp.gt.f32.partialorder %v358, 0.0
      %vm391 = vcmp.gt.f32.partialorder %v359, 0.0
      %vm392 = vcmp.gt.f32.partialorder %v360, 0.0
      %vm393 = vcmp.gt.f32.partialorder %v361, 0.0
      %vm394 = vcmp.gt.f32.partialorder %v362, 0.0
      %vm395 = vcmp.gt.f32.partialorder %v363, 0.0
      %vm396 = vcmp.gt.f32.partialorder %v364, 0.0
      %vm397 = vcmp.gt.f32.partialorder %v365, 0.0
      %vm398 = vcmp.gt.f32.partialorder %v366, 0.0
      %vm399 = vcmp.gt.f32.partialorder %v367, 0.0
      %vm400 = vcmp.gt.f32.partialorder %v368, 0.0
      %vm401 = vcmp.gt.f32.partialorder %v369, 0.0
      %vm402 = vcmp.gt.f32.partialorder %v370, 0.0
      %vm403 = vcmp.gt.f32.partialorder %v371, 0.0
      %vm404 = vcmp.gt.f32.partialorder %v372, 0.0
      %vm405 = vcmp.gt.f32.partialorder %v373, 0.0
      %v406 = vld [vmem:[%s3] sm:$0x1]
      %v408 = vlaneseq
      %v409 = vshrl.u32 %v408, 7
      %v410 = vsub.s32 0, %v409
      %v411 = vrot.slane %v406, %v410
      %v413 = vmul.f32 %v342, %v411
      %v414 = vmul.f32 %v343, %v411
      %v415 = vmul.f32 %v344, %v411
      %v416 = vmul.f32 %v345, %v411
      %v417 = vmul.f32 %v346, %v411
      %v418 = vmul.f32 %v347, %v411
      %v419 = vmul.f32 %v348, %v411
      %v420 = vmul.f32 %v349, %v411
      %v421 = vmul.f32 %v350, %v411
      %v422 = vmul.f32 %v351, %v411
      %v423 = vmul.f32 %v352, %v411
      %v424 = vmul.f32 %v353, %v411
      %v425 = vmul.f32 %v354, %v411
      %v426 = vmul.f32 %v355, %v411
      %v427 = vmul.f32 %v356, %v411
      %v428 = vmul.f32 %v357, %v411
      %v429 = vmul.f32 %v358, %v411
      %v430 = vmul.f32 %v359, %v411
      %v431 = vmul.f32 %v360, %v411
      %v432 = vmul.f32 %v361, %v411
      %v433 = vmul.f32 %v362, %v411
      %v434 = vmul.f32 %v363, %v411
      %v435 = vmul.f32 %v364, %v411
      %v436 = vmul.f32 %v365, %v411
      %v437 = vmul.f32 %v366, %v411
      %v438 = vmul.f32 %v367, %v411
      %v439 = vmul.f32 %v368, %v411
      %v440 = vmul.f32 %v369, %v411
      %v441 = vmul.f32 %v370, %v411
      %v442 = vmul.f32 %v371, %v411
      %v443 = vmul.f32 %v372, %v411
      %v444 = vmul.f32 %v373, %v411
      %v445 = vsel %vm374, %v342, %v413
      %v446 = vsel %vm375, %v343, %v414
      %v447 = vsel %vm376, %v344, %v415
      %v448 = vsel %vm377, %v345, %v416
      %v449 = vsel %vm378, %v346, %v417
      %v450 = vsel %vm379, %v347, %v418
      %v451 = vsel %vm380, %v348, %v419
      %v452 = vsel %vm381, %v349, %v420
      %v453 = vsel %vm382, %v350, %v421
      %v454 = vsel %vm383, %v351, %v422
      %v455 = vsel %vm384, %v352, %v423
      %v456 = vsel %vm385, %v353, %v424
      %v457 = vsel %vm386, %v354, %v425
      %v458 = vsel %vm387, %v355, %v426
      %v459 = vsel %vm388, %v356, %v427
      %v460 = vsel %vm389, %v357, %v428
      %v461 = vsel %vm390, %v358, %v429
      %v462 = vsel %vm391, %v359, %v430
      %v463 = vsel %vm392, %v360, %v431
      %v464 = vsel %vm393, %v361, %v432
      %v465 = vsel %vm394, %v362, %v433
      %v466 = vsel %vm395, %v363, %v434
      %v467 = vsel %vm396, %v364, %v435
      %v468 = vsel %vm397, %v365, %v436
      %v469 = vsel %vm398, %v366, %v437
      %v470 = vsel %vm399, %v367, %v438
      %v471 = vsel %vm400, %v368, %v439
      %v472 = vsel %vm401, %v369, %v440
      %v473 = vsel %vm402, %v370, %v441
      %v474 = vsel %vm403, %v371, %v442
      %v475 = vsel %vm404, %v372, %v443
      %v476 = vsel %vm405, %v373, %v444
      %v477 = vpack.c.bf16 %v446, %v445
      %v478 = vpack.c.bf16 %v448, %v447
      %v479 = vpack.c.bf16 %v450, %v449
      %v480 = vpack.c.bf16 %v452, %v451
      %v481 = vpack.c.bf16 %v454, %v453
      %v482 = vpack.c.bf16 %v456, %v455
      %v483 = vpack.c.bf16 %v458, %v457
      %v484 = vpack.c.bf16 %v460, %v459
      %v485 = vpack.c.bf16 %v462, %v461
      %v486 = vpack.c.bf16 %v464, %v463
      %v487 = vpack.c.bf16 %v466, %v465
      %v488 = vpack.c.bf16 %v468, %v467
      %v489 = vpack.c.bf16 %v470, %v469
      %v490 = vpack.c.bf16 %v472, %v471
      %v491 = vpack.c.bf16 %v474, %v473
      %v492 = vpack.c.bf16 %v476, %v475
      %vm493 = vcmask 519168
      %494 = vst.msk [vmem:[#allocation2] sm:$0xf] %vm493, 0
      %495 = vst.msk [vmem:[#allocation2 + $0x4] sm:$0xf] %vm493, 0
      %vm496 = vcmask 516096
      %497 = vst.msk [vmem:[#allocation2 + $0x8] sm:$0x1] %vm496, 0
      %s498 = scalar_lea.vmem [#allocation2], 204
      %499 = vst.msk [vmem:[%s498] sm:$0xf] %vm493, 0
      %500 = vst.msk [vmem:[%s498 + $0x4] sm:$0xf] %vm493, 0
      %501 = vst.msk [vmem:[%s498 + $0x8] sm:$0x1] %vm496, 0
      %v503 = vshrl.u32 %v477, 16
      %v505 = vrot.slane %v503, 7
      %v506 = vshll.u32 %v477, 16
      %v508 = vor.u32 %v505, %v506
      %v510 = vshrl.u32 %v478, 16
      %v512 = vrot.slane %v510, 7
      %v513 = vshll.u32 %v478, 16
      %v515 = vor.u32 %v512, %v513
      %v517 = vshrl.u32 %v479, 16
      %v519 = vrot.slane %v517, 7
      %v520 = vshll.u32 %v479, 16
      %v522 = vor.u32 %v519, %v520
      %v524 = vshrl.u32 %v480, 16
      %v526 = vrot.slane %v524, 7
      %v527 = vshll.u32 %v480, 16
      %v529 = vor.u32 %v526, %v527
      %v531 = vshrl.u32 %v481, 16
      %v533 = vrot.slane %v531, 7
      %v534 = vshll.u32 %v481, 16
      %v536 = vor.u32 %v533, %v534
      %v538 = vshrl.u32 %v482, 16
      %v540 = vrot.slane %v538, 7
      %v541 = vshll.u32 %v482, 16
      %v543 = vor.u32 %v540, %v541
      %v545 = vshrl.u32 %v483, 16
      %v547 = vrot.slane %v545, 7
      %v548 = vshll.u32 %v483, 16
      %v550 = vor.u32 %v547, %v548
      %v552 = vshrl.u32 %v484, 16
      %v554 = vrot.slane %v552, 7
      %v555 = vshll.u32 %v484, 16
      %v557 = vor.u32 %v554, %v555
      %v559 = vshrl.u32 %v485, 16
      %v561 = vrot.slane %v559, 7
      %v562 = vshll.u32 %v485, 16
      %v564 = vor.u32 %v561, %v562
      %v566 = vshrl.u32 %v486, 16
      %v568 = vrot.slane %v566, 7
      %v569 = vshll.u32 %v486, 16
      %v571 = vor.u32 %v568, %v569
      %v573 = vshrl.u32 %v487, 16
      %v575 = vrot.slane %v573, 7
      %v576 = vshll.u32 %v487, 16
      %v578 = vor.u32 %v575, %v576
      %v580 = vshrl.u32 %v488, 16
      %v582 = vrot.slane %v580, 7
      %v583 = vshll.u32 %v488, 16
      %v585 = vor.u32 %v582, %v583
      %v587 = vshrl.u32 %v489, 16
      %v589 = vrot.slane %v587, 7
      %v590 = vshll.u32 %v489, 16
      %v592 = vor.u32 %v589, %v590
      %v594 = vshrl.u32 %v490, 16
      %v596 = vrot.slane %v594, 7
      %v597 = vshll.u32 %v490, 16
      %v599 = vor.u32 %v596, %v597
      %v601 = vshrl.u32 %v491, 16
      %v603 = vrot.slane %v601, 7
      %v604 = vshll.u32 %v491, 16
      %v606 = vor.u32 %v603, %v604
      %v608 = vshrl.u32 %v492, 16
      %v610 = vrot.slane %v608, 7
      %v611 = vshll.u32 %v492, 16
      %v613 = vor.u32 %v610, %v611
      %vm646 = vcmask 1040384
      %vm647 = vsmask.f32 256
      %vm648 = vmand %vm646, %vm647
      %v649 = vsel %vm648, 0, %v508
      %v650 = vsel %vm648, 0, %v515
      %v651 = vsel %vm648, 0, %v522
      %v652 = vsel %vm648, 0, %v529
      %v653 = vsel %vm648, 0, %v536
      %v654 = vsel %vm648, 0, %v543
      %v655 = vsel %vm648, 0, %v550
      %v656 = vsel %vm648, 0, %v557
      %v657 = vsel %vm648, 0, %v564
      %v658 = vsel %vm648, 0, %v571
      %v659 = vsel %vm648, 0, %v578
      %v660 = vsel %vm648, 0, %v585
      %v661 = vsel %vm648, 0, %v592
      %v662 = vsel %vm648, 0, %v599
      %v663 = vsel %vm648, 0, %v606
      %v664 = vsel %vm648, 0, %v613
      %v665 = vsel %vm648, %v505, 0
      %v666 = vsel %vm648, %v512, 0
      %v667 = vsel %vm648, %v519, 0
      %v668 = vsel %vm648, %v526, 0
      %v669 = vsel %vm648, %v533, 0
      %v670 = vsel %vm648, %v540, 0
      %v671 = vsel %vm648, %v547, 0
      %v672 = vsel %vm648, %v554, 0
      %v673 = vsel %vm648, %v561, 0
      %v674 = vsel %vm648, %v568, 0
      %v675 = vsel %vm648, %v575, 0
      %v676 = vsel %vm648, %v582, 0
      %v677 = vsel %vm648, %v589, 0
      %v678 = vsel %vm648, %v596, 0
      %v679 = vsel %vm648, %v603, 0
      %v680 = vsel %vm648, %v610, 0
      %v713 = vunpack.c.l.b16 %v649
      %v714 = vunpack.c.h.b16 %v649
      %v715 = vunpack.c.l.b16 %v665
      %v716 = vunpack.c.l.b16 %v650
      %v717 = vunpack.c.h.b16 %v650
      %v718 = vunpack.c.l.b16 %v666
      %v719 = vunpack.c.l.b16 %v651
      %v720 = vunpack.c.h.b16 %v651
      %v721 = vunpack.c.l.b16 %v667
      %v722 = vunpack.c.l.b16 %v652
      %v723 = vunpack.c.h.b16 %v652
      %v724 = vunpack.c.l.b16 %v668
      %v725 = vunpack.c.l.b16 %v653
      %v726 = vunpack.c.h.b16 %v653
      %v727 = vunpack.c.l.b16 %v669
      %v728 = vunpack.c.l.b16 %v654
      %v729 = vunpack.c.h.b16 %v654
      %v730 = vunpack.c.l.b16 %v670
      %v731 = vunpack.c.l.b16 %v655
      %v732 = vunpack.c.h.b16 %v655
      %v733 = vunpack.c.l.b16 %v671
      %v734 = vunpack.c.l.b16 %v656
      %v735 = vunpack.c.h.b16 %v656
      %v736 = vunpack.c.l.b16 %v672
      %v737 = vunpack.c.l.b16 %v657
      %v738 = vunpack.c.h.b16 %v657
      %v739 = vunpack.c.l.b16 %v673
      %v740 = vunpack.c.l.b16 %v658
      %v741 = vunpack.c.h.b16 %v658
      %v742 = vunpack.c.l.b16 %v674
      %v743 = vunpack.c.l.b16 %v659
      %v744 = vunpack.c.h.b16 %v659
      %v745 = vunpack.c.l.b16 %v675
      %v746 = vunpack.c.l.b16 %v660
      %v747 = vunpack.c.h.b16 %v660
      %v748 = vunpack.c.l.b16 %v676
      %v749 = vunpack.c.l.b16 %v661
      %v750 = vunpack.c.h.b16 %v661
      %v751 = vunpack.c.l.b16 %v677
      %v752 = vunpack.c.l.b16 %v662
      %v753 = vunpack.c.h.b16 %v662
      %v754 = vunpack.c.l.b16 %v678
      %v755 = vunpack.c.l.b16 %v663
      %v756 = vunpack.c.h.b16 %v663
      %v757 = vunpack.c.l.b16 %v679
      %v758 = vunpack.c.l.b16 %v664
      %v759 = vunpack.c.h.b16 %v664
      %v760 = vunpack.c.l.b16 %v680
      %v761 = vpack.c.b16 %v713, %v713
      %v762 = vpack.c.b16 %v714, %v714
      %v763 = vpack.c.b16 %v715, %v715
      %v764 = vpack.c.b16 %v716, %v716
      %v765 = vpack.c.b16 %v717, %v717
      %v766 = vpack.c.b16 %v718, %v718
      %v767 = vpack.c.b16 %v719, %v719
      %v768 = vpack.c.b16 %v720, %v720
      %v769 = vpack.c.b16 %v721, %v721
      %v770 = vpack.c.b16 %v722, %v722
      %v771 = vpack.c.b16 %v723, %v723
      %v772 = vpack.c.b16 %v724, %v724
      %v773 = vpack.c.b16 %v725, %v725
      %v774 = vpack.c.b16 %v726, %v726
      %v775 = vpack.c.b16 %v727, %v727
      %v776 = vpack.c.b16 %v728, %v728
      %v777 = vpack.c.b16 %v729, %v729
      %v778 = vpack.c.b16 %v730, %v730
      %v779 = vpack.c.b16 %v731, %v731
      %v780 = vpack.c.b16 %v732, %v732
      %v781 = vpack.c.b16 %v733, %v733
      %v782 = vpack.c.b16 %v734, %v734
      %v783 = vpack.c.b16 %v735, %v735
      %v784 = vpack.c.b16 %v736, %v736
      %v785 = vpack.c.b16 %v737, %v737
      %v786 = vpack.c.b16 %v738, %v738
      %v787 = vpack.c.b16 %v739, %v739
      %v788 = vpack.c.b16 %v740, %v740
      %v789 = vpack.c.b16 %v741, %v741
      %v790 = vpack.c.b16 %v742, %v742
      %v791 = vpack.c.b16 %v743, %v743
      %v792 = vpack.c.b16 %v744, %v744
      %v793 = vpack.c.b16 %v745, %v745
      %v794 = vpack.c.b16 %v746, %v746
      %v795 = vpack.c.b16 %v747, %v747
      %v796 = vpack.c.b16 %v748, %v748
      %v797 = vpack.c.b16 %v749, %v749
      %v798 = vpack.c.b16 %v750, %v750
      %v799 = vpack.c.b16 %v751, %v751
      %v800 = vpack.c.b16 %v752, %v752
      %v801 = vpack.c.b16 %v753, %v753
      %v802 = vpack.c.b16 %v754, %v754
      %v803 = vpack.c.b16 %v755, %v755
      %v804 = vpack.c.b16 %v756, %v756
      %v805 = vpack.c.b16 %v757, %v757
      %v806 = vpack.c.b16 %v758, %v758
      %v807 = vpack.c.b16 %v759, %v759
      %v808 = vpack.c.b16 %v760, %v760
      %s857 = scalar_lea.vmem [#allocation2], 12
      %858 = vst.msk [vmem:[%s857] sm:$0xf] %vm493, %v761
      %859 = vst.msk [vmem:[%s857 + $0x4] sm:$0xf] %vm493, %v762
      %860 = vst.msk [vmem:[%s857 + $0x8] sm:$0x1] %vm496, %v763
      %861 = vst.msk [vmem:[%s857 + $0xc] sm:$0xf] %vm493, %v764
      %862 = vst.msk [vmem:[%s857 + $0x10] sm:$0xf] %vm493, %v765
      %863 = vst.msk [vmem:[%s857 + $0x14] sm:$0x1] %vm496, %v766
      %864 = vst.msk [vmem:[%s857 + $0x18] sm:$0xf] %vm493, %v767
      %865 = vst.msk [vmem:[%s857 + $0x1c] sm:$0xf] %vm493, %v768
      %866 = vst.msk [vmem:[%s857 + $0x20] sm:$0x1] %vm496, %v769
      %867 = vst.msk [vmem:[%s857 + $0x24] sm:$0xf] %vm493, %v770
      %868 = vst.msk [vmem:[%s857 + $0x28] sm:$0xf] %vm493, %v771
      %869 = vst.msk [vmem:[%s857 + $0x2c] sm:$0x1] %vm496, %v772
      %870 = vst.msk [vmem:[%s857 + $0x30] sm:$0xf] %vm493, %v773
      %871 = vst.msk [vmem:[%s857 + $0x34] sm:$0xf] %vm493, %v774
      %872 = vst.msk [vmem:[%s857 + $0x38] sm:$0x1] %vm496, %v775
      %873 = vst.msk [vmem:[%s857 + $0x3c] sm:$0xf] %vm493, %v776
      %874 = vst.msk [vmem:[%s857 + $0x40] sm:$0xf] %vm493, %v777
      %875 = vst.msk [vmem:[%s857 + $0x44] sm:$0x1] %vm496, %v778
      %876 = vst.msk [vmem:[%s857 + $0x48] sm:$0xf] %vm493, %v779
      %877 = vst.msk [vmem:[%s857 + $0x4c] sm:$0xf] %vm493, %v780
      %878 = vst.msk [vmem:[%s857 + $0x50] sm:$0x1] %vm496, %v781
      %879 = vst.msk [vmem:[%s857 + $0x54] sm:$0xf] %vm493, %v782
      %880 = vst.msk [vmem:[%s857 + $0x58] sm:$0xf] %vm493, %v783
      %881 = vst.msk [vmem:[%s857 + $0x5c] sm:$0x1] %vm496, %v784
      %882 = vst.msk [vmem:[%s857 + $0x60] sm:$0xf] %vm493, %v785
      %883 = vst.msk [vmem:[%s857 + $0x64] sm:$0xf] %vm493, %v786
      %884 = vst.msk [vmem:[%s857 + $0x68] sm:$0x1] %vm496, %v787
      %885 = vst.msk [vmem:[%s857 + $0x6c] sm:$0xf] %vm493, %v788
      %886 = vst.msk [vmem:[%s857 + $0x70] sm:$0xf] %vm493, %v789
      %887 = vst.msk [vmem:[%s857 + $0x74] sm:$0x1] %vm496, %v790
      %888 = vst.msk [vmem:[%s857 + $0x78] sm:$0xf] %vm493, %v791
      %889 = vst.msk [vmem:[%s857 + $0x7c] sm:$0xf] %vm493, %v792
      %890 = vst.msk [vmem:[%s857 + $0x80] sm:$0x1] %vm496, %v793
      %891 = vst.msk [vmem:[%s857 + $0x84] sm:$0xf] %vm493, %v794
      %892 = vst.msk [vmem:[%s857 + $0x88] sm:$0xf] %vm493, %v795
      %893 = vst.msk [vmem:[%s857 + $0x8c] sm:$0x1] %vm496, %v796
      %894 = vst.msk [vmem:[%s857 + $0x90] sm:$0xf] %vm493, %v797
      %895 = vst.msk [vmem:[%s857 + $0x94] sm:$0xf] %vm493, %v798
      %896 = vst.msk [vmem:[%s857 + $0x98] sm:$0x1] %vm496, %v799
      %897 = vst.msk [vmem:[%s857 + $0x9c] sm:$0xf] %vm493, %v800
      %898 = vst.msk [vmem:[%s857 + $0xa0] sm:$0xf] %vm493, %v801
      %899 = vst.msk [vmem:[%s857 + $0xa4] sm:$0x1] %vm496, %v802
      %900 = vst.msk [vmem:[%s857 + $0xa8] sm:$0xf] %vm493, %v803
      %901 = vst.msk [vmem:[%s857 + $0xac] sm:$0xf] %vm493, %v804
      %902 = vst.msk [vmem:[%s857 + $0xb0] sm:$0x1] %vm496, %v805
      %903 = vst.msk [vmem:[%s857 + $0xb4] sm:$0xf] %vm493, %v806
      %904 = vst.msk [vmem:[%s857 + $0xb8] sm:$0xf] %vm493, %v807
      %905 = vst.msk [vmem:[%s857 + $0xbc] sm:$0x1] %vm496, %v808
      %v906 = vld [vmem:[#allocation2] sm:$0xf]
      %v907 = vld [vmem:[#allocation2 + $0x4] sm:$0xf]
      %v908 = vld [vmem:[#allocation2 + $0x8] sm:$0x1]
      %v909 = vld [vmem:[#allocation2 + $0xc] sm:$0xf]
      %v910 = vld [vmem:[#allocation2 + $0x10] sm:$0xf]
      %v911 = vld [vmem:[#allocation2 + $0x14] sm:$0x1]
      %v912 = vld [vmem:[#allocation2 + $0x18] sm:$0xf]
      %v913 = vld [vmem:[#allocation2 + $0x1c] sm:$0xf]
      %v914 = vld [vmem:[#allocation2 + $0x20] sm:$0x1]
      %v915 = vld [vmem:[#allocation2 + $0x24] sm:$0xf]
      %v916 = vld [vmem:[#allocation2 + $0x28] sm:$0xf]
      %v917 = vld [vmem:[#allocation2 + $0x2c] sm:$0x1]
      %v918 = vld [vmem:[#allocation2 + $0x30] sm:$0xf]
      %v919 = vld [vmem:[#allocation2 + $0x34] sm:$0xf]
      %v920 = vld [vmem:[#allocation2 + $0x38] sm:$0x1]
      %v921 = vld [vmem:[#allocation2 + $0x3c] sm:$0xf]
      %v922 = vld [vmem:[#allocation2 + $0x40] sm:$0xf]
      %v923 = vld [vmem:[#allocation2 + $0x44] sm:$0x1]
      %v924 = vld [vmem:[#allocation2 + $0x48] sm:$0xf]
      %v925 = vld [vmem:[#allocation2 + $0x4c] sm:$0xf]
      %v926 = vld [vmem:[#allocation2 + $0x50] sm:$0x1]
      %v927 = vld [vmem:[#allocation2 + $0x54] sm:$0xf]
      %v928 = vld [vmem:[#allocation2 + $0x58] sm:$0xf]
      %v929 = vld [vmem:[#allocation2 + $0x5c] sm:$0x1]
      %v930 = vld [vmem:[#allocation2 + $0x60] sm:$0xf]
      %v931 = vld [vmem:[#allocation2 + $0x64] sm:$0xf]
      %v932 = vld [vmem:[#allocation2 + $0x68] sm:$0x1]
      %v933 = vld [vmem:[#allocation2 + $0x6c] sm:$0xf]
      %v934 = vld [vmem:[#allocation2 + $0x70] sm:$0xf]
      %v935 = vld [vmem:[#allocation2 + $0x74] sm:$0x1]
      %v936 = vld [vmem:[#allocation2 + $0x78] sm:$0xf]
      %v937 = vld [vmem:[#allocation2 + $0x7c] sm:$0xf]
      %v938 = vld [vmem:[#allocation2 + $0x80] sm:$0x1]
      %v939 = vld [vmem:[#allocation2 + $0x84] sm:$0xf]
      %v940 = vld [vmem:[#allocation2 + $0x88] sm:$0xf]
      %v941 = vld [vmem:[#allocation2 + $0x8c] sm:$0x1]
      %v942 = vld [vmem:[#allocation2 + $0x90] sm:$0xf]
      %v943 = vld [vmem:[#allocation2 + $0x94] sm:$0xf]
      %v944 = vld [vmem:[#allocation2 + $0x98] sm:$0x1]
      %v945 = vld [vmem:[#allocation2 + $0x9c] sm:$0xf]
      %v946 = vld [vmem:[#allocation2 + $0xa0] sm:$0xf]
      %v947 = vld [vmem:[#allocation2 + $0xa4] sm:$0x1]
      %v948 = vld [vmem:[#allocation2 + $0xa8] sm:$0xf]
      %v949 = vld [vmem:[#allocation2 + $0xac] sm:$0xf]
      %v950 = vld [vmem:[#allocation2 + $0xb0] sm:$0x1]
      %v951 = vld [vmem:[#allocation2 + $0xb4] sm:$0xf]
      %v952 = vld [vmem:[#allocation2 + $0xb8] sm:$0xf]
      %v953 = vld [vmem:[#allocation2 + $0xbc] sm:$0x1]
      %v954 = vld [vmem:[#allocation2 + $0xc0] sm:$0xf]
      %v955 = vld [vmem:[#allocation2 + $0xc4] sm:$0xf]
      %v956 = vld [vmem:[#allocation2 + $0xc8] sm:$0x1]
      %v957 = vld [vmem:[#allocation2 + $0xcc] sm:$0xf]
      %v958 = vld [vmem:[#allocation2 + $0xd0] sm:$0xf]
      %v959 = vld [vmem:[#allocation2 + $0xd4] sm:$0x1]
      %vm960 = vsmask.f32 3328
      %vm961 = vsmask.f32 7440
      %vm962 = vmor %vm960, %vm961
      %v964 = vshrl.u32 %v906, 16
      %v966 = vrot.slane %v964, 4
      %v967 = vshll.u32 %v906, 16
      %v969 = vrot.slane %v967, 5
      %v970 = vor.u32 %v966, %v969
      %v971 = vrot.slane %v970, 4
      %v973 = vshll.u32 %v907, 16
      %v975 = vrot.slane %v973, 5
      %v976 = vsel %vm962, %v971, %v975
      %v977 = vshrl.u32 %v907, 16
      %v979 = vrot.slane %v977, 4
      %v980 = vor.u32 %v979, %v975
      %v981 = vrot.slane %v980, 4
      %v983 = vshll.u32 %v908, 16
      %v985 = vrot.slane %v983, 5
      %v986 = vsel %vm962, %v981, %v985
      %v988 = vshrl.u32 %v909, 16
      %v990 = vrot.slane %v988, 4
      %v991 = vshll.u32 %v909, 16
      %v993 = vrot.slane %v991, 5
      %v994 = vor.u32 %v990, %v993
      %v995 = vrot.slane %v994, 4
      %v997 = vshll.u32 %v910, 16
      %v999 = vrot.slane %v997, 5
      %v1000 = vsel %vm962, %v995, %v999
      %v1001 = vshrl.u32 %v910, 16
      %v1003 = vrot.slane %v1001, 4
      %v1004 = vor.u32 %v1003, %v999
      %v1005 = vrot.slane %v1004, 4
      %v1007 = vshll.u32 %v911, 16
      %v1009 = vrot.slane %v1007, 5
      %v1010 = vsel %vm962, %v1005, %v1009
      %v1012 = vshrl.u32 %v912, 16
      %v1014 = vrot.slane %v1012, 4
      %v1015 = vshll.u32 %v912, 16
      %v1017 = vrot.slane %v1015, 5
      %v1018 = vor.u32 %v1014, %v1017
      %v1019 = vrot.slane %v1018, 4
      %v1021 = vshll.u32 %v913, 16
      %v1023 = vrot.slane %v1021, 5
      %v1024 = vsel %vm962, %v1019, %v1023
      %v1025 = vshrl.u32 %v913, 16
      %v1027 = vrot.slane %v1025, 4
      %v1028 = vor.u32 %v1027, %v1023
      %v1029 = vrot.slane %v1028, 4
      %v1031 = vshll.u32 %v914, 16
      %v1033 = vrot.slane %v1031, 5
      %v1034 = vsel %vm962, %v1029, %v1033
      %v1036 = vshrl.u32 %v915, 16
      %v1038 = vrot.slane %v1036, 4
      %v1039 = vshll.u32 %v915, 16
      %v1041 = vrot.slane %v1039, 5
      %v1042 = vor.u32 %v1038, %v1041
      %v1043 = vrot.slane %v1042, 4
      %v1045 = vshll.u32 %v916, 16
      %v1047 = vrot.slane %v1045, 5
      %v1048 = vsel %vm962, %v1043, %v1047
      %v1049 = vshrl.u32 %v916, 16
      %v1051 = vrot.slane %v1049, 4
      %v1052 = vor.u32 %v1051, %v1047
      %v1053 = vrot.slane %v1052, 4
      %v1055 = vshll.u32 %v917, 16
      %v1057 = vrot.slane %v1055, 5
      %v1058 = vsel %vm962, %v1053, %v1057
      %v1060 = vshrl.u32 %v918, 16
      %v1062 = vrot.slane %v1060, 4
      %v1063 = vshll.u32 %v918, 16
      %v1065 = vrot.slane %v1063, 5
      %v1066 = vor.u32 %v1062, %v1065
      %v1067 = vrot.slane %v1066, 4
      %v1069 = vshll.u32 %v919, 16
      %v1071 = vrot.slane %v1069, 5
      %v1072 = vsel %vm962, %v1067, %v1071
      %v1073 = vshrl.u32 %v919, 16
      %v1075 = vrot.slane %v1073, 4
      %v1076 = vor.u32 %v1075, %v1071
      %v1077 = vrot.slane %v1076, 4
      %v1079 = vshll.u32 %v920, 16
      %v1081 = vrot.slane %v1079, 5
      %v1082 = vsel %vm962, %v1077, %v1081
      %v1084 = vshrl.u32 %v921, 16
      %v1086 = vrot.slane %v1084, 4
      %v1087 = vshll.u32 %v921, 16
      %v1089 = vrot.slane %v1087, 5
      %v1090 = vor.u32 %v1086, %v1089
      %v1091 = vrot.slane %v1090, 4
      %v1093 = vshll.u32 %v922, 16
      %v1095 = vrot.slane %v1093, 5
      %v1096 = vsel %vm962, %v1091, %v1095
      %v1097 = vshrl.u32 %v922, 16
      %v1099 = vrot.slane %v1097, 4
      %v1100 = vor.u32 %v1099, %v1095
      %v1101 = vrot.slane %v1100, 4
      %v1103 = vshll.u32 %v923, 16
      %v1105 = vrot.slane %v1103, 5
      %v1106 = vsel %vm962, %v1101, %v1105
      %v1108 = vshrl.u32 %v924, 16
      %v1110 = vrot.slane %v1108, 4
      %v1111 = vshll.u32 %v924, 16
      %v1113 = vrot.slane %v1111, 5
      %v1114 = vor.u32 %v1110, %v1113
      %v1115 = vrot.slane %v1114, 4
      %v1117 = vshll.u32 %v925, 16
      %v1119 = vrot.slane %v1117, 5
      %v1120 = vsel %vm962, %v1115, %v1119
      %v1121 = vshrl.u32 %v925, 16
      %v1123 = vrot.slane %v1121, 4
      %v1124 = vor.u32 %v1123, %v1119
      %v1125 = vrot.slane %v1124, 4
      %v1127 = vshll.u32 %v926, 16
      %v1129 = vrot.slane %v1127, 5
      %v1130 = vsel %vm962, %v1125, %v1129
      %v1132 = vshrl.u32 %v927, 16
      %v1134 = vrot.slane %v1132, 4
      %v1135 = vshll.u32 %v927, 16
      %v1137 = vrot.slane %v1135, 5
      %v1138 = vor.u32 %v1134, %v1137
      %v1139 = vrot.slane %v1138, 4
      %v1141 = vshll.u32 %v928, 16
      %v1143 = vrot.slane %v1141, 5
      %v1144 = vsel %vm962, %v1139, %v1143
      %v1145 = vshrl.u32 %v928, 16
      %v1147 = vrot.slane %v1145, 4
      %v1148 = vor.u32 %v1147, %v1143
      %v1149 = vrot.slane %v1148, 4
      %v1151 = vshll.u32 %v929, 16
      %v1153 = vrot.slane %v1151, 5
      %v1154 = vsel %vm962, %v1149, %v1153
      %v1156 = vshrl.u32 %v930, 16
      %v1158 = vrot.slane %v1156, 4
      %v1159 = vshll.u32 %v930, 16
      %v1161 = vrot.slane %v1159, 5
      %v1162 = vor.u32 %v1158, %v1161
      %v1163 = vrot.slane %v1162, 4
      %v1165 = vshll.u32 %v931, 16
      %v1167 = vrot.slane %v1165, 5
      %v1168 = vsel %vm962, %v1163, %v1167
      %v1169 = vshrl.u32 %v931, 16
      %v1171 = vrot.slane %v1169, 4
      %v1172 = vor.u32 %v1171, %v1167
      %v1173 = vrot.slane %v1172, 4
      %v1175 = vshll.u32 %v932, 16
      %v1177 = vrot.slane %v1175, 5
      %v1178 = vsel %vm962, %v1173, %v1177
      %v1180 = vshrl.u32 %v933, 16
      %v1182 = vrot.slane %v1180, 4
      %v1183 = vshll.u32 %v933, 16
      %v1185 = vrot.slane %v1183, 5
      %v1186 = vor.u32 %v1182, %v1185
      %v1187 = vrot.slane %v1186, 4
      %v1189 = vshll.u32 %v934, 16
      %v1191 = vrot.slane %v1189, 5
      %v1192 = vsel %vm962, %v1187, %v1191
      %v1193 = vshrl.u32 %v934, 16
      %v1195 = vrot.slane %v1193, 4
      %v1196 = vor.u32 %v1195, %v1191
      %v1197 = vrot.slane %v1196, 4
      %v1199 = vshll.u32 %v935, 16
      %v1201 = vrot.slane %v1199, 5
      %v1202 = vsel %vm962, %v1197, %v1201
      %v1204 = vshrl.u32 %v936, 16
      %v1206 = vrot.slane %v1204, 4
      %v1207 = vshll.u32 %v936, 16
      %v1209 = vrot.slane %v1207, 5
      %v1210 = vor.u32 %v1206, %v1209
      %v1211 = vrot.slane %v1210, 4
      %v1213 = vshll.u32 %v937, 16
      %v1215 = vrot.slane %v1213, 5
      %v1216 = vsel %vm962, %v1211, %v1215
      %v1217 = vshrl.u32 %v937, 16
      %v1219 = vrot.slane %v1217, 4
      %v1220 = vor.u32 %v1219, %v1215
      %v1221 = vrot.slane %v1220, 4
      %v1223 = vshll.u32 %v938, 16
      %v1225 = vrot.slane %v1223, 5
      %v1226 = vsel %vm962, %v1221, %v1225
      %v1228 = vshrl.u32 %v939, 16
      %v1230 = vrot.slane %v1228, 4
      %v1231 = vshll.u32 %v939, 16
      %v1233 = vrot.slane %v1231, 5
      %v1234 = vor.u32 %v1230, %v1233
      %v1235 = vrot.slane %v1234, 4
      %v1237 = vshll.u32 %v940, 16
      %v1239 = vrot.slane %v1237, 5
      %v1240 = vsel %vm962, %v1235, %v1239
      %v1241 = vshrl.u32 %v940, 16
      %v1243 = vrot.slane %v1241, 4
      %v1244 = vor.u32 %v1243, %v1239
      %v1245 = vrot.slane %v1244, 4
      %v1247 = vshll.u32 %v941, 16
      %v1249 = vrot.slane %v1247, 5
      %v1250 = vsel %vm962, %v1245, %v1249
      %v1252 = vshrl.u32 %v942, 16
      %v1254 = vrot.slane %v1252, 4
      %v1255 = vshll.u32 %v942, 16
      %v1257 = vrot.slane %v1255, 5
      %v1258 = vor.u32 %v1254, %v1257
      %v1259 = vrot.slane %v1258, 4
      %v1261 = vshll.u32 %v943, 16
      %v1263 = vrot.slane %v1261, 5
      %v1264 = vsel %vm962, %v1259, %v1263
      %v1265 = vshrl.u32 %v943, 16
      %v1267 = vrot.slane %v1265, 4
      %v1268 = vor.u32 %v1267, %v1263
      %v1269 = vrot.slane %v1268, 4
      %v1271 = vshll.u32 %v944, 16
      %v1273 = vrot.slane %v1271, 5
      %v1274 = vsel %vm962, %v1269, %v1273
      %v1276 = vshrl.u32 %v945, 16
      %v1278 = vrot.slane %v1276, 4
      %v1279 = vshll.u32 %v945, 16
      %v1281 = vrot.slane %v1279, 5
      %v1282 = vor.u32 %v1278, %v1281
      %v1283 = vrot.slane %v1282, 4
      %v1285 = vshll.u32 %v946, 16
      %v1287 = vrot.slane %v1285, 5
      %v1288 = vsel %vm962, %v1283, %v1287
      %v1289 = vshrl.u32 %v946, 16
      %v1291 = vrot.slane %v1289, 4
      %v1292 = vor.u32 %v1291, %v1287
      %v1293 = vrot.slane %v1292, 4
      %v1295 = vshll.u32 %v947, 16
      %v1297 = vrot.slane %v1295, 5
      %v1298 = vsel %vm962, %v1293, %v1297
      %v1300 = vshrl.u32 %v948, 16
      %v1302 = vrot.slane %v1300, 4
      %v1303 = vshll.u32 %v948, 16
      %v1305 = vrot.slane %v1303, 5
      %v1306 = vor.u32 %v1302, %v1305
      %v1307 = vrot.slane %v1306, 4
      %v1309 = vshll.u32 %v949, 16
      %v1311 = vrot.slane %v1309, 5
      %v1312 = vsel %vm962, %v1307, %v1311
      %v1313 = vshrl.u32 %v949, 16
      %v1315 = vrot.slane %v1313, 4
      %v1316 = vor.u32 %v1315, %v1311
      %v1317 = vrot.slane %v1316, 4
      %v1319 = vshll.u32 %v950, 16
      %v1321 = vrot.slane %v1319, 5
      %v1322 = vsel %vm962, %v1317, %v1321
      %v1324 = vshrl.u32 %v951, 16
      %v1326 = vrot.slane %v1324, 4
      %v1327 = vshll.u32 %v951, 16
      %v1329 = vrot.slane %v1327, 5
      %v1330 = vor.u32 %v1326, %v1329
      %v1331 = vrot.slane %v1330, 4
      %v1333 = vshll.u32 %v952, 16
      %v1335 = vrot.slane %v1333, 5
      %v1336 = vsel %vm962, %v1331, %v1335
      %v1337 = vshrl.u32 %v952, 16
      %v1339 = vrot.slane %v1337, 4
      %v1340 = vor.u32 %v1339, %v1335
      %v1341 = vrot.slane %v1340, 4
      %v1343 = vshll.u32 %v953, 16
      %v1345 = vrot.slane %v1343, 5
      %v1346 = vsel %vm962, %v1341, %v1345
      %vm1395 = vcmask 1042432
      %vm1396 = vcmask 1046532
      %vm1397 = vmor %vm1395, %vm1396
      %v1398 = vrot.slane %v906, 5
      %v1399 = vrot.slane %v1398, 4
      %v1400 = vrot.slane %v907, 5
      %v1401 = vsel %vm1397, %v1399, %v1400
      %v1402 = vrot.slane %v1400, 4
      %v1403 = vrot.slane %v908, 5
      %v1404 = vsel %vm1397, %v1402, %v1403
      %v1405 = vrot.slane %v909, 5
      %v1406 = vrot.slane %v1405, 4
      %v1407 = vrot.slane %v910, 5
      %v1408 = vsel %vm1397, %v1406, %v1407
      %v1409 = vrot.slane %v1407, 4
      %v1410 = vrot.slane %v911, 5
      %v1411 = vsel %vm1397, %v1409, %v1410
      %v1412 = vrot.slane %v912, 5
      %v1413 = vrot.slane %v1412, 4
      %v1414 = vrot.slane %v913, 5
      %v1415 = vsel %vm1397, %v1413, %v1414
      %v1416 = vrot.slane %v1414, 4
      %v1417 = vrot.slane %v914, 5
      %v1418 = vsel %vm1397, %v1416, %v1417
      %v1419 = vrot.slane %v915, 5
      %v1420 = vrot.slane %v1419, 4
      %v1421 = vrot.slane %v916, 5
      %v1422 = vsel %vm1397, %v1420, %v1421
      %v1423 = vrot.slane %v1421, 4
      %v1424 = vrot.slane %v917, 5
      %v1425 = vsel %vm1397, %v1423, %v1424
      %v1426 = vrot.slane %v918, 5
      %v1427 = vrot.slane %v1426, 4
      %v1428 = vrot.slane %v919, 5
      %v1429 = vsel %vm1397, %v1427, %v1428
      %v1430 = vrot.slane %v1428, 4
      %v1431 = vrot.slane %v920, 5
      %v1432 = vsel %vm1397, %v1430, %v1431
      %v1433 = vrot.slane %v921, 5
      %v1434 = vrot.slane %v1433, 4
      %v1435 = vrot.slane %v922, 5
      %v1436 = vsel %vm1397, %v1434, %v1435
      %v1437 = vrot.slane %v1435, 4
      %v1438 = vrot.slane %v923, 5
      %v1439 = vsel %vm1397, %v1437, %v1438
      %v1440 = vrot.slane %v924, 5
      %v1441 = vrot.slane %v1440, 4
      %v1442 = vrot.slane %v925, 5
      %v1443 = vsel %vm1397, %v1441, %v1442
      %v1444 = vrot.slane %v1442, 4
      %v1445 = vrot.slane %v926, 5
      %v1446 = vsel %vm1397, %v1444, %v1445
      %v1447 = vrot.slane %v927, 5
      %v1448 = vrot.slane %v1447, 4
      %v1449 = vrot.slane %v928, 5
      %v1450 = vsel %vm1397, %v1448, %v1449
      %v1451 = vrot.slane %v1449, 4
      %v1452 = vrot.slane %v929, 5
      %v1453 = vsel %vm1397, %v1451, %v1452
      %v1454 = vrot.slane %v930, 5
      %v1455 = vrot.slane %v1454, 4
      %v1456 = vrot.slane %v931, 5
      %v1457 = vsel %vm1397, %v1455, %v1456
      %v1458 = vrot.slane %v1456, 4
      %v1459 = vrot.slane %v932, 5
      %v1460 = vsel %vm1397, %v1458, %v1459
      %v1461 = vrot.slane %v933, 5
      %v1462 = vrot.slane %v1461, 4
      %v1463 = vrot.slane %v934, 5
      %v1464 = vsel %vm1397, %v1462, %v1463
      %v1465 = vrot.slane %v1463, 4
      %v1466 = vrot.slane %v935, 5
      %v1467 = vsel %vm1397, %v1465, %v1466
      %v1468 = vrot.slane %v936, 5
      %v1469 = vrot.slane %v1468, 4
      %v1470 = vrot.slane %v937, 5
      %v1471 = vsel %vm1397, %v1469, %v1470
      %v1472 = vrot.slane %v1470, 4
      %v1473 = vrot.slane %v938, 5
      %v1474 = vsel %vm1397, %v1472, %v1473
      %v1475 = vrot.slane %v939, 5
      %v1476 = vrot.slane %v1475, 4
      %v1477 = vrot.slane %v940, 5
      %v1478 = vsel %vm1397, %v1476, %v1477
      %v1479 = vrot.slane %v1477, 4
      %v1480 = vrot.slane %v941, 5
      %v1481 = vsel %vm1397, %v1479, %v1480
      %v1482 = vrot.slane %v942, 5
      %v1483 = vrot.slane %v1482, 4
      %v1484 = vrot.slane %v943, 5
      %v1485 = vsel %vm1397, %v1483, %v1484
      %v1486 = vrot.slane %v1484, 4
      %v1487 = vrot.slane %v944, 5
      %v1488 = vsel %vm1397, %v1486, %v1487
      %v1489 = vrot.slane %v945, 5
      %v1490 = vrot.slane %v1489, 4
      %v1491 = vrot.slane %v946, 5
      %v1492 = vsel %vm1397, %v1490, %v1491
      %v1493 = vrot.slane %v1491, 4
      %v1494 = vrot.slane %v947, 5
      %v1495 = vsel %vm1397, %v1493, %v1494
      %v1496 = vrot.slane %v948, 5
      %v1497 = vrot.slane %v1496, 4
      %v1498 = vrot.slane %v949, 5
      %v1499 = vsel %vm1397, %v1497, %v1498
      %v1500 = vrot.slane %v1498, 4
      %v1501 = vrot.slane %v950, 5
      %v1502 = vsel %vm1397, %v1500, %v1501
      %v1503 = vrot.slane %v951, 5
      %v1504 = vrot.slane %v1503, 4
      %v1505 = vrot.slane %v952, 5
      %v1506 = vsel %vm1397, %v1504, %v1505
      %v1507 = vrot.slane %v1505, 4
      %v1508 = vrot.slane %v953, 5
      %v1509 = vsel %vm1397, %v1507, %v1508
      %v1510 = vunpack.c.l.b16 %v906
      %v1511 = vunpack.c.l.b16 %v907
      %v1512 = vunpack.c.l.b16 %v909
      %v1513 = vunpack.c.l.b16 %v910
      %v1514 = vunpack.c.l.b16 %v912
      %v1515 = vunpack.c.l.b16 %v913
      %v1516 = vunpack.c.l.b16 %v915
      %v1517 = vunpack.c.l.b16 %v916
      %v1518 = vunpack.c.l.b16 %v918
      %v1519 = vunpack.c.l.b16 %v919
      %v1520 = vunpack.c.l.b16 %v921
      %v1521 = vunpack.c.l.b16 %v922
      %v1522 = vunpack.c.l.b16 %v924
      %v1523 = vunpack.c.l.b16 %v925
      %v1524 = vunpack.c.l.b16 %v927
      %v1525 = vunpack.c.l.b16 %v928
      %v1526 = vunpack.c.l.b16 %v930
      %v1527 = vunpack.c.l.b16 %v931
      %v1528 = vunpack.c.l.b16 %v933
      %v1529 = vunpack.c.l.b16 %v934
      %v1530 = vunpack.c.l.b16 %v936
      %v1531 = vunpack.c.l.b16 %v937
      %v1532 = vunpack.c.l.b16 %v939
      %v1533 = vunpack.c.l.b16 %v940
      %v1534 = vunpack.c.l.b16 %v942
      %v1535 = vunpack.c.l.b16 %v943
      %v1536 = vunpack.c.l.b16 %v945
      %v1537 = vunpack.c.l.b16 %v946
      %v1538 = vunpack.c.l.b16 %v948
      %v1539 = vunpack.c.l.b16 %v949
      %v1540 = vunpack.c.l.b16 %v951
      %v1541 = vunpack.c.l.b16 %v952
      %v1542 = vpack.c.b16 %v1511, %v1510
      %v1543 = vpack.c.b16 %v1513, %v1512
      %v1544 = vpack.c.b16 %v1515, %v1514
      %v1545 = vpack.c.b16 %v1517, %v1516
      %v1546 = vpack.c.b16 %v1519, %v1518
      %v1547 = vpack.c.b16 %v1521, %v1520
      %v1548 = vpack.c.b16 %v1523, %v1522
      %v1549 = vpack.c.b16 %v1525, %v1524
      %v1550 = vpack.c.b16 %v1527, %v1526
      %v1551 = vpack.c.b16 %v1529, %v1528
      %v1552 = vpack.c.b16 %v1531, %v1530
      %v1553 = vpack.c.b16 %v1533, %v1532
      %v1554 = vpack.c.b16 %v1535, %v1534
      %v1555 = vpack.c.b16 %v1537, %v1536
      %v1556 = vpack.c.b16 %v1539, %v1538
      %v1557 = vpack.c.b16 %v1541, %v1540
      %v1558 = vunpack.c.l.b16 %v976
      %v1559 = vunpack.c.l.b16 %v986
      %v1560 = vunpack.c.l.b16 %v1000
      %v1561 = vunpack.c.l.b16 %v1010
      %v1562 = vunpack.c.l.b16 %v1024
      %v1563 = vunpack.c.l.b16 %v1034
      %v1564 = vunpack.c.l.b16 %v1048
      %v1565 = vunpack.c.l.b16 %v1058
      %v1566 = vunpack.c.l.b16 %v1072
      %v1567 = vunpack.c.l.b16 %v1082
      %v1568 = vunpack.c.l.b16 %v1096
      %v1569 = vunpack.c.l.b16 %v1106
      %v1570 = vunpack.c.l.b16 %v1120
      %v1571 = vunpack.c.l.b16 %v1130
      %v1572 = vunpack.c.l.b16 %v1144
      %v1573 = vunpack.c.l.b16 %v1154
      %v1574 = vunpack.c.l.b16 %v1168
      %v1575 = vunpack.c.l.b16 %v1178
      %v1576 = vunpack.c.l.b16 %v1192
      %v1577 = vunpack.c.l.b16 %v1202
      %v1578 = vunpack.c.l.b16 %v1216
      %v1579 = vunpack.c.l.b16 %v1226
      %v1580 = vunpack.c.l.b16 %v1240
      %v1581 = vunpack.c.l.b16 %v1250
      %v1582 = vunpack.c.l.b16 %v1264
      %v1583 = vunpack.c.l.b16 %v1274
      %v1584 = vunpack.c.l.b16 %v1288
      %v1585 = vunpack.c.l.b16 %v1298
      %v1586 = vunpack.c.l.b16 %v1312
      %v1587 = vunpack.c.l.b16 %v1322
      %v1588 = vunpack.c.l.b16 %v1336
      %v1589 = vunpack.c.l.b16 %v1346
      %v1590 = vpack.c.b16 %v1559, %v1558
      %v1591 = vpack.c.b16 %v1561, %v1560
      %v1592 = vpack.c.b16 %v1563, %v1562
      %v1593 = vpack.c.b16 %v1565, %v1564
      %v1594 = vpack.c.b16 %v1567, %v1566
      %v1595 = vpack.c.b16 %v1569, %v1568
      %v1596 = vpack.c.b16 %v1571, %v1570
      %v1597 = vpack.c.b16 %v1573, %v1572
      %v1598 = vpack.c.b16 %v1575, %v1574
      %v1599 = vpack.c.b16 %v1577, %v1576
      %v1600 = vpack.c.b16 %v1579, %v1578
      %v1601 = vpack.c.b16 %v1581, %v1580
      %v1602 = vpack.c.b16 %v1583, %v1582
      %v1603 = vpack.c.b16 %v1585, %v1584
      %v1604 = vpack.c.b16 %v1587, %v1586
      %v1605 = vpack.c.b16 %v1589, %v1588
      %1606 = vrot.lane.b32.xlu0 %v1590, 64
      %v1607 = vpop.permute.xlu0 %1606
      %1608 = vrot.lane.b32.xlu0 %v1591, 64
      %v1609 = vpop.permute.xlu0 %1608
      %1610 = vrot.lane.b32.xlu0 %v1592, 64
      %v1611 = vpop.permute.xlu0 %1610
      %1612 = vrot.lane.b32.xlu0 %v1593, 64
      %v1613 = vpop.permute.xlu0 %1612
      %1614 = vrot.lane.b32.xlu0 %v1594, 64
      %v1615 = vpop.permute.xlu0 %1614
      %1616 = vrot.lane.b32.xlu0 %v1595, 64
      %v1617 = vpop.permute.xlu0 %1616
      %1618 = vrot.lane.b32.xlu0 %v1596, 64
      %v1619 = vpop.permute.xlu0 %1618
      %1620 = vrot.lane.b32.xlu0 %v1597, 64
      %v1621 = vpop.permute.xlu0 %1620
      %1622 = vrot.lane.b32.xlu0 %v1598, 64
      %v1623 = vpop.permute.xlu0 %1622
      %1624 = vrot.lane.b32.xlu0 %v1599, 64
      %v1625 = vpop.permute.xlu0 %1624
      %1626 = vrot.lane.b32.xlu0 %v1600, 64
      %v1627 = vpop.permute.xlu0 %1626
      %1628 = vrot.lane.b32.xlu0 %v1601, 64
      %v1629 = vpop.permute.xlu0 %1628
      %1630 = vrot.lane.b32.xlu0 %v1602, 64
      %v1631 = vpop.permute.xlu0 %1630
      %1632 = vrot.lane.b32.xlu0 %v1603, 64
      %v1633 = vpop.permute.xlu0 %1632
      %1634 = vrot.lane.b32.xlu0 %v1604, 64
      %v1635 = vpop.permute.xlu0 %1634
      %1636 = vrot.lane.b32.xlu0 %v1605, 64
      %v1637 = vpop.permute.xlu0 %1636
      %v1638 = vunpack.c.l.b16 %v1401
      %v1639 = vunpack.c.l.b16 %v1404
      %v1640 = vunpack.c.l.b16 %v1408
      %v1641 = vunpack.c.l.b16 %v1411
      %v1642 = vunpack.c.l.b16 %v1415
      %v1643 = vunpack.c.l.b16 %v1418
      %v1644 = vunpack.c.l.b16 %v1422
      %v1645 = vunpack.c.l.b16 %v1425
      %v1646 = vunpack.c.l.b16 %v1429
      %v1647 = vunpack.c.l.b16 %v1432
      %v1648 = vunpack.c.l.b16 %v1436
      %v1649 = vunpack.c.l.b16 %v1439
      %v1650 = vunpack.c.l.b16 %v1443
      %v1651 = vunpack.c.l.b16 %v1446
      %v1652 = vunpack.c.l.b16 %v1450
      %v1653 = vunpack.c.l.b16 %v1453
      %v1654 = vunpack.c.l.b16 %v1457
      %v1655 = vunpack.c.l.b16 %v1460
      %v1656 = vunpack.c.l.b16 %v1464
      %v1657 = vunpack.c.l.b16 %v1467
      %v1658 = vunpack.c.l.b16 %v1471
      %v1659 = vunpack.c.l.b16 %v1474
      %v1660 = vunpack.c.l.b16 %v1478
      %v1661 = vunpack.c.l.b16 %v1481
      %v1662 = vunpack.c.l.b16 %v1485
      %v1663 = vunpack.c.l.b16 %v1488
      %v1664 = vunpack.c.l.b16 %v1492
      %v1665 = vunpack.c.l.b16 %v1495
      %v1666 = vunpack.c.l.b16 %v1499
      %v1667 = vunpack.c.l.b16 %v1502
      %v1668 = vunpack.c.l.b16 %v1506
      %v1669 = vunpack.c.l.b16 %v1509
      %v1670 = vpack.c.b16 %v1639, %v1638
      %v1671 = vpack.c.b16 %v1641, %v1640
      %v1672 = vpack.c.b16 %v1643, %v1642
      %v1673 = vpack.c.b16 %v1645, %v1644
      %v1674 = vpack.c.b16 %v1647, %v1646
      %v1675 = vpack.c.b16 %v1649, %v1648
      %v1676 = vpack.c.b16 %v1651, %v1650
      %v1677 = vpack.c.b16 %v1653, %v1652
      %v1678 = vpack.c.b16 %v1655, %v1654
      %v1679 = vpack.c.b16 %v1657, %v1656
      %v1680 = vpack.c.b16 %v1659, %v1658
      %v1681 = vpack.c.b16 %v1661, %v1660
      %v1682 = vpack.c.b16 %v1663, %v1662
      %v1683 = vpack.c.b16 %v1665, %v1664
      %v1684 = vpack.c.b16 %v1667, %v1666
      %v1685 = vpack.c.b16 %v1669, %v1668
      %vm1686 = vcmask 523264
      %v1689 = vsel %vm1686, %v1542, %v1607
      %v1693 = vsel %vm1686, %v1543, %v1609
      %v1697 = vsel %vm1686, %v1544, %v1611
      %v1701 = vsel %vm1686, %v1545, %v1613
      %v1705 = vsel %vm1686, %v1546, %v1615
      %v1709 = vsel %vm1686, %v1547, %v1617
      %v1713 = vsel %vm1686, %v1548, %v1619
      %v1717 = vsel %vm1686, %v1549, %v1621
      %v1721 = vsel %vm1686, %v1550, %v1623
      %v1725 = vsel %vm1686, %v1551, %v1625
      %v1729 = vsel %vm1686, %v1552, %v1627
      %v1733 = vsel %vm1686, %v1553, %v1629
      %v1737 = vsel %vm1686, %v1554, %v1631
      %v1741 = vsel %vm1686, %v1555, %v1633
      %v1745 = vsel %vm1686, %v1556, %v1635
      %v1749 = vsel %vm1686, %v1557, %v1637
      %v1751 = vld [vmem:[%s4] sm:$0xf]
      %v1752 = vld [vmem:[%s4 + $0x4] sm:$0xf]
      %v1753 = vld [vmem:[%s4 + $0x8] sm:$0xf]
      %v1754 = vld [vmem:[%s4 + $0xc] sm:$0xf]
      %v1755 = vld [vmem:[%s4 + $0x10] sm:$0xf]
      %v1756 = vld [vmem:[%s4 + $0x14] sm:$0xf]
      %v1757 = vld [vmem:[%s4 + $0x18] sm:$0xf]
      %v1758 = vld [vmem:[%s4 + $0x1c] sm:$0xf]
      %v1759 = vld [vmem:[%s4 + $0x20] sm:$0xf]
      %v1760 = vld [vmem:[%s4 + $0x24] sm:$0xf]
      %v1761 = vld [vmem:[%s4 + $0x28] sm:$0xf]
      %v1762 = vld [vmem:[%s4 + $0x2c] sm:$0xf]
      %v1763 = vld [vmem:[%s4 + $0x30] sm:$0xf]
      %v1764 = vld [vmem:[%s4 + $0x34] sm:$0xf]
      %v1765 = vld [vmem:[%s4 + $0x38] sm:$0xf]
      %v1766 = vld [vmem:[%s4 + $0x3c] sm:$0xf]
      %v1767 = vld [vmem:[%s4 + $0x40] sm:$0xf]
      %v1768 = vld [vmem:[%s4 + $0x44] sm:$0xf]
      %v1769 = vld [vmem:[%s4 + $0x48] sm:$0xf]
      %v1770 = vld [vmem:[%s4 + $0x4c] sm:$0xf]
      %v1771 = vld [vmem:[%s4 + $0x50] sm:$0xf]
      %v1772 = vld [vmem:[%s4 + $0x54] sm:$0xf]
      %v1773 = vld [vmem:[%s4 + $0x58] sm:$0xf]
      %v1774 = vld [vmem:[%s4 + $0x5c] sm:$0xf]
      %v1776 = vshrl.u32 %v954, 16
      %v1778 = vrot.slane %v1776, 4
      %v1779 = vshll.u32 %v954, 16
      %v1781 = vrot.slane %v1779, 5
      %v1782 = vor.u32 %v1778, %v1781
      %v1783 = vrot.slane %v1782, 4
      %v1785 = vshll.u32 %v955, 16
      %v1787 = vrot.slane %v1785, 5
      %v1788 = vsel %vm962, %v1783, %v1787
      %v1789 = vshrl.u32 %v955, 16
      %v1791 = vrot.slane %v1789, 4
      %v1792 = vor.u32 %v1791, %v1787
      %v1793 = vrot.slane %v1792, 4
      %v1795 = vshll.u32 %v956, 16
      %v1797 = vrot.slane %v1795, 5
      %v1798 = vsel %vm962, %v1793, %v1797
      %v1802 = vrot.slane %v954, 5
      %v1803 = vrot.slane %v1802, 4
      %v1804 = vrot.slane %v955, 5
      %v1805 = vsel %vm1397, %v1803, %v1804
      %v1806 = vrot.slane %v1804, 4
      %v1807 = vrot.slane %v956, 5
      %v1808 = vsel %vm1397, %v1806, %v1807
      %v1809 = vunpack.c.l.b16 %v954
      %v1810 = vunpack.c.l.b16 %v955
      %v1811 = vpack.c.b16 %v1810, %v1809
      %v1812 = vunpack.c.l.b16 %v1788
      %v1813 = vunpack.c.l.b16 %v1798
      %v1814 = vpack.c.b16 %v1813, %v1812
      %1815 = vrot.lane.b32.xlu0 %v1814, 64
      %v1816 = vpop.permute.xlu0 %1815
      %v1817 = vunpack.c.l.b16 %v1805
      %v1818 = vunpack.c.l.b16 %v1808
      %v1819 = vpack.c.b16 %v1818, %v1817
      %v1822 = vsel %vm1686, %v1811, %v1816
      %s1824 = scalar_lea.vmem %s4, 96
      %v1825 = vld [vmem:[%s1824] sm:$0xf]
      %v1826 = vld [vmem:[%s1824 + $0x4] sm:$0xf]
      %v1827 = vld [vmem:[%s1824 + $0x8] sm:$0xf]
      %v1828 = vld [vmem:[%s1824 + $0xc] sm:$0xf]
      %v1829 = vld [vmem:[%s1824 + $0x10] sm:$0xf]
      %v1830 = vld [vmem:[%s1824 + $0x14] sm:$0xf]
      %v1831 = vld [vmem:[%s1824 + $0x18] sm:$0xf]
      %v1832 = vld [vmem:[%s1824 + $0x1c] sm:$0xf]
      %v1833 = vld [vmem:[%s1824 + $0x20] sm:$0xf]
      %v1834 = vld [vmem:[%s1824 + $0x24] sm:$0xf]
      %v1835 = vld [vmem:[%s1824 + $0x28] sm:$0xf]
      %v1836 = vld [vmem:[%s1824 + $0x2c] sm:$0xf]
      %v1837 = vld [vmem:[%s1824 + $0x30] sm:$0xf]
      %v1838 = vld [vmem:[%s1824 + $0x34] sm:$0xf]
      %v1839 = vld [vmem:[%s1824 + $0x38] sm:$0xf]
      %v1840 = vld [vmem:[%s1824 + $0x3c] sm:$0xf]
      %v1841 = vld [vmem:[%s1824 + $0x40] sm:$0xf]
      %v1842 = vld [vmem:[%s1824 + $0x44] sm:$0xf]
      %v1843 = vld [vmem:[%s1824 + $0x48] sm:$0xf]
      %v1844 = vld [vmem:[%s1824 + $0x4c] sm:$0xf]
      %v1845 = vld [vmem:[%s1824 + $0x50] sm:$0xf]
      %v1846 = vld [vmem:[%s1824 + $0x54] sm:$0xf]
      %v1847 = vld [vmem:[%s1824 + $0x58] sm:$0xf]
      %v1848 = vld [vmem:[%s1824 + $0x5c] sm:$0xf]
      %v1873 = vunpack.c.l.b16 %v1825
      %v1874 = vunpack.c.l.b16 %v1826
      %v1875 = vunpack.c.l.b16 %v1827
      %v1876 = vunpack.c.l.b16 %v1828
      %v1877 = vunpack.c.l.b16 %v1829
      %v1878 = vunpack.c.l.b16 %v1830
      %v1879 = vunpack.c.l.b16 %v1831
      %v1880 = vunpack.c.l.b16 %v1832
      %v1881 = vunpack.c.l.b16 %v1833
      %v1882 = vunpack.c.l.b16 %v1834
      %v1883 = vunpack.c.l.b16 %v1835
      %v1884 = vunpack.c.l.b16 %v1836
      %v1885 = vunpack.c.l.b16 %v1837
      %v1886 = vunpack.c.l.b16 %v1838
      %v1887 = vunpack.c.l.b16 %v1839
      %v1888 = vunpack.c.l.b16 %v1840
      %v1889 = vunpack.c.l.b16 %v1841
      %v1890 = vunpack.c.l.b16 %v1842
      %v1891 = vunpack.c.l.b16 %v1843
      %v1892 = vunpack.c.l.b16 %v1844
      %v1893 = vunpack.c.l.b16 %v1845
      %v1894 = vunpack.c.l.b16 %v1846
      %v1895 = vunpack.c.l.b16 %v1847
      %v1896 = vunpack.c.l.b16 %v1848
      %v1897 = vpack.c.b16 %v1874, %v1873
      %v1898 = vpack.c.b16 %v1876, %v1875
      %v1899 = vpack.c.b16 %v1878, %v1877
      %v1900 = vpack.c.b16 %v1880, %v1879
      %v1901 = vpack.c.b16 %v1882, %v1881
      %v1902 = vpack.c.b16 %v1884, %v1883
      %v1903 = vpack.c.b16 %v1886, %v1885
      %v1904 = vpack.c.b16 %v1888, %v1887
      %v1905 = vpack.c.b16 %v1890, %v1889
      %v1906 = vpack.c.b16 %v1892, %v1891
      %v1907 = vpack.c.b16 %v1894, %v1893
      %v1908 = vpack.c.b16 %v1896, %v1895
      %v1922 = vsel %vm1686, %v1671, 0
      %v1925 = vsel %vm1686, %v1672, 0
      %v1928 = vsel %vm1686, %v1673, 0
      %v1931 = vsel %vm1686, %v1674, 0
      %v1934 = vsel %vm1686, %v1675, 0
      %v1937 = vsel %vm1686, %v1676, 0
      %v1940 = vsel %vm1686, %v1677, 0
      %v1943 = vsel %vm1686, %v1678, 0
      %v1946 = vsel %vm1686, %v1679, 0
      %v1949 = vsel %vm1686, %v1680, 0
      %v1952 = vsel %vm1686, %v1681, 0
      %v1955 = vsel %vm1686, %v1682, 0
      %v1958 = vsel %vm1686, %v1683, 0
      %v1961 = vsel %vm1686, %v1684, 0
      %v1964 = vsel %vm1686, %v1685, 0
      %v1967 = vsel %vm1686, %v1819, 0
      %1969 = vmatprep.subr.bf16.mxu0 0
      %1970 = vmatpush1.bf16.msra.mxu0 %v1904
      %1971 = vmatprep.subr.bf16.mxu0 0
      %1972 = vmatpush1.bf16.msra.mxu0 %v1903
      %1973 = vmatprep.subr.bf16.mxu0 0
      %1974 = vmatpush1.bf16.msra.mxu0 %v1902
      %1975 = vmatprep.subr.bf16.mxu0 0
      %1976 = vmatpush1.bf16.msra.mxu0 %v1901
      %1977 = vmatprep.subr.bf16.mxu0 0
      %1978 = vmatpush1.bf16.msra.mxu0 %v1900
      %1979 = vmatprep.subr.bf16.mxu0 0
      %1980 = vmatpush1.bf16.msra.mxu0 %v1899
      %1981 = vmatprep.subr.bf16.mxu0 0
      %1982 = vmatpush1.bf16.msra.mxu0 %v1898
      %1983 = vmatprep.subr.bf16.mxu0 0
      %1984 = vmatpush1.bf16.msra.mxu0 %v1897
      %1985 = vmatprep.subr.bf16.mxu0 0
      %1986 = vmatpush2.bf16.msra.mxu0 0
      %1987 = vmatprep.subr.bf16.mxu0 0
      %1988 = vmatpush2.bf16.msra.mxu0 0
      %1989 = vmatprep.subr.bf16.mxu0 0
      %1990 = vmatpush2.bf16.msra.mxu0 0
      %1991 = vmatprep.subr.bf16.mxu0 0
      %1992 = vmatpush2.bf16.msra.mxu0 0
      %1993 = vmatprep.subr.bf16.mxu0 0
      %1994 = vmatpush2.bf16.msra.mxu0 %v1908
      %1995 = vmatprep.subr.bf16.mxu0 0
      %1996 = vmatpush2.bf16.msra.mxu0 %v1907
      %1997 = vmatprep.subr.bf16.mxu0 0
      %1998 = vmatpush2.bf16.msra.mxu0 %v1906
      %1999 = vmatprep.subr.bf16.mxu0 0
      %2000 = vmatpush2.bf16.msra.mxu0 %v1905
      %2001 = vmatprep.mubr.bf16.mxu0 %v1922
      %2002 = vmatmul.mubr.bf16.gmra.mxu0 %v1693
      %v2003 = vpop.f32.mrf.mxu0
      %v2004 = vadd.f32 0.0, %v2003
      %v2005 = vpop.f32.mrf.mxu0
      %v2006 = vpop.f32.mrf.mxu0
      %v2007 = vadd.f32 0.0, %v2006
      %v2008 = vpop.f32.mrf.mxu0
      %2009 = vmatprep.mubr.bf16.mxu0 %v1925
      %2010 = vmatmul.mubr.bf16.gmra.mxu0 %v1697
      %v2011 = vpop.f32.mrf.mxu0
      %v2012 = vadd.f32 0.0, %v2011
      %v2013 = vpop.f32.mrf.mxu0
      %v2014 = vpop.f32.mrf.mxu0
      %v2015 = vadd.f32 0.0, %v2014
      %v2016 = vpop.f32.mrf.mxu0
      %2017 = vmatprep.mubr.bf16.mxu0 %v1928
      %2018 = vmatmul.mubr.bf16.gmra.mxu0 %v1701
      %v2019 = vpop.f32.mrf.mxu0
      %v2020 = vadd.f32 0.0, %v2019
      %v2021 = vpop.f32.mrf.mxu0
      %v2022 = vpop.f32.mrf.mxu0
      %v2023 = vadd.f32 0.0, %v2022
      %v2024 = vpop.f32.mrf.mxu0
      %2025 = vmatprep.mubr.bf16.mxu0 %v1931
      %2026 = vmatmul.mubr.bf16.gmra.mxu0 %v1705
      %v2027 = vpop.f32.mrf.mxu0
      %v2028 = vadd.f32 0.0, %v2027
      %v2029 = vpop.f32.mrf.mxu0
      %v2030 = vpop.f32.mrf.mxu0
      %v2031 = vadd.f32 0.0, %v2030
      %v2032 = vpop.f32.mrf.mxu0
      %2033 = vmatprep.mubr.bf16.mxu0 %v1934
      %2034 = vmatmul.mubr.bf16.gmra.mxu0 %v1709
      %v2035 = vpop.f32.mrf.mxu0
      %v2036 = vadd.f32 0.0, %v2035
      %v2037 = vpop.f32.mrf.mxu0
      %v2038 = vpop.f32.mrf.mxu0
      %v2039 = vadd.f32 0.0, %v2038
      %v2040 = vpop.f32.mrf.mxu0
      %2041 = vmatprep.mubr.bf16.mxu0 %v1937
      %2042 = vmatmul.mubr.bf16.gmra.mxu0 %v1713
      %v2043 = vpop.f32.mrf.mxu0
      %v2044 = vadd.f32 0.0, %v2043
      %v2045 = vpop.f32.mrf.mxu0
      %v2046 = vpop.f32.mrf.mxu0
      %v2047 = vadd.f32 0.0, %v2046
      %v2048 = vpop.f32.mrf.mxu0
      %2049 = vmatprep.mubr.bf16.mxu0 %v1940
      %2050 = vmatmul.mubr.bf16.gmra.mxu0 %v1717
      %v2051 = vpop.f32.mrf.mxu0
      %v2052 = vadd.f32 0.0, %v2051
      %v2053 = vpop.f32.mrf.mxu0
      %v2054 = vpop.f32.mrf.mxu0
      %v2055 = vadd.f32 0.0, %v2054
      %v2056 = vpop.f32.mrf.mxu0
      %2057 = vmatprep.mubr.bf16.mxu0 %v1943
      %2058 = vmatmul.mubr.bf16.gmra.mxu0 %v1721
      %v2059 = vpop.f32.mrf.mxu0
      %v2060 = vadd.f32 0.0, %v2059
      %v2061 = vpop.f32.mrf.mxu0
      %v2062 = vpop.f32.mrf.mxu0
      %v2063 = vadd.f32 0.0, %v2062
      %v2064 = vpop.f32.mrf.mxu0
      %2065 = vmatprep.mubr.bf16.mxu0 %v1946
      %2066 = vmatmul.mubr.bf16.gmra.mxu0 %v1725
      %v2067 = vpop.f32.mrf.mxu0
      %v2068 = vadd.f32 0.0, %v2067
      %v2069 = vpop.f32.mrf.mxu0
      %v2070 = vpop.f32.mrf.mxu0
      %v2071 = vadd.f32 0.0, %v2070
      %v2072 = vpop.f32.mrf.mxu0
      %2073 = vmatprep.mubr.bf16.mxu0 %v1949
      %2074 = vmatmul.mubr.bf16.gmra.mxu0 %v1729
      %v2075 = vpop.f32.mrf.mxu0
      %v2076 = vadd.f32 0.0, %v2075
      %v2077 = vpop.f32.mrf.mxu0
      %v2078 = vpop.f32.mrf.mxu0
      %v2079 = vadd.f32 0.0, %v2078
      %v2080 = vpop.f32.mrf.mxu0
      %2081 = vmatprep.mubr.bf16.mxu0 %v1952
      %2082 = vmatmul.mubr.bf16.gmra.mxu0 %v1733
      %v2083 = vpop.f32.mrf.mxu0
      %v2084 = vadd.f32 0.0, %v2083
      %v2085 = vpop.f32.mrf.mxu0
      %v2086 = vpop.f32.mrf.mxu0
      %v2087 = vadd.f32 0.0, %v2086
      %v2088 = vpop.f32.mrf.mxu0
      %2089 = vmatprep.mubr.bf16.mxu0 %v1955
      %2090 = vmatmul.mubr.bf16.gmra.mxu0 %v1737
      %v2091 = vpop.f32.mrf.mxu0
      %v2092 = vadd.f32 0.0, %v2091
      %v2093 = vpop.f32.mrf.mxu0
      %v2094 = vpop.f32.mrf.mxu0
      %v2095 = vadd.f32 0.0, %v2094
      %v2096 = vpop.f32.mrf.mxu0
      %2097 = vmatprep.mubr.bf16.mxu0 %v1958
      %2098 = vmatmul.mubr.bf16.gmra.mxu0 %v1741
      %v2099 = vpop.f32.mrf.mxu0
      %v2100 = vadd.f32 0.0, %v2099
      %v2101 = vpop.f32.mrf.mxu0
      %v2102 = vpop.f32.mrf.mxu0
      %v2103 = vadd.f32 0.0, %v2102
      %v2104 = vpop.f32.mrf.mxu0
      %2105 = vmatprep.mubr.bf16.mxu0 %v1961
      %2106 = vmatmul.mubr.bf16.gmra.mxu0 %v1745
      %v2107 = vpop.f32.mrf.mxu0
      %v2108 = vadd.f32 0.0, %v2107
      %v2109 = vpop.f32.mrf.mxu0
      %v2110 = vpop.f32.mrf.mxu0
      %v2111 = vadd.f32 0.0, %v2110
      %v2112 = vpop.f32.mrf.mxu0
      %2113 = vmatprep.mubr.bf16.mxu0 %v1964
      %2114 = vmatmul.mubr.bf16.gmra.mxu0 %v1749
      %v2115 = vpop.f32.mrf.mxu0
      %v2116 = vadd.f32 0.0, %v2115
      %v2117 = vpop.f32.mrf.mxu0
      %v2118 = vpop.f32.mrf.mxu0
      %v2119 = vadd.f32 0.0, %v2118
      %v2120 = vpop.f32.mrf.mxu0
      %2121 = vmatprep.mubr.bf16.mxu0 %v1967
      %2122 = vmatmul.mubr.bf16.gmra.mxu0 %v1822
      %v2123 = vpop.f32.mrf.mxu0
      %v2124 = vadd.f32 0.0, %v2123
      %v2125 = vpop.f32.mrf.mxu0
      %v2126 = vpop.f32.mrf.mxu0
      %v2127 = vadd.f32 0.0, %v2126
      %v2128 = vpop.f32.mrf.mxu0
      %2129 = vdwg.mxu0
      %v2154 = vunpack.c.l.b16 %v1751
      %v2155 = vunpack.c.l.b16 %v1752
      %v2156 = vunpack.c.l.b16 %v1753
      %v2157 = vunpack.c.l.b16 %v1754
      %v2158 = vunpack.c.l.b16 %v1755
      %v2159 = vunpack.c.l.b16 %v1756
      %v2160 = vunpack.c.l.b16 %v1757
      %v2161 = vunpack.c.l.b16 %v1758
      %v2162 = vunpack.c.l.b16 %v1759
      %v2163 = vunpack.c.l.b16 %v1760
      %v2164 = vunpack.c.l.b16 %v1761
      %v2165 = vunpack.c.l.b16 %v1762
      %v2166 = vunpack.c.l.b16 %v1763
      %v2167 = vunpack.c.l.b16 %v1764
      %v2168 = vunpack.c.l.b16 %v1765
      %v2169 = vunpack.c.l.b16 %v1766
      %v2170 = vunpack.c.l.b16 %v1767
      %v2171 = vunpack.c.l.b16 %v1768
      %v2172 = vunpack.c.l.b16 %v1769
      %v2173 = vunpack.c.l.b16 %v1770
      %v2174 = vunpack.c.l.b16 %v1771
      %v2175 = vunpack.c.l.b16 %v1772
      %v2176 = vunpack.c.l.b16 %v1773
      %v2177 = vunpack.c.l.b16 %v1774
      %v2178 = vpack.c.b16 %v2155, %v2154
      %v2179 = vpack.c.b16 %v2157, %v2156
      %v2180 = vpack.c.b16 %v2159, %v2158
      %v2181 = vpack.c.b16 %v2161, %v2160
      %v2182 = vpack.c.b16 %v2163, %v2162
      %v2183 = vpack.c.b16 %v2165, %v2164
      %v2184 = vpack.c.b16 %v2167, %v2166
      %v2185 = vpack.c.b16 %v2169, %v2168
      %v2186 = vpack.c.b16 %v2171, %v2170
      %v2187 = vpack.c.b16 %v2173, %v2172
      %v2188 = vpack.c.b16 %v2175, %v2174
      %v2189 = vpack.c.b16 %v2177, %v2176
      %v2203 = vsel %vm1686, %v1670, 0
      %2205 = vmatprep.subr.bf16.mxu0 0
      %2206 = vmatpush1.bf16.msra.mxu0 %v2185
      %2207 = vmatprep.subr.bf16.mxu0 0
      %2208 = vmatpush1.bf16.msra.mxu0 %v2184
      %2209 = vmatprep.subr.bf16.mxu0 0
      %2210 = vmatpush1.bf16.msra.mxu0 %v2183
      %2211 = vmatprep.subr.bf16.mxu0 0
      %2212 = vmatpush1.bf16.msra.mxu0 %v2182
      %2213 = vmatprep.subr.bf16.mxu0 0
      %2214 = vmatpush1.bf16.msra.mxu0 %v2181
      %2215 = vmatprep.subr.bf16.mxu0 0
      %2216 = vmatpush1.bf16.msra.mxu0 %v2180
      %2217 = vmatprep.subr.bf16.mxu0 0
      %2218 = vmatpush1.bf16.msra.mxu0 %v2179
      %2219 = vmatprep.subr.bf16.mxu0 0
      %2220 = vmatpush1.bf16.msra.mxu0 %v2178
      %2221 = vmatprep.subr.bf16.mxu0 0
      %2222 = vmatpush2.bf16.msra.mxu0 0
      %2223 = vmatprep.subr.bf16.mxu0 0
      %2224 = vmatpush2.bf16.msra.mxu0 0
      %2225 = vmatprep.subr.bf16.mxu0 0
      %2226 = vmatpush2.bf16.msra.mxu0 0
      %2227 = vmatprep.subr.bf16.mxu0 0
      %2228 = vmatpush2.bf16.msra.mxu0 0
      %2229 = vmatprep.subr.bf16.mxu0 0
      %2230 = vmatpush2.bf16.msra.mxu0 %v2189
      %2231 = vmatprep.subr.bf16.mxu0 0
      %2232 = vmatpush2.bf16.msra.mxu0 %v2188
      %2233 = vmatprep.subr.bf16.mxu0 0
      %2234 = vmatpush2.bf16.msra.mxu0 %v2187
      %2235 = vmatprep.subr.bf16.mxu0 0
      %2236 = vmatpush2.bf16.msra.mxu0 %v2186
      %2237 = vmatprep.mubr.bf16.mxu0 %v2203
      %2238 = vmatmul.mubr.bf16.gmra.mxu0 %v1689
      %v2239 = vpop.f32.mrf.mxu0
      %v2240 = vadd.f32 %v2004, %v2239
      %v2241 = vpop.f32.mrf.mxu0
      %v2242 = vpop.f32.mrf.mxu0
      %v2243 = vadd.f32 %v2007, %v2242
      %v2244 = vpop.f32.mrf.mxu0
      %2245 = vmatprep.mubr.bf16.mxu0 %v1922
      %2246 = vmatmul.mubr.bf16.gmra.mxu0 %v1693
      %v2247 = vpop.f32.mrf.mxu0
      %v2248 = vadd.f32 %v2012, %v2247
      %v2249 = vpop.f32.mrf.mxu0
      %v2250 = vpop.f32.mrf.mxu0
      %v2251 = vadd.f32 %v2015, %v2250
      %v2252 = vpop.f32.mrf.mxu0
      %2253 = vmatprep.mubr.bf16.mxu0 %v1925
      %2254 = vmatmul.mubr.bf16.gmra.mxu0 %v1697
      %v2255 = vpop.f32.mrf.mxu0
      %v2256 = vadd.f32 %v2020, %v2255
      %v2257 = vpop.f32.mrf.mxu0
      %v2258 = vpop.f32.mrf.mxu0
      %v2259 = vadd.f32 %v2023, %v2258
      %v2260 = vpop.f32.mrf.mxu0
      %2261 = vmatprep.mubr.bf16.mxu0 %v1928
      %2262 = vmatmul.mubr.bf16.gmra.mxu0 %v1701
      %v2263 = vpop.f32.mrf.mxu0
      %v2264 = vadd.f32 %v2028, %v2263
      %v2265 = vpop.f32.mrf.mxu0
      %v2266 = vpop.f32.mrf.mxu0
      %v2267 = vadd.f32 %v2031, %v2266
      %v2268 = vpop.f32.mrf.mxu0
      %2269 = vmatprep.mubr.bf16.mxu0 %v1931
      %2270 = vmatmul.mubr.bf16.gmra.mxu0 %v1705
      %v2271 = vpop.f32.mrf.mxu0
      %v2272 = vadd.f32 %v2036, %v2271
      %v2273 = vpop.f32.mrf.mxu0
      %v2274 = vpop.f32.mrf.mxu0
      %v2275 = vadd.f32 %v2039, %v2274
      %v2276 = vpop.f32.mrf.mxu0
      %2277 = vmatprep.mubr.bf16.mxu0 %v1934
      %2278 = vmatmul.mubr.bf16.gmra.mxu0 %v1709
      %v2279 = vpop.f32.mrf.mxu0
      %v2280 = vadd.f32 %v2044, %v2279
      %v2281 = vpop.f32.mrf.mxu0
      %v2282 = vpop.f32.mrf.mxu0
      %v2283 = vadd.f32 %v2047, %v2282
      %v2284 = vpop.f32.mrf.mxu0
      %2285 = vmatprep.mubr.bf16.mxu0 %v1937
      %2286 = vmatmul.mubr.bf16.gmra.mxu0 %v1713
      %v2287 = vpop.f32.mrf.mxu0
      %v2288 = vadd.f32 %v2052, %v2287
      %v2289 = vpop.f32.mrf.mxu0
      %v2290 = vpop.f32.mrf.mxu0
      %v2291 = vadd.f32 %v2055, %v2290
      %v2292 = vpop.f32.mrf.mxu0
      %2293 = vmatprep.mubr.bf16.mxu0 %v1940
      %2294 = vmatmul.mubr.bf16.gmra.mxu0 %v1717
      %v2295 = vpop.f32.mrf.mxu0
      %v2296 = vadd.f32 %v2060, %v2295
      %v2297 = vpop.f32.mrf.mxu0
      %v2298 = vpop.f32.mrf.mxu0
      %v2299 = vadd.f32 %v2063, %v2298
      %v2300 = vpop.f32.mrf.mxu0
      %2301 = vmatprep.mubr.bf16.mxu0 %v1943
      %2302 = vmatmul.mubr.bf16.gmra.mxu0 %v1721
      %v2303 = vpop.f32.mrf.mxu0
      %v2304 = vadd.f32 %v2068, %v2303
      %v2305 = vpop.f32.mrf.mxu0
      %v2306 = vpop.f32.mrf.mxu0
      %v2307 = vadd.f32 %v2071, %v2306
      %v2308 = vpop.f32.mrf.mxu0
      %2309 = vmatprep.mubr.bf16.mxu0 %v1946
      %2310 = vmatmul.mubr.bf16.gmra.mxu0 %v1725
      %v2311 = vpop.f32.mrf.mxu0
      %v2312 = vadd.f32 %v2076, %v2311
      %v2313 = vpop.f32.mrf.mxu0
      %v2314 = vpop.f32.mrf.mxu0
      %v2315 = vadd.f32 %v2079, %v2314
      %v2316 = vpop.f32.mrf.mxu0
      %2317 = vmatprep.mubr.bf16.mxu0 %v1949
      %2318 = vmatmul.mubr.bf16.gmra.mxu0 %v1729
      %v2319 = vpop.f32.mrf.mxu0
      %v2320 = vadd.f32 %v2084, %v2319
      %v2321 = vpop.f32.mrf.mxu0
      %v2322 = vpop.f32.mrf.mxu0
      %v2323 = vadd.f32 %v2087, %v2322
      %v2324 = vpop.f32.mrf.mxu0
      %2325 = vmatprep.mubr.bf16.mxu0 %v1952
      %2326 = vmatmul.mubr.bf16.gmra.mxu0 %v1733
      %v2327 = vpop.f32.mrf.mxu0
      %v2328 = vadd.f32 %v2092, %v2327
      %v2329 = vpop.f32.mrf.mxu0
      %v2330 = vpop.f32.mrf.mxu0
      %v2331 = vadd.f32 %v2095, %v2330
      %v2332 = vpop.f32.mrf.mxu0
      %2333 = vmatprep.mubr.bf16.mxu0 %v1955
      %2334 = vmatmul.mubr.bf16.gmra.mxu0 %v1737
      %v2335 = vpop.f32.mrf.mxu0
      %v2336 = vadd.f32 %v2100, %v2335
      %v2337 = vpop.f32.mrf.mxu0
      %v2338 = vpop.f32.mrf.mxu0
      %v2339 = vadd.f32 %v2103, %v2338
      %v2340 = vpop.f32.mrf.mxu0
      %2341 = vmatprep.mubr.bf16.mxu0 %v1958
      %2342 = vmatmul.mubr.bf16.gmra.mxu0 %v1741
      %v2343 = vpop.f32.mrf.mxu0
      %v2344 = vadd.f32 %v2108, %v2343
      %v2345 = vpop.f32.mrf.mxu0
      %v2346 = vpop.f32.mrf.mxu0
      %v2347 = vadd.f32 %v2111, %v2346
      %v2348 = vpop.f32.mrf.mxu0
      %2349 = vmatprep.mubr.bf16.mxu0 %v1961
      %2350 = vmatmul.mubr.bf16.gmra.mxu0 %v1745
      %v2351 = vpop.f32.mrf.mxu0
      %v2352 = vadd.f32 %v2116, %v2351
      %v2353 = vpop.f32.mrf.mxu0
      %v2354 = vpop.f32.mrf.mxu0
      %v2355 = vadd.f32 %v2119, %v2354
      %v2356 = vpop.f32.mrf.mxu0
      %2357 = vmatprep.mubr.bf16.mxu0 %v1964
      %2358 = vmatmul.mubr.bf16.gmra.mxu0 %v1749
      %v2359 = vpop.f32.mrf.mxu0
      %v2360 = vadd.f32 %v2124, %v2359
      %v2361 = vpop.f32.mrf.mxu0
      %v2362 = vpop.f32.mrf.mxu0
      %v2363 = vadd.f32 %v2127, %v2362
      %v2364 = vpop.f32.mrf.mxu0
      %2365 = vdwg.mxu0
      %v2367 = vshrl.u32 %v957, 16
      %v2369 = vrot.slane %v2367, 4
      %v2370 = vshll.u32 %v957, 16
      %v2372 = vrot.slane %v2370, 5
      %v2373 = vor.u32 %v2369, %v2372
      %v2374 = vrot.slane %v2373, 4
      %v2376 = vshll.u32 %v958, 16
      %v2378 = vrot.slane %v2376, 5
      %v2379 = vsel %vm962, %v2374, %v2378
      %v2380 = vshrl.u32 %v958, 16
      %v2382 = vrot.slane %v2380, 4
      %v2383 = vor.u32 %v2382, %v2378
      %v2384 = vrot.slane %v2383, 4
      %v2386 = vshll.u32 %v959, 16
      %v2388 = vrot.slane %v2386, 5
      %v2389 = vsel %vm962, %v2384, %v2388
      %v2393 = vrot.slane %v957, 5
      %v2394 = vrot.slane %v2393, 4
      %v2395 = vrot.slane %v958, 5
      %v2396 = vsel %vm1397, %v2394, %v2395
      %v2397 = vrot.slane %v2395, 4
      %v2398 = vrot.slane %v959, 5
      %v2399 = vsel %vm1397, %v2397, %v2398
      %v2400 = vunpack.c.l.b16 %v957
      %v2401 = vunpack.c.l.b16 %v958
      %v2402 = vpack.c.b16 %v2401, %v2400
      %v2403 = vunpack.c.l.b16 %v2379
      %v2404 = vunpack.c.l.b16 %v2389
      %v2405 = vpack.c.b16 %v2404, %v2403
      %2406 = vrot.lane.b32.xlu0 %v2405, 64
      %v2407 = vpop.permute.xlu0 %2406
      %v2408 = vunpack.c.l.b16 %v2396
      %v2409 = vunpack.c.l.b16 %v2399
      %v2410 = vpack.c.b16 %v2409, %v2408
      %v2413 = vsel %vm1686, %v2402, %v2407
      %s2415 = scalar_lea.vmem %s4, 192
      %v2416 = vld [vmem:[%s2415] sm:$0xf]
      %v2417 = vld [vmem:[%s2415 + $0x4] sm:$0xf]
      %v2418 = vld [vmem:[%s2415 + $0x8] sm:$0xf]
      %v2419 = vld [vmem:[%s2415 + $0xc] sm:$0xf]
      %v2420 = vld [vmem:[%s2415 + $0x10] sm:$0xf]
      %v2421 = vld [vmem:[%s2415 + $0x14] sm:$0xf]
      %v2422 = vld [vmem:[%s2415 + $0x18] sm:$0xf]
      %v2423 = vld [vmem:[%s2415 + $0x1c] sm:$0xf]
      %v2424 = vld [vmem:[%s2415 + $0x20] sm:$0xf]
      %v2425 = vld [vmem:[%s2415 + $0x24] sm:$0xf]
      %v2426 = vld [vmem:[%s2415 + $0x28] sm:$0xf]
      %v2427 = vld [vmem:[%s2415 + $0x2c] sm:$0xf]
      %v2428 = vld [vmem:[%s2415 + $0x30] sm:$0xf]
      %v2429 = vld [vmem:[%s2415 + $0x34] sm:$0xf]
      %v2430 = vld [vmem:[%s2415 + $0x38] sm:$0xf]
      %v2431 = vld [vmem:[%s2415 + $0x3c] sm:$0xf]
      %v2432 = vld [vmem:[%s2415 + $0x40] sm:$0xf]
      %v2433 = vld [vmem:[%s2415 + $0x44] sm:$0xf]
      %v2434 = vld [vmem:[%s2415 + $0x48] sm:$0xf]
      %v2435 = vld [vmem:[%s2415 + $0x4c] sm:$0xf]
      %v2436 = vld [vmem:[%s2415 + $0x50] sm:$0xf]
      %v2437 = vld [vmem:[%s2415 + $0x54] sm:$0xf]
      %v2438 = vld [vmem:[%s2415 + $0x58] sm:$0xf]
      %v2439 = vld [vmem:[%s2415 + $0x5c] sm:$0xf]
      %v2464 = vunpack.c.l.b16 %v2416
      %v2465 = vunpack.c.l.b16 %v2417
      %v2466 = vunpack.c.l.b16 %v2418
      %v2467 = vunpack.c.l.b16 %v2419
      %v2468 = vunpack.c.l.b16 %v2420
      %v2469 = vunpack.c.l.b16 %v2421
      %v2470 = vunpack.c.l.b16 %v2422
      %v2471 = vunpack.c.l.b16 %v2423
      %v2472 = vunpack.c.l.b16 %v2424
      %v2473 = vunpack.c.l.b16 %v2425
      %v2474 = vunpack.c.l.b16 %v2426
      %v2475 = vunpack.c.l.b16 %v2427
      %v2476 = vunpack.c.l.b16 %v2428
      %v2477 = vunpack.c.l.b16 %v2429
      %v2478 = vunpack.c.l.b16 %v2430
      %v2479 = vunpack.c.l.b16 %v2431
      %v2480 = vunpack.c.l.b16 %v2432
      %v2481 = vunpack.c.l.b16 %v2433
      %v2482 = vunpack.c.l.b16 %v2434
      %v2483 = vunpack.c.l.b16 %v2435
      %v2484 = vunpack.c.l.b16 %v2436
      %v2485 = vunpack.c.l.b16 %v2437
      %v2486 = vunpack.c.l.b16 %v2438
      %v2487 = vunpack.c.l.b16 %v2439
      %v2488 = vpack.c.b16 %v2465, %v2464
      %v2489 = vpack.c.b16 %v2467, %v2466
      %v2490 = vpack.c.b16 %v2469, %v2468
      %v2491 = vpack.c.b16 %v2471, %v2470
      %v2492 = vpack.c.b16 %v2473, %v2472
      %v2493 = vpack.c.b16 %v2475, %v2474
      %v2494 = vpack.c.b16 %v2477, %v2476
      %v2495 = vpack.c.b16 %v2479, %v2478
      %v2496 = vpack.c.b16 %v2481, %v2480
      %v2497 = vpack.c.b16 %v2483, %v2482
      %v2498 = vpack.c.b16 %v2485, %v2484
      %v2499 = vpack.c.b16 %v2487, %v2486
      %v2513 = vsel %vm1686, %v2410, 0
      %2515 = vmatprep.subr.bf16.mxu0 0
      %2516 = vmatpush1.bf16.msra.mxu0 %v2495
      %2517 = vmatprep.subr.bf16.mxu0 0
      %2518 = vmatpush1.bf16.msra.mxu0 %v2494
      %2519 = vmatprep.subr.bf16.mxu0 0
      %2520 = vmatpush1.bf16.msra.mxu0 %v2493
      %2521 = vmatprep.subr.bf16.mxu0 0
      %2522 = vmatpush1.bf16.msra.mxu0 %v2492
      %2523 = vmatprep.subr.bf16.mxu0 0
      %2524 = vmatpush1.bf16.msra.mxu0 %v2491
      %2525 = vmatprep.subr.bf16.mxu0 0
      %2526 = vmatpush1.bf16.msra.mxu0 %v2490
      %2527 = vmatprep.subr.bf16.mxu0 0
      %2528 = vmatpush1.bf16.msra.mxu0 %v2489
      %2529 = vmatprep.subr.bf16.mxu0 0
      %2530 = vmatpush1.bf16.msra.mxu0 %v2488
      %2531 = vmatprep.subr.bf16.mxu0 0
      %2532 = vmatpush2.bf16.msra.mxu0 0
      %2533 = vmatprep.subr.bf16.mxu0 0
      %2534 = vmatpush2.bf16.msra.mxu0 0
      %2535 = vmatprep.subr.bf16.mxu0 0
      %2536 = vmatpush2.bf16.msra.mxu0 0
      %2537 = vmatprep.subr.bf16.mxu0 0
      %2538 = vmatpush2.bf16.msra.mxu0 0
      %2539 = vmatprep.subr.bf16.mxu0 0
      %2540 = vmatpush2.bf16.msra.mxu0 %v2499
      %2541 = vmatprep.subr.bf16.mxu0 0
      %2542 = vmatpush2.bf16.msra.mxu0 %v2498
      %2543 = vmatprep.subr.bf16.mxu0 0
      %2544 = vmatpush2.bf16.msra.mxu0 %v2497
      %2545 = vmatprep.subr.bf16.mxu0 0
      %2546 = vmatpush2.bf16.msra.mxu0 %v2496
      %2547 = vmatprep.mubr.bf16.mxu0 %v1925
      %2548 = vmatmul.mubr.bf16.gmra.mxu0 %v1697
      %v2549 = vpop.f32.mrf.mxu0
      %v2550 = vadd.f32 0.0, %v2549
      %v2551 = vpop.f32.mrf.mxu0
      %v2552 = vpop.f32.mrf.mxu0
      %v2553 = vadd.f32 0.0, %v2552
      %v2554 = vpop.f32.mrf.mxu0
      %2555 = vmatprep.mubr.bf16.mxu0 %v1928
      %2556 = vmatmul.mubr.bf16.gmra.mxu0 %v1701
      %v2557 = vpop.f32.mrf.mxu0
      %v2558 = vadd.f32 0.0, %v2557
      %v2559 = vpop.f32.mrf.mxu0
      %v2560 = vpop.f32.mrf.mxu0
      %v2561 = vadd.f32 0.0, %v2560
      %v2562 = vpop.f32.mrf.mxu0
      %2563 = vmatprep.mubr.bf16.mxu0 %v1931
      %2564 = vmatmul.mubr.bf16.gmra.mxu0 %v1705
      %v2565 = vpop.f32.mrf.mxu0
      %v2566 = vadd.f32 0.0, %v2565
      %v2567 = vpop.f32.mrf.mxu0
      %v2568 = vpop.f32.mrf.mxu0
      %v2569 = vadd.f32 0.0, %v2568
      %v2570 = vpop.f32.mrf.mxu0
      %2571 = vmatprep.mubr.bf16.mxu0 %v1934
      %2572 = vmatmul.mubr.bf16.gmra.mxu0 %v1709
      %v2573 = vpop.f32.mrf.mxu0
      %v2574 = vadd.f32 0.0, %v2573
      %v2575 = vpop.f32.mrf.mxu0
      %v2576 = vpop.f32.mrf.mxu0
      %v2577 = vadd.f32 0.0, %v2576
      %v2578 = vpop.f32.mrf.mxu0
      %2579 = vmatprep.mubr.bf16.mxu0 %v1937
      %2580 = vmatmul.mubr.bf16.gmra.mxu0 %v1713
      %v2581 = vpop.f32.mrf.mxu0
      %v2582 = vadd.f32 0.0, %v2581
      %v2583 = vpop.f32.mrf.mxu0
      %v2584 = vpop.f32.mrf.mxu0
      %v2585 = vadd.f32 0.0, %v2584
      %v2586 = vpop.f32.mrf.mxu0
      %2587 = vmatprep.mubr.bf16.mxu0 %v1940
      %2588 = vmatmul.mubr.bf16.gmra.mxu0 %v1717
      %v2589 = vpop.f32.mrf.mxu0
      %v2590 = vadd.f32 0.0, %v2589
      %v2591 = vpop.f32.mrf.mxu0
      %v2592 = vpop.f32.mrf.mxu0
      %v2593 = vadd.f32 0.0, %v2592
      %v2594 = vpop.f32.mrf.mxu0
      %2595 = vmatprep.mubr.bf16.mxu0 %v1943
      %2596 = vmatmul.mubr.bf16.gmra.mxu0 %v1721
      %v2597 = vpop.f32.mrf.mxu0
      %v2598 = vadd.f32 0.0, %v2597
      %v2599 = vpop.f32.mrf.mxu0
      %v2600 = vpop.f32.mrf.mxu0
      %v2601 = vadd.f32 0.0, %v2600
      %v2602 = vpop.f32.mrf.mxu0
      %2603 = vmatprep.mubr.bf16.mxu0 %v1946
      %2604 = vmatmul.mubr.bf16.gmra.mxu0 %v1725
      %v2605 = vpop.f32.mrf.mxu0
      %v2606 = vadd.f32 0.0, %v2605
      %v2607 = vpop.f32.mrf.mxu0
      %v2608 = vpop.f32.mrf.mxu0
      %v2609 = vadd.f32 0.0, %v2608
      %v2610 = vpop.f32.mrf.mxu0
      %2611 = vmatprep.mubr.bf16.mxu0 %v1949
      %2612 = vmatmul.mubr.bf16.gmra.mxu0 %v1729
      %v2613 = vpop.f32.mrf.mxu0
      %v2614 = vadd.f32 0.0, %v2613
      %v2615 = vpop.f32.mrf.mxu0
      %v2616 = vpop.f32.mrf.mxu0
      %v2617 = vadd.f32 0.0, %v2616
      %v2618 = vpop.f32.mrf.mxu0
      %2619 = vmatprep.mubr.bf16.mxu0 %v1952
      %2620 = vmatmul.mubr.bf16.gmra.mxu0 %v1733
      %v2621 = vpop.f32.mrf.mxu0
      %v2622 = vadd.f32 0.0, %v2621
      %v2623 = vpop.f32.mrf.mxu0
      %v2624 = vpop.f32.mrf.mxu0
      %v2625 = vadd.f32 0.0, %v2624
      %v2626 = vpop.f32.mrf.mxu0
      %2627 = vmatprep.mubr.bf16.mxu0 %v1955
      %2628 = vmatmul.mubr.bf16.gmra.mxu0 %v1737
      %v2629 = vpop.f32.mrf.mxu0
      %v2630 = vadd.f32 0.0, %v2629
      %v2631 = vpop.f32.mrf.mxu0
      %v2632 = vpop.f32.mrf.mxu0
      %v2633 = vadd.f32 0.0, %v2632
      %v2634 = vpop.f32.mrf.mxu0
      %2635 = vmatprep.mubr.bf16.mxu0 %v1958
      %2636 = vmatmul.mubr.bf16.gmra.mxu0 %v1741
      %v2637 = vpop.f32.mrf.mxu0
      %v2638 = vadd.f32 0.0, %v2637
      %v2639 = vpop.f32.mrf.mxu0
      %v2640 = vpop.f32.mrf.mxu0
      %v2641 = vadd.f32 0.0, %v2640
      %v2642 = vpop.f32.mrf.mxu0
      %2643 = vmatprep.mubr.bf16.mxu0 %v1961
      %2644 = vmatmul.mubr.bf16.gmra.mxu0 %v1745
      %v2645 = vpop.f32.mrf.mxu0
      %v2646 = vadd.f32 0.0, %v2645
      %v2647 = vpop.f32.mrf.mxu0
      %v2648 = vpop.f32.mrf.mxu0
      %v2649 = vadd.f32 0.0, %v2648
      %v2650 = vpop.f32.mrf.mxu0
      %2651 = vmatprep.mubr.bf16.mxu0 %v1964
      %2652 = vmatmul.mubr.bf16.gmra.mxu0 %v1749
      %v2653 = vpop.f32.mrf.mxu0
      %v2654 = vadd.f32 0.0, %v2653
      %v2655 = vpop.f32.mrf.mxu0
      %v2656 = vpop.f32.mrf.mxu0
      %v2657 = vadd.f32 0.0, %v2656
      %v2658 = vpop.f32.mrf.mxu0
      %2659 = vmatprep.mubr.bf16.mxu0 %v1967
      %2660 = vmatmul.mubr.bf16.gmra.mxu0 %v1822
      %v2661 = vpop.f32.mrf.mxu0
      %v2662 = vadd.f32 0.0, %v2661
      %v2663 = vpop.f32.mrf.mxu0
      %v2664 = vpop.f32.mrf.mxu0
      %v2665 = vadd.f32 0.0, %v2664
      %v2666 = vpop.f32.mrf.mxu0
      %2667 = vmatprep.mubr.bf16.mxu0 %v2513
      %2668 = vmatmul.mubr.bf16.gmra.mxu0 %v2413
      %v2669 = vpop.f32.mrf.mxu0
      %v2670 = vadd.f32 0.0, %v2669
      %v2671 = vpop.f32.mrf.mxu0
      %v2672 = vpop.f32.mrf.mxu0
      %v2673 = vadd.f32 0.0, %v2672
      %v2674 = vpop.f32.mrf.mxu0
      %2675 = vdwg.mxu0
      %v2676 = vadd.f32 %v2240, %v2550
      %v2677 = vadd.f32 %v2243, %v2553
      %v2678 = vadd.f32 %v2248, %v2558
      %v2679 = vadd.f32 %v2251, %v2561
      %v2680 = vadd.f32 %v2256, %v2566
      %v2681 = vadd.f32 %v2259, %v2569
      %v2682 = vadd.f32 %v2264, %v2574
      %v2683 = vadd.f32 %v2267, %v2577
      %v2684 = vadd.f32 %v2272, %v2582
      %v2685 = vadd.f32 %v2275, %v2585
      %v2686 = vadd.f32 %v2280, %v2590
      %v2687 = vadd.f32 %v2283, %v2593
      %v2688 = vadd.f32 %v2288, %v2598
      %v2689 = vadd.f32 %v2291, %v2601
      %v2690 = vadd.f32 %v2296, %v2606
      %v2691 = vadd.f32 %v2299, %v2609
      %v2692 = vadd.f32 %v2304, %v2614
      %v2693 = vadd.f32 %v2307, %v2617
      %v2694 = vadd.f32 %v2312, %v2622
      %v2695 = vadd.f32 %v2315, %v2625
      %v2696 = vadd.f32 %v2320, %v2630
      %v2697 = vadd.f32 %v2323, %v2633
      %v2698 = vadd.f32 %v2328, %v2638
      %v2699 = vadd.f32 %v2331, %v2641
      %v2700 = vadd.f32 %v2336, %v2646
      %v2701 = vadd.f32 %v2339, %v2649
      %v2702 = vadd.f32 %v2344, %v2654
      %v2703 = vadd.f32 %v2347, %v2657
      %v2704 = vadd.f32 %v2352, %v2662
      %v2705 = vadd.f32 %v2355, %v2665
      %v2706 = vadd.f32 %v2360, %v2670
      %v2707 = vadd.f32 %v2363, %v2673
      %2708 = vmatprep.subr.mxu0 0.0
      %2709 = vmatpush1.msra.mxu0 %v2691
      %2710 = vmatprep.subr.mxu0 0.0
      %2711 = vmatpush1.msra.mxu0 %v2690
      %2712 = vmatprep.subr.mxu0 0.0
      %2713 = vmatpush1.msra.mxu0 %v2689
      %2714 = vmatprep.subr.mxu0 0.0
      %2715 = vmatpush1.msra.mxu0 %v2688
      %2716 = vmatprep.subr.mxu0 0.0
      %2717 = vmatpush1.msra.mxu0 %v2687
      %2718 = vmatprep.subr.mxu0 0.0
      %2719 = vmatpush1.msra.mxu0 %v2686
      %2720 = vmatprep.subr.mxu0 0.0
      %2721 = vmatpush1.msra.mxu0 %v2685
      %2722 = vmatprep.subr.mxu0 0.0
      %2723 = vmatpush1.msra.mxu0 %v2684
      %2724 = vmatprep.subr.mxu0 0.0
      %2725 = vmatpush1.msra.mxu0 %v2683
      %2726 = vmatprep.subr.mxu0 0.0
      %2727 = vmatpush1.msra.mxu0 %v2682
      %2728 = vmatprep.subr.mxu0 0.0
      %2729 = vmatpush1.msra.mxu0 %v2681
      %2730 = vmatprep.subr.mxu0 0.0
      %2731 = vmatpush1.msra.mxu0 %v2680
      %2732 = vmatprep.subr.mxu0 0.0
      %2733 = vmatpush1.msra.mxu0 %v2679
      %2734 = vmatprep.subr.mxu0 0.0
      %2735 = vmatpush1.msra.mxu0 %v2678
      %2736 = vmatprep.subr.mxu0 0.0
      %2737 = vmatpush1.msra.mxu0 %v2677
      %2738 = vmatprep.subr.mxu0 0.0
      %2739 = vmatpush1.msra.mxu0 %v2676
      %2740 = vmatprep.subr.mxu0 0.0
      %2741 = vmatpush2.msra.mxu0 %v2707
      %2742 = vmatprep.subr.mxu0 0.0
      %2743 = vmatpush2.msra.mxu0 %v2706
      %2744 = vmatprep.subr.mxu0 0.0
      %2745 = vmatpush2.msra.mxu0 %v2705
      %2746 = vmatprep.subr.mxu0 0.0
      %2747 = vmatpush2.msra.mxu0 %v2704
      %2748 = vmatprep.subr.mxu0 0.0
      %2749 = vmatpush2.msra.mxu0 %v2703
      %2750 = vmatprep.subr.mxu0 0.0
      %2751 = vmatpush2.msra.mxu0 %v2702
      %2752 = vmatprep.subr.mxu0 0.0
      %2753 = vmatpush2.msra.mxu0 %v2701
      %2754 = vmatprep.subr.mxu0 0.0
      %2755 = vmatpush2.msra.mxu0 %v2700
      %2756 = vmatprep.subr.mxu0 0.0
      %2757 = vmatpush2.msra.mxu0 %v2699
      %2758 = vmatprep.subr.mxu0 0.0
      %2759 = vmatpush2.msra.mxu0 %v2698
      %2760 = vmatprep.subr.mxu0 0.0
      %2761 = vmatpush2.msra.mxu0 %v2697
      %2762 = vmatprep.subr.mxu0 0.0
      %2763 = vmatpush2.msra.mxu0 %v2696
      %2764 = vmatprep.subr.mxu0 0.0
      %2765 = vmatpush2.msra.mxu0 %v2695
      %2766 = vmatprep.subr.mxu0 0.0
      %2767 = vmatpush2.msra.mxu0 %v2694
      %2768 = vmatprep.subr.mxu0 0.0
      %2769 = vmatpush2.msra.mxu0 %v2693
      %2770 = vmatprep.subr.mxu0 0.0
      %2771 = vmatpush2.msra.mxu0 %v2692
      %2772 = vmatprep.mubr.f32.mxu0 1.0
      %2773 = vmatmul.mubr.f32.gmra.mxu0 1.0
      %v2774 = vpop.f32.mrf.mxu0
      %v2775 = vadd.f32 0.0, %v2774
      %v2776 = vpop.f32.mrf.mxu0
      %2777 = vdwg.mxu0
      %v2778 = vmul.f32 %v2676, %v2676
      %v2779 = vmul.f32 %v2677, %v2677
      %v2780 = vmul.f32 %v2678, %v2678
      %v2781 = vmul.f32 %v2679, %v2679
      %v2782 = vmul.f32 %v2680, %v2680
      %v2783 = vmul.f32 %v2681, %v2681
      %v2784 = vmul.f32 %v2682, %v2682
      %v2785 = vmul.f32 %v2683, %v2683
      %v2786 = vmul.f32 %v2684, %v2684
      %v2787 = vmul.f32 %v2685, %v2685
      %v2788 = vmul.f32 %v2686, %v2686
      %v2789 = vmul.f32 %v2687, %v2687
      %v2790 = vmul.f32 %v2688, %v2688
      %v2791 = vmul.f32 %v2689, %v2689
      %v2792 = vmul.f32 %v2690, %v2690
      %v2793 = vmul.f32 %v2691, %v2691
      %v2794 = vmul.f32 %v2692, %v2692
      %v2795 = vmul.f32 %v2693, %v2693
      %v2796 = vmul.f32 %v2694, %v2694
      %v2797 = vmul.f32 %v2695, %v2695
      %v2798 = vmul.f32 %v2696, %v2696
      %v2799 = vmul.f32 %v2697, %v2697
      %v2800 = vmul.f32 %v2698, %v2698
      %v2801 = vmul.f32 %v2699, %v2699
      %v2802 = vmul.f32 %v2700, %v2700
      %v2803 = vmul.f32 %v2701, %v2701
      %v2804 = vmul.f32 %v2702, %v2702
      %v2805 = vmul.f32 %v2703, %v2703
      %v2806 = vmul.f32 %v2704, %v2704
      %v2807 = vmul.f32 %v2705, %v2705
      %v2808 = vmul.f32 %v2706, %v2706
      %v2809 = vmul.f32 %v2707, %v2707
      %2810 = vmatprep.subr.mxu0 0.0
      %2811 = vmatpush1.msra.mxu0 %v2793
      %2812 = vmatprep.subr.mxu0 0.0
      %2813 = vmatpush1.msra.mxu0 %v2792
      %2814 = vmatprep.subr.mxu0 0.0
      %2815 = vmatpush1.msra.mxu0 %v2791
      %2816 = vmatprep.subr.mxu0 0.0
      %2817 = vmatpush1.msra.mxu0 %v2790
      %2818 = vmatprep.subr.mxu0 0.0
      %2819 = vmatpush1.msra.mxu0 %v2789
      %2820 = vmatprep.subr.mxu0 0.0
      %2821 = vmatpush1.msra.mxu0 %v2788
      %2822 = vmatprep.subr.mxu0 0.0
      %2823 = vmatpush1.msra.mxu0 %v2787
      %2824 = vmatprep.subr.mxu0 0.0
      %2825 = vmatpush1.msra.mxu0 %v2786
      %2826 = vmatprep.subr.mxu0 0.0
      %2827 = vmatpush1.msra.mxu0 %v2785
      %2828 = vmatprep.subr.mxu0 0.0
      %2829 = vmatpush1.msra.mxu0 %v2784
      %2830 = vmatprep.subr.mxu0 0.0
      %2831 = vmatpush1.msra.mxu0 %v2783
      %2832 = vmatprep.subr.mxu0 0.0
      %2833 = vmatpush1.msra.mxu0 %v2782
      %2834 = vmatprep.subr.mxu0 0.0
      %2835 = vmatpush1.msra.mxu0 %v2781
      %2836 = vmatprep.subr.mxu0 0.0
      %2837 = vmatpush1.msra.mxu0 %v2780
      %2838 = vmatprep.subr.mxu0 0.0
      %2839 = vmatpush1.msra.mxu0 %v2779
      %2840 = vmatprep.subr.mxu0 0.0
      %2841 = vmatpush1.msra.mxu0 %v2778
      %2842 = vmatprep.subr.mxu0 0.0
      %2843 = vmatpush2.msra.mxu0 %v2809
      %2844 = vmatprep.subr.mxu0 0.0
      %2845 = vmatpush2.msra.mxu0 %v2808
      %2846 = vmatprep.subr.mxu0 0.0
      %2847 = vmatpush2.msra.mxu0 %v2807
      %2848 = vmatprep.subr.mxu0 0.0
      %2849 = vmatpush2.msra.mxu0 %v2806
      %2850 = vmatprep.subr.mxu0 0.0
      %2851 = vmatpush2.msra.mxu0 %v2805
      %2852 = vmatprep.subr.mxu0 0.0
      %2853 = vmatpush2.msra.mxu0 %v2804
      %2854 = vmatprep.subr.mxu0 0.0
      %2855 = vmatpush2.msra.mxu0 %v2803
      %2856 = vmatprep.subr.mxu0 0.0
      %2857 = vmatpush2.msra.mxu0 %v2802
      %2858 = vmatprep.subr.mxu0 0.0
      %2859 = vmatpush2.msra.mxu0 %v2801
      %2860 = vmatprep.subr.mxu0 0.0
      %2861 = vmatpush2.msra.mxu0 %v2800
      %2862 = vmatprep.subr.mxu0 0.0
      %2863 = vmatpush2.msra.mxu0 %v2799
      %2864 = vmatprep.subr.mxu0 0.0
      %2865 = vmatpush2.msra.mxu0 %v2798
      %2866 = vmatprep.subr.mxu0 0.0
      %2867 = vmatpush2.msra.mxu0 %v2797
      %2868 = vmatprep.subr.mxu0 0.0
      %2869 = vmatpush2.msra.mxu0 %v2796
      %2870 = vmatprep.subr.mxu0 0.0
      %2871 = vmatpush2.msra.mxu0 %v2795
      %2872 = vmatprep.subr.mxu0 0.0
      %2873 = vmatpush2.msra.mxu0 %v2794
      %2874 = vmatprep.mubr.f32.mxu0 1.0
      %2875 = vmatmul.mubr.f32.gmra.mxu0 1.0
      %v2876 = vpop.f32.mrf.mxu0
      %v2877 = vadd.f32 0.0, %v2876
      %v2878 = vpop.f32.mrf.mxu0
      %2879 = vdwg.mxu0
      %v2881 = vrot.slane %v2877, 7
      %vm2883 = vcmask 1040384
      %v2884 = vsel %vm2883, %v2775, %v2881
      %vm2885 = vcmask 517120
      %2886 = vst.msk [vmem:[%s262] sm:$0x3] %vm2885, %v2884
      %2887 = vst.msk [vmem:[%s258] sm:$0xff] %vm1686, %v2676
      %2888 = vst.msk [vmem:[%s258 + $0x8] sm:$0xff] %vm1686, %v2677
      %2889 = vst.msk [vmem:[%s258 + $0x10] sm:$0xff] %vm1686, %v2678
      %2890 = vst.msk [vmem:[%s258 + $0x18] sm:$0xff] %vm1686, %v2679
      %2891 = vst.msk [vmem:[%s258 + $0x20] sm:$0xff] %vm1686, %v2680
      %2892 = vst.msk [vmem:[%s258 + $0x28] sm:$0xff] %vm1686, %v2681
      %2893 = vst.msk [vmem:[%s258 + $0x30] sm:$0xff] %vm1686, %v2682
      %2894 = vst.msk [vmem:[%s258 + $0x38] sm:$0xff] %vm1686, %v2683
      %2895 = vst.msk [vmem:[%s258 + $0x40] sm:$0xff] %vm1686, %v2684
      %2896 = vst.msk [vmem:[%s258 + $0x48] sm:$0xff] %vm1686, %v2685
      %2897 = vst.msk [vmem:[%s258 + $0x50] sm:$0xff] %vm1686, %v2686
      %2898 = vst.msk [vmem:[%s258 + $0x58] sm:$0xff] %vm1686, %v2687
      %2899 = vst.msk [vmem:[%s258 + $0x60] sm:$0xff] %vm1686, %v2688
      %2900 = vst.msk [vmem:[%s258 + $0x68] sm:$0xff] %vm1686, %v2689
      %2901 = vst.msk [vmem:[%s258 + $0x70] sm:$0xff] %vm1686, %v2690
      %2902 = vst.msk [vmem:[%s258 + $0x78] sm:$0xff] %vm1686, %v2691
      %2903 = vst.msk [vmem:[%s258 + $0x80] sm:$0xff] %vm1686, %v2692
      %2904 = vst.msk [vmem:[%s258 + $0x88] sm:$0xff] %vm1686, %v2693
      %2905 = vst.msk [vmem:[%s258 + $0x90] sm:$0xff] %vm1686, %v2694
      %2906 = vst.msk [vmem:[%s258 + $0x98] sm:$0xff] %vm1686, %v2695
      %2907 = vst.msk [vmem:[%s258 + $0xa0] sm:$0xff] %vm1686, %v2696
      %2908 = vst.msk [vmem:[%s258 + $0xa8] sm:$0xff] %vm1686, %v2697
      %2909 = vst.msk [vmem:[%s258 + $0xb0] sm:$0xff] %vm1686, %v2698
      %2910 = vst.msk [vmem:[%s258 + $0xb8] sm:$0xff] %vm1686, %v2699
      %2911 = vst.msk [vmem:[%s258 + $0xc0] sm:$0xff] %vm1686, %v2700
      %2912 = vst.msk [vmem:[%s258 + $0xc8] sm:$0xff] %vm1686, %v2701
      %2913 = vst.msk [vmem:[%s258 + $0xd0] sm:$0xff] %vm1686, %v2702
      %2914 = vst.msk [vmem:[%s258 + $0xd8] sm:$0xff] %vm1686, %v2703
      %2915 = vst.msk [vmem:[%s258 + $0xe0] sm:$0xff] %vm1686, %v2704
      %2916 = vst.msk [vmem:[%s258 + $0xe8] sm:$0xff] %vm1686, %v2705
      %2917 = vst.msk [vmem:[%s258 + $0xf0] sm:$0xff] %vm1686, %v2706
      %2918 = vst.msk [vmem:[%s258 + $0xf8] sm:$0xff] %vm1686, %v2707
      %p2919 = scmp.lt.s32.totalorder %s18, 3
      %s2920 = scalar_select %p2919, %s18, 3
      %s2921 = smul.addr %s2920, 32
      %s2922 = smul.addr %s2921, 8
      %s2923 = scalar_lea.vmem %s5, %s2922
      %p2924 = scmp.lt.s32.totalorder %s18, 3
      %s2925 = scalar_select %p2924, %s18, 3
      %s2926 = smul.addr %s2925, 2
      %s2927 = scalar_lea.vmem %s6, %s2926
      // Predicated region
      $region41: #{residual_block_nhwc.4} parent=39 // pred_check
        %p2928 = pneg %p146
      $region42: #{residual_block_nhwc.4} parent=39 // pred_check_branch
        %2930 = sbr.rel (%p2928) target = $region44
      $region43: #{residual_block_nhwc.4} parent=39 // pred_region
        _
      $region44: #{residual_block_nhwc.4} parent=39 // pred_fallthru
        _
      // Predicated region
      $region45: #{residual_block_nhwc.4} parent=39 // pred_check
        %p2931 = pneg %p172
      $region46: #{residual_block_nhwc.4} parent=39 // pred_check_branch
        %2933 = sbr.rel (%p2931) target = $region48
      $region47: #{residual_block_nhwc.4} parent=39 // pred_region
        _
      $region48: #{residual_block_nhwc.4} parent=39 // pred_fallthru
        _
    $region40: #{residual_block_nhwc.4} parent=5 // pred_fallthru
      _
    %p2934 = scmp.le.s32.totalorder 2, %s13
    // Predicated region
    $region49: #{residual_block_nhwc.4} parent=5 // pred_check
      %p2935 = pneg %p2934
    $region50: #{residual_block_nhwc.4} parent=5 // pred_check_branch
      %2937 = sbr.rel (%p2935) target = $region52
    $region51: #{residual_block_nhwc.4} parent=5 // pred_region
      %s2938 = ssub.s32 %s13, 2
      // Predicated region
      $region53: #{residual_block_nhwc.4} parent=51 // pred_check
        %p2939 = pneg %p152
      $region54: #{residual_block_nhwc.4} parent=51 // pred_check_branch
        %2941 = sbr.rel (%p2939) target = $region56
      $region55: #{residual_block_nhwc.4} parent=51 // pred_region
        %p2942 = scmp.lt.s32.totalorder %s19, 3
        %s2943 = scalar_select %p2942, %s19, 3
        %s2944 = smul.addr %s2943, 32
        %s2945 = smul.addr %s2944, 8
        %s2946 = scalar_lea.vmem %s5, %s2945
      $region56: #{residual_block_nhwc.4} parent=51 // pred_fallthru
        _
      // Predicated region
      $region57: #{residual_block_nhwc.4} parent=51 // pred_check
        %p2947 = pneg %p178
      $region58: #{residual_block_nhwc.4} parent=51 // pred_check_branch
        %2949 = sbr.rel (%p2947) target = $region60
      $region59: #{residual_block_nhwc.4} parent=51 // pred_region
        %p2950 = scmp.lt.s32.totalorder %s19, 3
        %s2951 = scalar_select %p2950, %s19, 3
        %s2952 = smul.addr %s2951, 2
        %s2953 = scalar_lea.vmem %s6, %s2952
      $region60: #{residual_block_nhwc.4} parent=51 // pred_fallthru
        _
    $region52: #{residual_block_nhwc.4} parent=5 // pred_fallthru
      _
  $region6: #{residual_block_nhwc.4} parent=0 // loop_footer
    %s17 = sadd.s32 1, %s13
  $region7: #{residual_block_nhwc.4} parent=0 // loop_footer_branch
    %12 = sbr.rel target = $region3
  $region8: #{residual_block_nhwc.4} parent=0 // loop_exit
    _

// kernel: residual_block_nhwc.3
$region0: #{residual_block_nhwc.3}
  #allocation0 [shape = 'u32[]', space=smem, size = 0x4, offset = 0x4, fixed_abs, tag = 'smem constant byte address 0x4 - core index']
  #allocation1 [shape = 'u32[144,128]{1,0:T(1,128)}', space=vmem, size = 0x12000, scoped, tag = 'internal scratch']
  #allocation2 [shape = 'bf16[1,18,18,64]{3,2,1,0:T(8,128)(2,1)}', space=vmem, size = 0x1b000, scoped, tag = 'scratch operand']
  %s0 = inlined_call_operand.vmem [shape: f32[4,16,16,64], index: 0, kind: input, shape index: {}]
  %s1 = inlined_call_operand.vmem [shape: bf16[3,192,64], index: 1, kind: input, shape index: {}]
  %s2 = inlined_call_operand.vmem [shape: f32[4,16,16,64], index: 2, kind: output, shape index: {0}]
  %s3 = inlined_call_operand.vmem [shape: f32[4,2,64], index: 3, kind: output, shape index: {1}]
  %4 = xla_tuple %s2, %s3
  %s5 = sld [smem:[#allocation0]]
  $region49: #{residual_block_nhwc.3} parent=0
    _
  %s7 = ssub.s32 1, %s5
  %s8 = scalar_select 0, %s7, %s5
  loop: start=0, step=1, limit=6
  $region2: #{residual_block_nhwc.3} parent=0 // loop_pre_header
    _
  $region3: #{residual_block_nhwc.3} parent=0 // loop_header
    %s10 = sphi 0, %s14
    %p11 = scmp.ge.s32.totalorder %s10, 6
    %s20 = sphi 0, %s22
    %s23 = sphi 0, %s20
    %s24 = sphi 0, %s23
    %s40 = sphi 0, %s24
    %s44 = sphi 0, %s44
    %s46 = sphi 0, %s44
    %s47 = sphi 0, %s46
    %s61 = sphi 0, %s47
    %s67 = sphi 0, %s69
    %s70 = sphi 0, %s67
    %s71 = sphi 0, %s70
    %s87 = sphi 0, %s71
    %s93 = sphi 0, %s95
    %s96 = sphi 0, %s93
    %s97 = sphi 0, %s96
    %s113 = sphi 0, %s97
  $region4: #{residual_block_nhwc.3} parent=0 // loop_header_branch
    %13 = sbr.rel (%p11) target = $region8
  $region5: #{residual_block_nhwc.3} parent=0 // loop_body
    %s15 = ssub.s32 %s10, 1
    %s16 = ssub.s32 %s10, 2
    %s17 = sadd.s32 %s10, 1
    %s18 = ssub.s32 %s10, %s17
    %p19 = scmp.eq.s32.totalorder %s18, 0
    %s21 = sadd.s32 %s20, 1
    %s22 = scalar_select %p19, %s20, %s21
    %p25 = pneg %p19
    %p26 = scmp.eq.s32.totalorder %s10, 3
    %p27 = por %p25, %p26
    %p28 = scmp.ne.s32.totalorder %s20, %s23
    %p29 = scmp.eq.s32.totalorder %s10, 0
    %p30 = por %p28, %p29
    %p31 = scmp.ne.s32.totalorder %s20, %s23
    %p32 = scmp.eq.s32.totalorder %s15, 3
    %p33 = por %p31, %p32
    %p34 = scmp.ne.s32.totalorder %s23, %s24
    %p35 = scmp.eq.s32.totalorder %s15, 0
    %p36 = por %p34, %p35
    %p37 = scmp.ne.s32.totalorder %s23, %s24
    %p38 = scmp.eq.s32.totalorder %s16, 3
    %p39 = por %p37, %p38
    %p41 = scmp.ne.s32.totalorder %s24, %s40
    %p42 = scmp.eq.s32.totalorder %s16, 0
    %p43 = por %p41, %p42
    %s45 = sadd.s32 %s44, 1
    %p48 = scmp.eq.s32.totalorder %s10, 3
    %p49 = scmp.ne.s32.totalorder %s44, %s46
    %p50 = scmp.eq.s32.totalorder %s10, 0
    %p51 = por %p49, %p50
    %p52 = scmp.ne.s32.totalorder %s44, %s46
    %p53 = scmp.eq.s32.totalorder %s15, 3
    %p54 = por %p52, %p53
    %p55 = scmp.ne.s32.totalorder %s46, %s47
    %p56 = scmp.eq.s32.totalorder %s15, 0
    %p57 = por %p55, %p56
    %p58 = scmp.ne.s32.totalorder %s46, %s47
    %p59 = scmp.eq.s32.totalorder %s16, 3
    %p60 = por %p58, %p59
    %p62 = scmp.ne.s32.totalorder %s47, %s61
    %p63 = scmp.eq.s32.totalorder %s16, 0
    %p64 = por %p62, %p63
    %s65 = ssub.s32 %s10, %s17
    %p66 = scmp.eq.s32.totalorder %s65, 0
    %s68 = sadd.s32 %s67, 1
    %s69 = scalar_select %p66, %s67, %s68
    %p72 = pneg %p66
    %p73 = scmp.eq.s32.totalorder %s10, 3
    %p74 = por %p72, %p73
    %p75 = scmp.ne.s32.totalorder %s67, %s70
    %p76 = scmp.eq.s32.totalorder %s10, 0
    %p77 = por %p75, %p76
    %p78 = scmp.ne.s32.totalorder %s67, %s70
    %p79 = scmp.eq.s32.totalorder %s15, 3
    %p80 = por %p78, %p79
    %p81 = scmp.ne.s32.totalorder %s70, %s71
    %p82 = scmp.eq.s32.totalorder %s15, 0
    %p83 = por %p81, %p82
    %p84 = scmp.ne.s32.totalorder %s70, %s71
    %p85 = scmp.eq.s32.totalorder %s16, 3
    %p86 = por %p84, %p85
    %p88 = scmp.ne.s32.totalorder %s71, %s87
    %p89 = scmp.eq.s32.totalorder %s16, 0
    %p90 = por %p88, %p89
    %s91 = ssub.s32 %s10, %s17
    %p92 = scmp.eq.s32.totalorder %s91, 0
    %s94 = sadd.s32 %s93, 1
    %s95 = scalar_select %p92, %s93, %s94
    %p98 = pneg %p92
    %p99 = scmp.eq.s32.totalorder %s10, 3
    %p100 = por %p98, %p99
    %p101 = scmp.ne.s32.totalorder %s93, %s96
    %p102 = scmp.eq.s32.totalorder %s10, 0
    %p103 = por %p101, %p102
    %p104 = scmp.ne.s32.totalorder %s93, %s96
    %p105 = scmp.eq.s32.totalorder %s15, 3
    %p106 = por %p104, %p105
    %p107 = scmp.ne.s32.totalorder %s96, %s97
    %p108 = scmp.eq.s32.totalorder %s15, 0
    %p109 = por %p107, %p108
    %p110 = scmp.ne.s32.totalorder %s96, %s97
    %p111 = scmp.eq.s32.totalorder %s16, 3
    %p112 = por %p110, %p111
    %p114 = scmp.ne.s32.totalorder %s97, %s113
    %p115 = scmp.eq.s32.totalorder %s16, 0
    %p116 = por %p114, %p115
    %p117 = scmp.le.s32.totalorder 1, %s10
    %p118 = scmp.lt.s32.totalorder %s10, 5
    %p119 = pnand %p117, %p118
    %p120 = pneg %p119
    // Predicated region
    $region9: #{residual_block_nhwc.3} parent=5 // pred_check
      _
    $region10: #{residual_block_nhwc.3} parent=5 // pred_check_branch
      %122 = sbr.rel (%p119) target = $region12
    $region11: #{residual_block_nhwc.3} parent=5 // pred_region
      %s123 = ssub.s32 %s10, 1
      // Predicated region
      $region13: #{residual_block_nhwc.3} parent=11 // pred_check
        %p124 = pneg %p57
      $region14: #{residual_block_nhwc.3} parent=11 // pred_check_branch
        %126 = sbr.rel (%p124) target = $region16
      $region15: #{residual_block_nhwc.3} parent=11 // pred_region
        _
      $region16: #{residual_block_nhwc.3} parent=11 // pred_fallthru
        _
    $region12: #{residual_block_nhwc.3} parent=5 // pred_fallthru
      _
    %p127 = scmp.lt.s32.totalorder %s10, 4
    // Predicated region
    $region17: #{residual_block_nhwc.3} parent=5 // pred_check
      %p128 = pneg %p127
    $region18: #{residual_block_nhwc.3} parent=5 // pred_check_branch
      %130 = sbr.rel (%p128) target = $region20
    $region19: #{residual_block_nhwc.3} parent=5 // pred_region
      // Predicated region
      $region21: #{residual_block_nhwc.3} parent=19 // pred_check
        %p131 = pneg %p30
      $region22: #{residual_block_nhwc.3} parent=19 // pred_check_branch
        %133 = sbr.rel (%p131) target = $region24
      $region23: #{residual_block_nhwc.3} parent=19 // pred_region
        %p134 = scmp.lt.s32.totalorder %s10, 3
        %s135 = scalar_select %p134, %s10, 3
        %s136 = smul.addr %s135, 32
        %s137 = smul.addr %s136, 8
        %s138 = scalar_lea.vmem %s0, %s137
      $region24: #{residual_block_nhwc.3} parent=19 // pred_fallthru
        _
    $region20: #{residual_block_nhwc.3} parent=5 // pred_fallthru
      _
    %p139 = scmp.le.s32.totalorder 1, %s10
    %p140 = scmp.lt.s32.totalorder %s10, 5
    %p141 = pnand %p139, %p140
    %p142 = pneg %p141
    // Predicated region
    $region25: #{residual_block_nhwc.3} parent=5 // pred_check
      _
    $region26: #{residual_block_nhwc.3} parent=5 // pred_check_branch
      %144 = sbr.rel (%p141) target = $region28
    $region27: #{residual_block_nhwc.3} parent=5 // pred_region
      %s145 = ssub.s32 %s10, 1
      %p146 = scmp.lt.s32.totalorder %s15, 3
      %s147 = scalar_select %p146, %s15, 3
      %s148 = smul.addr %s147, 32
      %s149 = smul.addr %s148, 8
      %s150 = scalar_lea.vmem %s0, %s149
      %p151 = pneg %p36
      %p152 = pneg %p33
      %p153 = pneg %p57
      %p154 = pneg %p54
      %p155 = pneg %p83
      %p156 = pneg %p80
      %p157 = scmp.lt.s32.totalorder %s15, 3
      %s158 = scalar_select %p157, %s15, 3
      %s159 = smul.addr %s158, 32
      %s160 = smul.addr %s159, 8
      %s161 = scalar_lea.vmem %s2, %s160
      %p162 = pneg %p109
      %p163 = pneg %p106
      %p164 = scmp.lt.s32.totalorder %s15, 3
      %s165 = scalar_select %p164, %s15, 3
      %s166 = smul.addr %s165, 2
      %s167 = scalar_lea.vmem %s3, %s166
      %p168 = scmp.lt.s32.totalorder %s15, 3
      %s169 = scalar_select %p168, %s15, 3
      %s170 = smul.addr %s169, 32
      %s171 = smul.addr %s170, 8
      %s172 = scalar_lea.vmem %s0, %s171
      %p173 = scmp.lt.s32.totalorder %s15, 3
      %s174 = scalar_select %p173, %s15, 3
      %s175 = smul.addr %s174, 32
      %s176 = smul.addr %s175, 8
      %s177 = scalar_lea.vmem %s2, %s176
      %p178 = scmp.lt.s32.totalorder %s15, 3
      %s179 = scalar_select %p178, %s15, 3
      %s180 = smul.addr %s179, 2
      %s181 = scalar_lea.vmem %s3, %s180
      %v183 = vld [vmem:[%s172] sm:$0xff]
      %v184 = vld [vmem:[%s172 + $0x8] sm:$0xff]
      %v185 = vld [vmem:[%s172 + $0x10] sm:$0xff]
      %v186 = vld [vmem:[%s172 + $0x18] sm:$0xff]
      %v187 = vld [vmem:[%s172 + $0x20] sm:$0xff]
      %v188 = vld [vmem:[%s172 + $0x28] sm:$0xff]
      %v189 = vld [vmem:[%s172 + $0x30] sm:$0xff]
      %v190 = vld [vmem:[%s172 + $0x38] sm:$0xff]
      %v191 = vld [vmem:[%s172 + $0x40] sm:$0xff]
      %v192 = vld [vmem:[%s172 + $0x48] sm:$0xff]
      %v193 = vld [vmem:[%s172 + $0x50] sm:$0xff]
      %v194 = vld [vmem:[%s172 + $0x58] sm:$0xff]
      %v195 = vld [vmem:[%s172 + $0x60] sm:$0xff]
      %v196 = vld [vmem:[%s172 + $0x68] sm:$0xff]
      %v197 = vld [vmem:[%s172 + $0x70] sm:$0xff]
      %v198 = vld [vmem:[%s172 + $0x78] sm:$0xff]
      %v199 = vld [vmem:[%s172 + $0x80] sm:$0xff]
      %v200 = vld [vmem:[%s172 + $0x88] sm:$0xff]
      %v201 = vld [vmem:[%s172 + $0x90] sm:$0xff]
      %v202 = vld [vmem:[%s172 + $0x98] sm:$0xff]
      %v203 = vld [vmem:[%s172 + $0xa0] sm:$0xff]
      %v204 = vld [vmem:[%s172 + $0xa8] sm:$0xff]
      %v205 = vld [vmem:[%s172 + $0xb0] sm:$0xff]
      %v206 = vld [vmem:[%s172 + $0xb8] sm:$0xff]
      %v207 = vld [vmem:[%s172 + $0xc0] sm:$0xff]
      %v208 = vld [vmem:[%s172 + $0xc8] sm:$0xff]
      %v209 = vld [vmem:[%s172 + $0xd0] sm:$0xff]
      %v210 = vld [vmem:[%s172 + $0xd8] sm:$0xff]
      %v211 = vld [vmem:[%s172 + $0xe0] sm:$0xff]
      %v212 = vld [vmem:[%s172 + $0xe8] sm:$0xff]
      %v213 = vld [vmem:[%s172 + $0xf0] sm:$0xff]
      %v214 = vld [vmem:[%s172 + $0xf8] sm:$0xff]
      %v215 = vpack.c.bf16 %v184, %v183
      %v216 = vpack.c.bf16 %v186, %v185
      %v217 = vpack.c.bf16 %v188, %v187
      %v218 = vpack.c.bf16 %v190, %v189
      %v219 = vpack.c.bf16 %v192, %v191
      %v220 = vpack.c.bf16 %v194, %v193
      %v221 = vpack.c.bf16 %v196, %v195
      %v222 = vpack.c.bf16 %v198, %v197
      %v223 = vpack.c.bf16 %v200, %v199
      %v224 = vpack.c.bf16 %v202, %v201
      %v225 = vpack.c.bf16 %v204, %v203
      %v226 = vpack.c.bf16 %v206, %v205
      %v227 = vpack.c.bf16 %v208, %v207
      %v228 = vpack.c.bf16 %v210, %v209
      %v229 = vpack.c.bf16 %v212, %v211
      %v230 = vpack.c.bf16 %v214, %v213
      %vm231 = vcmask 519168
      %232 = vst.msk [vmem:[#allocation2] sm:$0xf] %vm231, 0
      %233 = vst.msk [vmem:[#allocation2 + $0x4] sm:$0xf] %vm231, 0
      %vm234 = vcmask 516096
      %235 = vst.msk [vmem:[#allocation2 + $0x8] sm:$0x1] %vm234, 0
      %s236 = scalar_lea.vmem [#allocation2], 204
      %237 = vst.msk [vmem:[%s236] sm:$0xf] %vm231, 0
      %238 = vst.msk [vmem:[%s236 + $0x4] sm:$0xf] %vm231, 0
      %239 = vst.msk [vmem:[%s236 + $0x8] sm:$0x1] %vm234, 0
      %v241 = vshrl.u32 %v215, 16
      %v243 = vrot.slane %v241, 7
      %v244 = vshll.u32 %v215, 16
      %v246 = vor.u32 %v243, %v244
      %v248 = vshrl.u32 %v216, 16
      %v250 = vrot.slane %v248, 7
      %v251 = vshll.u32 %v216, 16
      %v253 = vor.u32 %v250, %v251
      %v255 = vshrl.u32 %v217, 16
      %v257 = vrot.slane %v255, 7
      %v258 = vshll.u32 %v217, 16
      %v260 = vor.u32 %v257, %v258
      %v262 = vshrl.u32 %v218, 16
      %v264 = vrot.slane %v262, 7
      %v265 = vshll.u32 %v218, 16
      %v267 = vor.u32 %v264, %v265
      %v269 = vshrl.u32 %v219, 16
      %v271 = vrot.slane %v269, 7
      %v272 = vshll.u32 %v219, 16
      %v274 = vor.u32 %v271, %v272
      %v276 = vshrl.u32 %v220, 16
      %v278 = vrot.slane %v276, 7
      %v279 = vshll.u32 %v220, 16
      %v281 = vor.u32 %v278, %v279
      %v283 = vshrl.u32 %v221, 16
      %v285 = vrot.slane %v283, 7
      %v286 = vshll.u32 %v221, 16
      %v288 = vor.u32 %v285, %v286
      %v290 = vshrl.u32 %v222, 16
      %v292 = vrot.slane %v290, 7
      %v293 = vshll.u32 %v222, 16
      %v295 = vor.u32 %v292, %v293
      %v297 = vshrl.u32 %v223, 16
      %v299 = vrot.slane %v297, 7
      %v300 = vshll.u32 %v223, 16
      %v302 = vor.u32 %v299, %v300
      %v304 = vshrl.u32 %v224, 16
      %v306 = vrot.slane %v304, 7
      %v307 = vshll.u32 %v224, 16
      %v309 = vor.u32 %v306, %v307
      %v311 = vshrl.u32 %v225, 16
      %v313 = vrot.slane %v311, 7
      %v314 = vshll.u32 %v225, 16
      %v316 = vor.u32 %v313, %v314
      %v318 = vshrl.u32 %v226, 16
      %v320 = vrot.slane %v318, 7
      %v321 = vshll.u32 %v226, 16
      %v323 = vor.u32 %v320, %v321
      %v325 = vshrl.u32 %v227, 16
      %v327 = vrot.slane %v325, 7
      %v328 = vshll.u32 %v227, 16
      %v330 = vor.u32 %v327, %v328
      %v332 = vshrl.u32 %v228, 16
      %v334 = vrot.slane %v332, 7
      %v335 = vshll.u32 %v228, 16
      %v337 = vor.u32 %v334, %v335
      %v339 = vshrl.u32 %v229, 16
      %v341 = vrot.slane %v339, 7
      %v342 = vshll.u32 %v229, 16
      %v344 = vor.u32 %v341, %v342
      %v346 = vshrl.u32 %v230, 16
      %v348 = vrot.slane %v346, 7
      %v349 = vshll.u32 %v230, 16
      %v351 = vor.u32 %v348, %v349
      %vm384 = vcmask 1040384
      %vm385 = vsmask.f32 256
      %vm386 = vmand %vm384, %vm385
      %v387 = vsel %vm386, 0, %v246
      %v388 = vsel %vm386, 0, %v253
      %v389 = vsel %vm386, 0, %v260
      %v390 = vsel %vm386, 0, %v267
      %v391 = vsel %vm386, 0, %v274
      %v392 = vsel %vm386, 0, %v281
      %v393 = vsel %vm386, 0, %v288
      %v394 = vsel %vm386, 0, %v295
      %v395 = vsel %vm386, 0, %v302
      %v396 = vsel %vm386, 0, %v309
      %v397 = vsel %vm386, 0, %v316
      %v398 = vsel %vm386, 0, %v323
      %v399 = vsel %vm386, 0, %v330
      %v400 = vsel %vm386, 0, %v337
      %v401 = vsel %vm386, 0, %v344
      %v402 = vsel %vm386, 0, %v351
      %v403 = vsel %vm386, %v243, 0
      %v404 = vsel %vm386, %v250, 0
      %v405 = vsel %vm386, %v257, 0
      %v406 = vsel %vm386, %v264, 0
      %v407 = vsel %vm386, %v271, 0
      %v408 = vsel %vm386, %v278, 0
      %v409 = vsel %vm386, %v285, 0
      %v410 = vsel %vm386, %v292, 0
      %v411 = vsel %vm386, %v299, 0
      %v412 = vsel %vm386, %v306, 0
      %v413 = vsel %vm386, %v313, 0
      %v414 = vsel %vm386, %v320, 0
      %v415 = vsel %vm386, %v327, 0
      %v416 = vsel %vm386, %v334, 0
      %v417 = vsel %vm386, %v341, 0
      %v418 = vsel %vm386, %v348, 0
      %v451 = vunpack.c.l.b16 %v387
      %v452 = vunpack.c.h.b16 %v387
      %v453 = vunpack.c.l.b16 %v403
      %v454 = vunpack.c.l.b16 %v388
      %v455 = vunpack.c.h.b16 %v388
      %v456 = vunpack.c.l.b16 %v404
      %v457 = vunpack.c.l.b16 %v389
      %v458 = vunpack.c.h.b16 %v389
      %v459 = vunpack.c.l.b16 %v405
      %v460 = vunpack.c.l.b16 %v390
      %v461 = vunpack.c.h.b16 %v390
      %v462 = vunpack.c.l.b16 %v406
      %v463 = vunpack.c.l.b16 %v391
      %v464 = vunpack.c.h.b16 %v391
      %v465 = vunpack.c.l.b16 %v407
      %v466 = vunpack.c.l.b16 %v392
      %v467 = vunpack.c.h.b16 %v392
      %v468 = vunpack.c.l.b16 %v408
      %v469 = vunpack.c.l.b16 %v393
      %v470 = vunpack.c.h.b16 %v393
      %v471 = vunpack.c.l.b16 %v409
      %v472 = vunpack.c.l.b16 %v394
      %v473 = vunpack.c.h.b16 %v394
      %v474 = vunpack.c.l.b16 %v410
      %v475 = vunpack.c.l.b16 %v395
      %v476 = vunpack.c.h.b16 %v395
      %v477 = vunpack.c.l.b16 %v411
      %v478 = vunpack.c.l.b16 %v396
      %v479 = vunpack.c.h.b16 %v396
      %v480 = vunpack.c.l.b16 %v412
      %v481 = vunpack.c.l.b16 %v397
      %v482 = vunpack.c.h.b16 %v397
      %v483 = vunpack.c.l.b16 %v413
      %v484 = vunpack.c.l.b16 %v398
      %v485 = vunpack.c.h.b16 %v398
      %v486 = vunpack.c.l.b16 %v414
      %v487 = vunpack.c.l.b16 %v399
      %v488 = vunpack.c.h.b16 %v399
      %v489 = vunpack.c.l.b16 %v415
      %v490 = vunpack.c.l.b16 %v400
      %v491 = vunpack.c.h.b16 %v400
      %v492 = vunpack.c.l.b16 %v416
      %v493 = vunpack.c.l.b16 %v401
      %v494 = vunpack.c.h.b16 %v401
      %v495 = vunpack.c.l.b16 %v417
      %v496 = vunpack.c.l.b16 %v402
      %v497 = vunpack.c.h.b16 %v402
      %v498 = vunpack.c.l.b16 %v418
      %v499 = vpack.c.b16 %v451, %v451
      %v500 = vpack.c.b16 %v452, %v452
      %v501 = vpack.c.b16 %v453, %v453
      %v502 = vpack.c.b16 %v454, %v454
      %v503 = vpack.c.b16 %v455, %v455
      %v504 = vpack.c.b16 %v456, %v456
      %v505 = vpack.c.b16 %v457, %v457
      %v506 = vpack.c.b16 %v458, %v458
      %v507 = vpack.c.b16 %v459, %v459
      %v508 = vpack.c.b16 %v460, %v460
      %v509 = vpack.c.b16 %v461, %v461
      %v510 = vpack.c.b16 %v462, %v462
      %v511 = vpack.c.b16 %v463, %v463
      %v512 = vpack.c.b16 %v464, %v464
      %v513 = vpack.c.b16 %v465, %v465
      %v514 = vpack.c.b16 %v466, %v466
      %v515 = vpack.c.b16 %v467, %v467
      %v516 = vpack.c.b16 %v468, %v468
      %v517 = vpack.c.b16 %v469, %v469
      %v518 = vpack.c.b16 %v470, %v470
      %v519 = vpack.c.b16 %v471, %v471
      %v520 = vpack.c.b16 %v472, %v472
      %v521 = vpack.c.b16 %v473, %v473
      %v522 = vpack.c.b16 %v474, %v474
      %v523 = vpack.c.b16 %v475, %v475
      %v524 = vpack.c.b16 %v476, %v476
      %v525 = vpack.c.b16 %v477, %v477
      %v526 = vpack.c.b16 %v478, %v478
      %v527 = vpack.c.b16 %v479, %v479
      %v528 = vpack.c.b16 %v480, %v480
      %v529 = vpack.c.b16 %v481, %v481
      %v530 = vpack.c.b16 %v482, %v482
      %v531 = vpack.c.b16 %v483, %v483
      %v532 = vpack.c.b16 %v484, %v484
      %v533 = vpack.c.b16 %v485, %v485
      %v534 = vpack.c.b16 %v486, %v486
      %v535 = vpack.c.b16 %v487, %v487
      %v536 = vpack.c.b16 %v488, %v488
      %v537 = vpack.c.b16 %v489, %v489
      %v538 = vpack.c.b16 %v490, %v490
      %v539 = vpack.c.b16 %v491, %v491
      %v540 = vpack.c.b16 %v492, %v492
      %v541 = vpack.c.b16 %v493, %v493
      %v542 = vpack.c.b16 %v494, %v494
      %v543 = vpack.c.b16 %v495, %v495
      %v544 = vpack.c.b16 %v496, %v496
      %v545 = vpack.c.b16 %v497, %v497
      %v546 = vpack.c.b16 %v498, %v498
      %s595 = scalar_lea.vmem [#allocation2], 12
      %596 = vst.msk [vmem:[%s595] sm:$0xf] %vm231, %v499
      %597 = vst.msk [vmem:[%s595 + $0x4] sm:$0xf] %vm231, %v500
      %598 = vst.msk [vmem:[%s595 + $0x8] sm:$0x1] %vm234, %v501
      %599 = vst.msk [vmem:[%s595 + $0xc] sm:$0xf] %vm231, %v502
      %600 = vst.msk [vmem:[%s595 + $0x10] sm:$0xf] %vm231, %v503
      %601 = vst.msk [vmem:[%s595 + $0x14] sm:$0x1] %vm234, %v504
      %602 = vst.msk [vmem:[%s595 + $0x18] sm:$0xf] %vm231, %v505
      %603 = vst.msk [vmem:[%s595 + $0x1c] sm:$0xf] %vm231, %v506
      %604 = vst.msk [vmem:[%s595 + $0x20] sm:$0x1] %vm234, %v507
      %605 = vst.msk [vmem:[%s595 + $0x24] sm:$0xf] %vm231, %v508
      %606 = vst.msk [vmem:[%s595 + $0x28] sm:$0xf] %vm231, %v509
      %607 = vst.msk [vmem:[%s595 + $0x2c] sm:$0x1] %vm234, %v510
      %608 = vst.msk [vmem:[%s595 + $0x30] sm:$0xf] %vm231, %v511
      %609 = vst.msk [vmem:[%s595 + $0x34] sm:$0xf] %vm231, %v512
      %610 = vst.msk [vmem:[%s595 + $0x38] sm:$0x1] %vm234, %v513
      %611 = vst.msk [vmem:[%s595 + $0x3c] sm:$0xf] %vm231, %v514
      %612 = vst.msk [vmem:[%s595 + $0x40] sm:$0xf] %vm231, %v515
      %613 = vst.msk [vmem:[%s595 + $0x44] sm:$0x1] %vm234, %v516
      %614 = vst.msk [vmem:[%s595 + $0x48] sm:$0xf] %vm231, %v517
      %615 = vst.msk [vmem:[%s595 + $0x4c] sm:$0xf] %vm231, %v518
      %616 = vst.msk [vmem:[%s595 + $0x50] sm:$0x1] %vm234, %v519
      %617 = vst.msk [vmem:[%s595 + $0x54] sm:$0xf] %vm231, %v520
      %618 = vst.msk [vmem:[%s595 + $0x58] sm:$0xf] %vm231, %v521
      %619 = vst.msk [vmem:[%s595 + $0x5c] sm:$0x1] %vm234, %v522
      %620 = vst.msk [vmem:[%s595 + $0x60] sm:$0xf] %vm231, %v523
      %621 = vst.msk [vmem:[%s595 + $0x64] sm:$0xf] %vm231, %v524
      %622 = vst.msk [vmem:[%s595 + $0x68] sm:$0x1] %vm234, %v525
      %623 = vst.msk [vmem:[%s595 + $0x6c] sm:$0xf] %vm231, %v526
      %624 = vst.msk [vmem:[%s595 + $0x70] sm:$0xf] %vm231, %v527
      %625 = vst.msk [vmem:[%s595 + $0x74] sm:$0x1] %vm234, %v528
      %626 = vst.msk [vmem:[%s595 + $0x78] sm:$0xf] %vm231, %v529
      %627 = vst.msk [vmem:[%s595 + $0x7c] sm:$0xf] %vm231, %v530
      %628 = vst.msk [vmem:[%s595 + $0x80] sm:$0x1] %vm234, %v531
      %629 = vst.msk [vmem:[%s595 + $0x84] sm:$0xf] %vm231, %v532
      %630 = vst.msk [vmem:[%s595 + $0x88] sm:$0xf] %vm231, %v533
      %631 = vst.msk [vmem:[%s595 + $0x8c] sm:$0x1] %vm234, %v534
      %632 = vst.msk [vmem:[%s595 + $0x90] sm:$0xf] %vm231, %v535
      %633 = vst.msk [vmem:[%s595 + $0x94] sm:$0xf] %vm231, %v536
      %634 = vst.msk [vmem:[%s595 + $0x98] sm:$0x1] %vm234, %v537
      %635 = vst.msk [vmem:[%s595 + $0x9c] sm:$0xf] %vm231, %v538
      %636 = vst.msk [vmem:[%s595 + $0xa0] sm:$0xf] %vm231, %v539
      %637 = vst.msk [vmem:[%s595 + $0xa4] sm:$0x1] %vm234, %v540
      %638 = vst.msk [vmem:[%s595 + $0xa8] sm:$0xf] %vm231, %v541
      %639 = vst.msk [vmem:[%s595 + $0xac] sm:$0xf] %vm231, %v542
      %640 = vst.msk [vmem:[%s595 + $0xb0] sm:$0x1] %vm234, %v543
      %641 = vst.msk [vmem:[%s595 + $0xb4] sm:$0xf] %vm231, %v544
      %642 = vst.msk [vmem:[%s595 + $0xb8] sm:$0xf] %vm231, %v545
      %643 = vst.msk [vmem:[%s595 + $0xbc] sm:$0x1] %vm234, %v546
      %v644 = vld [vmem:[#allocation2] sm:$0xf]
      %v645 = vld [vmem:[#allocation2 + $0x4] sm:$0xf]
      %v646 = vld [vmem:[#allocation2 + $0x8] sm:$0x1]
      %v647 = vld [vmem:[#allocation2 + $0xc] sm:$0xf]
      %v648 = vld [vmem:[#allocation2 + $0x10] sm:$0xf]
      %v649 = vld [vmem:[#allocation2 + $0x14] sm:$0x1]
      %v650 = vld [vmem:[#allocation2 + $0x18] sm:$0xf]
      %v651 = vld [vmem:[#allocation2 + $0x1c] sm:$0xf]
      %v652 = vld [vmem:[#allocation2 + $0x20] sm:$0x1]
      %v653 = vld [vmem:[#allocation2 + $0x24] sm:$0xf]
      %v654 = vld [vmem:[#allocation2 + $0x28] sm:$0xf]
      %v655 = vld [vmem:[#allocation2 + $0x2c] sm:$0x1]
      %v656 = vld [vmem:[#allocation2 + $0x30] sm:$0xf]
      %v657 = vld [vmem:[#allocation2 + $0x34] sm:$0xf]
      %v658 = vld [vmem:[#allocation2 + $0x38] sm:$0x1]
      %v659 = vld [vmem:[#allocation2 + $0x3c] sm:$0xf]
      %v660 = vld [vmem:[#allocation2 + $0x40] sm:$0xf]
      %v661 = vld [vmem:[#allocation2 + $0x44] sm:$0x1]
      %v662 = vld [vmem:[#allocation2 + $0x48] sm:$0xf]
      %v663 = vld [vmem:[#allocation2 + $0x4c] sm:$0xf]
      %v664 = vld [vmem:[#allocation2 + $0x50] sm:$0x1]
      %v665 = vld [vmem:[#allocation2 + $0x54] sm:$0xf]
      %v666 = vld [vmem:[#allocation2 + $0x58] sm:$0xf]
      %v667 = vld [vmem:[#allocation2 + $0x5c] sm:$0x1]
      %v668 = vld [vmem:[#allocation2 + $0x60] sm:$0xf]
      %v669 = vld [vmem:[#allocation2 + $0x64] sm:$0xf]
      %v670 = vld [vmem:[#allocation2 + $0x68] sm:$0x1]
      %v671 = vld [vmem:[#allocation2 + $0x6c] sm:$0xf]
      %v672 = vld [vmem:[#allocation2 + $0x70] sm:$0xf]
      %v673 = vld [vmem:[#allocation2 + $0x74] sm:$0x1]
      %v674 = vld [vmem:[#allocation2 + $0x78] sm:$0xf]
      %v675 = vld [vmem:[#allocation2 + $0x7c] sm:$0xf]
      %v676 = vld [vmem:[#allocation2 + $0x80] sm:$0x1]
      %v677 = vld [vmem:[#allocation2 + $0x84] sm:$0xf]
      %v678 = vld [vmem:[#allocation2 + $0x88] sm:$0xf]
      %v679 = vld [vmem:[#allocation2 + $0x8c] sm:$0x1]
      %v680 = vld [vmem:[#allocation2 + $0x90] sm:$0xf]
      %v681 = vld [vmem:[#allocation2 + $0x94] sm:$0xf]
      %v682 = vld [vmem:[#allocation2 + $0x98] sm:$0x1]
      %v683 = vld [vmem:[#allocation2 + $0x9c] sm:$0xf]
      %v684 = vld [vmem:[#allocation2 + $0xa0] sm:$0xf]
      %v685 = vld [vmem:[#allocation2 + $0xa4] sm:$0x1]
      %v686 = vld [vmem:[#allocation2 + $0xa8] sm:$0xf]
      %v687 = vld [vmem:[#allocation2 + $0xac] sm:$0xf]
      %v688 = vld [vmem:[#allocation2 + $0xb0] sm:$0x1]
      %v689 = vld [vmem:[#allocation2 + $0xb4] sm:$0xf]
      %v690 = vld [vmem:[#allocation2 + $0xb8] sm:$0xf]
      %v691 = vld [vmem:[#allocation2 + $0xbc] sm:$0x1]
      %v692 = vld [vmem:[#allocation2 + $0xc0] sm:$0xf]
      %v693 = vld [vmem:[#allocation2 + $0xc4] sm:$0xf]
      %v694 = vld [vmem:[#allocation2 + $0xc8] sm:$0x1]
      %v695 = vld [vmem:[#allocation2 + $0xcc] sm:$0xf]
      %v696 = vld [vmem:[#allocation2 + $0xd0] sm:$0xf]
      %v697 = vld [vmem:[#allocation2 + $0xd4] sm:$0x1]
      %vm698 = vsmask.f32 3328
      %vm699 = vsmask.f32 7440
      %vm700 = vmor %vm698, %vm699
      %v702 = vshrl.u32 %v644, 16
      %v704 = vrot.slane %v702, 4
      %v705 = vshll.u32 %v644, 16
      %v707 = vrot.slane %v705, 5
      %v708 = vor.u32 %v704, %v707
      %v709 = vrot.slane %v708, 4
      %v711 = vshll.u32 %v645, 16
      %v713 = vrot.slane %v711, 5
      %v714 = vsel %vm700, %v709, %v713
      %v715 = vshrl.u32 %v645, 16
      %v717 = vrot.slane %v715, 4
      %v718 = vor.u32 %v717, %v713
      %v719 = vrot.slane %v718, 4
      %v721 = vshll.u32 %v646, 16
      %v723 = vrot.slane %v721, 5
      %v724 = vsel %vm700, %v719, %v723
      %v726 = vshrl.u32 %v647, 16
      %v728 = vrot.slane %v726, 4
      %v729 = vshll.u32 %v647, 16
      %v731 = vrot.slane %v729, 5
      %v732 = vor.u32 %v728, %v731
      %v733 = vrot.slane %v732, 4
      %v735 = vshll.u32 %v648, 16
      %v737 = vrot.slane %v735, 5
      %v738 = vsel %vm700, %v733, %v737
      %v739 = vshrl.u32 %v648, 16
      %v741 = vrot.slane %v739, 4
      %v742 = vor.u32 %v741, %v737
      %v743 = vrot.slane %v742, 4
      %v745 = vshll.u32 %v649, 16
      %v747 = vrot.slane %v745, 5
      %v748 = vsel %vm700, %v743, %v747
      %v750 = vshrl.u32 %v650, 16
      %v752 = vrot.slane %v750, 4
      %v753 = vshll.u32 %v650, 16
      %v755 = vrot.slane %v753, 5
      %v756 = vor.u32 %v752, %v755
      %v757 = vrot.slane %v756, 4
      %v759 = vshll.u32 %v651, 16
      %v761 = vrot.slane %v759, 5
      %v762 = vsel %vm700, %v757, %v761
      %v763 = vshrl.u32 %v651, 16
      %v765 = vrot.slane %v763, 4
      %v766 = vor.u32 %v765, %v761
      %v767 = vrot.slane %v766, 4
      %v769 = vshll.u32 %v652, 16
      %v771 = vrot.slane %v769, 5
      %v772 = vsel %vm700, %v767, %v771
      %v774 = vshrl.u32 %v653, 16
      %v776 = vrot.slane %v774, 4
      %v777 = vshll.u32 %v653, 16
      %v779 = vrot.slane %v777, 5
      %v780 = vor.u32 %v776, %v779
      %v781 = vrot.slane %v780, 4
      %v783 = vshll.u32 %v654, 16
      %v785 = vrot.slane %v783, 5
      %v786 = vsel %vm700, %v781, %v785
      %v787 = vshrl.u32 %v654, 16
      %v789 = vrot.slane %v787, 4
      %v790 = vor.u32 %v789, %v785
      %v791 = vrot.slane %v790, 4
      %v793 = vshll.u32 %v655, 16
      %v795 = vrot.slane %v793, 5
      %v796 = vsel %vm700, %v791, %v795
      %v798 = vshrl.u32 %v656, 16
      %v800 = vrot.slane %v798, 4
      %v801 = vshll.u32 %v656, 16
      %v803 = vrot.slane %v801, 5
      %v804 = vor.u32 %v800, %v803
      %v805 = vrot.slane %v804, 4
      %v807 = vshll.u32 %v657, 16
      %v809 = vrot.slane %v807, 5
      %v810 = vsel %vm700, %v805, %v809
      %v811 = vshrl.u32 %v657, 16
      %v813 = vrot.slane %v811, 4
      %v814 = vor.u32 %v813, %v809
      %v815 = vrot.slane %v814, 4
      %v817 = vshll.u32 %v658, 16
      %v819 = vrot.slane %v817, 5
      %v820 = vsel %vm700, %v815, %v819
      %v822 = vshrl.u32 %v659, 16
      %v824 = vrot.slane %v822, 4
      %v825 = vshll.u32 %v659, 16
      %v827 = vrot.slane %v825, 5
      %v828 = vor.u32 %v824, %v827
      %v829 = vrot.slane %v828, 4
      %v831 = vshll.u32 %v660, 16
      %v833 = vrot.slane %v831, 5
      %v834 = vsel %vm700, %v829, %v833
      %v835 = vshrl.u32 %v660, 16
      %v837 = vrot.slane %v835, 4
      %v838 = vor.u32 %v837, %v833
      %v839 = vrot.slane %v838, 4
      %v841 = vshll.u32 %v661, 16
      %v843 = vrot.slane %v841, 5
      %v844 = vsel %vm700, %v839, %v843
      %v846 = vshrl.u32 %v662, 16
      %v848 = vrot.slane %v846, 4
      %v849 = vshll.u32 %v662, 16
      %v851 = vrot.slane %v849, 5
      %v852 = vor.u32 %v848, %v851
      %v853 = vrot.slane %v852, 4
      %v855 = vshll.u32 %v663, 16
      %v857 = vrot.slane %v855, 5
      %v858 = vsel %vm700, %v853, %v857
      %v859 = vshrl.u32 %v663, 16
      %v861 = vrot.slane %v859, 4
      %v862 = vor.u32 %v861, %v857
      %v863 = vrot.slane %v862, 4
      %v865 = vshll.u32 %v664, 16
      %v867 = vrot.slane %v865, 5
      %v868 = vsel %vm700, %v863, %v867
      %v870 = vshrl.u32 %v665, 16
      %v872 = vrot.slane %v870, 4
      %v873 = vshll.u32 %v665, 16
      %v875 = vrot.slane %v873, 5
      %v876 = vor.u32 %v872, %v875
      %v877 = vrot.slane %v876, 4
      %v879 = vshll.u32 %v666, 16
      %v881 = vrot.slane %v879, 5
      %v882 = vsel %vm700, %v877, %v881
      %v883 = vshrl.u32 %v666, 16
      %v885 = vrot.slane %v883, 4
      %v886 = vor.u32 %v885, %v881
      %v887 = vrot.slane %v886, 4
      %v889 = vshll.u32 %v667, 16
      %v891 = vrot.slane %v889, 5
      %v892 = vsel %vm700, %v887, %v891
      %v894 = vshrl.u32 %v668, 16
      %v896 = vrot.slane %v894, 4
      %v897 = vshll.u32 %v668, 16
      %v899 = vrot.slane %v897, 5
      %v900 = vor.u32 %v896, %v899
      %v901 = vrot.slane %v900, 4
      %v903 = vshll.u32 %v669, 16
      %v905 = vrot.slane %v903, 5
      %v906 = vsel %vm700, %v901, %v905
      %v907 = vshrl.u32 %v669, 16
      %v909 = vrot.slane %v907, 4
      %v910 = vor.u32 %v909, %v905
      %v911 = vrot.slane %v910, 4
      %v913 = vshll.u32 %v670, 16
      %v915 = vrot.slane %v913, 5
      %v916 = vsel %vm700, %v911, %v915
      %v918 = vshrl.u32 %v671, 16
      %v920 = vrot.slane %v918, 4
      %v921 = vshll.u32 %v671, 16
      %v923 = vrot.slane %v921, 5
      %v924 = vor.u32 %v920, %v923
      %v925 = vrot.slane %v924, 4
      %v927 = vshll.u32 %v672, 16
      %v929 = vrot.slane %v927, 5
      %v930 = vsel %vm700, %v925, %v929
      %v931 = vshrl.u32 %v672, 16
      %v933 = vrot.slane %v931, 4
      %v934 = vor.u32 %v933, %v929
      %v935 = vrot.slane %v934, 4
      %v937 = vshll.u32 %v673, 16
      %v939 = vrot.slane %v937, 5
      %v940 = vsel %vm700, %v935, %v939
      %v942 = vshrl.u32 %v674, 16
      %v944 = vrot.slane %v942, 4
      %v945 = vshll.u32 %v674, 16
      %v947 = vrot.slane %v945, 5
      %v948 = vor.u32 %v944, %v947
      %v949 = vrot.slane %v948, 4
      %v951 = vshll.u32 %v675, 16
      %v953 = vrot.slane %v951, 5
      %v954 = vsel %vm700, %v949, %v953
      %v955 = vshrl.u32 %v675, 16
      %v957 = vrot.slane %v955, 4
      %v958 = vor.u32 %v957, %v953
      %v959 = vrot.slane %v958, 4
      %v961 = vshll.u32 %v676, 16
      %v963 = vrot.slane %v961, 5
      %v964 = vsel %vm700, %v959, %v963
      %v966 = vshrl.u32 %v677, 16
      %v968 = vrot.slane %v966, 4
      %v969 = vshll.u32 %v677, 16
      %v971 = vrot.slane %v969, 5
      %v972 = vor.u32 %v968, %v971
      %v973 = vrot.slane %v972, 4
      %v975 = vshll.u32 %v678, 16
      %v977 = vrot.slane %v975, 5
      %v978 = vsel %vm700, %v973, %v977
      %v979 = vshrl.u32 %v678, 16
      %v981 = vrot.slane %v979, 4
      %v982 = vor.u32 %v981, %v977
      %v983 = vrot.slane %v982, 4
      %v985 = vshll.u32 %v679, 16
      %v987 = vrot.slane %v985, 5
      %v988 = vsel %vm700, %v983, %v987
      %v990 = vshrl.u32 %v680, 16
      %v992 = vrot.slane %v990, 4
      %v993 = vshll.u32 %v680, 16
      %v995 = vrot.slane %v993, 5
      %v996 = vor.u32 %v992, %v995
      %v997 = vrot.slane %v996, 4
      %v999 = vshll.u32 %v681, 16
      %v1001 = vrot.slane %v999, 5
      %v1002 = vsel %vm700, %v997, %v1001
      %v1003 = vshrl.u32 %v681, 16
      %v1005 = vrot.slane %v1003, 4
      %v1006 = vor.u32 %v1005, %v1001
      %v1007 = vrot.slane %v1006, 4
      %v1009 = vshll.u32 %v682, 16
      %v1011 = vrot.slane %v1009, 5
      %v1012 = vsel %vm700, %v1007, %v1011
      %v1014 = vshrl.u32 %v683, 16
      %v1016 = vrot.slane %v1014, 4
      %v1017 = vshll.u32 %v683, 16
      %v1019 = vrot.slane %v1017, 5
      %v1020 = vor.u32 %v1016, %v1019
      %v1021 = vrot.slane %v1020, 4
      %v1023 = vshll.u32 %v684, 16
      %v1025 = vrot.slane %v1023, 5
      %v1026 = vsel %vm700, %v1021, %v1025
      %v1027 = vshrl.u32 %v684, 16
      %v1029 = vrot.slane %v1027, 4
      %v1030 = vor.u32 %v1029, %v1025
      %v1031 = vrot.slane %v1030, 4
      %v1033 = vshll.u32 %v685, 16
      %v1035 = vrot.slane %v1033, 5
      %v1036 = vsel %vm700, %v1031, %v1035
      %v1038 = vshrl.u32 %v686, 16
      %v1040 = vrot.slane %v1038, 4
      %v1041 = vshll.u32 %v686, 16
      %v1043 = vrot.slane %v1041, 5
      %v1044 = vor.u32 %v1040, %v1043
      %v1045 = vrot.slane %v1044, 4
      %v1047 = vshll.u32 %v687, 16
      %v1049 = vrot.slane %v1047, 5
      %v1050 = vsel %vm700, %v1045, %v1049
      %v1051 = vshrl.u32 %v687, 16
      %v1053 = vrot.slane %v1051, 4
      %v1054 = vor.u32 %v1053, %v1049
      %v1055 = vrot.slane %v1054, 4
      %v1057 = vshll.u32 %v688, 16
      %v1059 = vrot.slane %v1057, 5
      %v1060 = vsel %vm700, %v1055, %v1059
      %v1062 = vshrl.u32 %v689, 16
      %v1064 = vrot.slane %v1062, 4
      %v1065 = vshll.u32 %v689, 16
      %v1067 = vrot.slane %v1065, 5
      %v1068 = vor.u32 %v1064, %v1067
      %v1069 = vrot.slane %v1068, 4
      %v1071 = vshll.u32 %v690, 16
      %v1073 = vrot.slane %v1071, 5
      %v1074 = vsel %vm700, %v1069, %v1073
      %v1075 = vshrl.u32 %v690, 16
      %v1077 = vrot.slane %v1075, 4
      %v1078 = vor.u32 %v1077, %v1073
      %v1079 = vrot.slane %v1078, 4
      %v1081 = vshll.u32 %v691, 16
      %v1083 = vrot.slane %v1081, 5
      %v1084 = vsel %vm700, %v1079, %v1083
      %vm1133 = vcmask 1042432
      %vm1134 = vcmask 1046532
      %vm1135 = vmor %vm1133, %vm1134
      %v1136 = vrot.slane %v644, 5
      %v1137 = vrot.slane %v1136, 4
      %v1138 = vrot.slane %v645, 5
      %v1139 = vsel %vm1135, %v1137, %v1138
      %v1140 = vrot.slane %v1138, 4
      %v1141 = vrot.slane %v646, 5
      %v1142 = vsel %vm1135, %v1140, %v1141
      %v1143 = vrot.slane %v647, 5
      %v1144 = vrot.slane %v1143, 4
      %v1145 = vrot.slane %v648, 5
      %v1146 = vsel %vm1135, %v1144, %v1145
      %v1147 = vrot.slane %v1145, 4
      %v1148 = vrot.slane %v649, 5
      %v1149 = vsel %vm1135, %v1147, %v1148
      %v1150 = vrot.slane %v650, 5
      %v1151 = vrot.slane %v1150, 4
      %v1152 = vrot.slane %v651, 5
      %v1153 = vsel %vm1135, %v1151, %v1152
      %v1154 = vrot.slane %v1152, 4
      %v1155 = vrot.slane %v652, 5
      %v1156 = vsel %vm1135, %v1154, %v1155
      %v1157 = vrot.slane %v653, 5
      %v1158 = vrot.slane %v1157, 4
      %v1159 = vrot.slane %v654, 5
      %v1160 = vsel %vm1135, %v1158, %v1159
      %v1161 = vrot.slane %v1159, 4
      %v1162 = vrot.slane %v655, 5
      %v1163 = vsel %vm1135, %v1161, %v1162
      %v1164 = vrot.slane %v656, 5
      %v1165 = vrot.slane %v1164, 4
      %v1166 = vrot.slane %v657, 5
      %v1167 = vsel %vm1135, %v1165, %v1166
      %v1168 = vrot.slane %v1166, 4
      %v1169 = vrot.slane %v658, 5
      %v1170 = vsel %vm1135, %v1168, %v1169
      %v1171 = vrot.slane %v659, 5
      %v1172 = vrot.slane %v1171, 4
      %v1173 = vrot.slane %v660, 5
      %v1174 = vsel %vm1135, %v1172, %v1173
      %v1175 = vrot.slane %v1173, 4
      %v1176 = vrot.slane %v661, 5
      %v1177 = vsel %vm1135, %v1175, %v1176
      %v1178 = vrot.slane %v662, 5
      %v1179 = vrot.slane %v1178, 4
      %v1180 = vrot.slane %v663, 5
      %v1181 = vsel %vm1135, %v1179, %v1180
      %v1182 = vrot.slane %v1180, 4
      %v1183 = vrot.slane %v664, 5
      %v1184 = vsel %vm1135, %v1182, %v1183
      %v1185 = vrot.slane %v665, 5
      %v1186 = vrot.slane %v1185, 4
      %v1187 = vrot.slane %v666, 5
      %v1188 = vsel %vm1135, %v1186, %v1187
      %v1189 = vrot.slane %v1187, 4
      %v1190 = vrot.slane %v667, 5
      %v1191 = vsel %vm1135, %v1189, %v1190
      %v1192 = vrot.slane %v668, 5
      %v1193 = vrot.slane %v1192, 4
      %v1194 = vrot.slane %v669, 5
      %v1195 = vsel %vm1135, %v1193, %v1194
      %v1196 = vrot.slane %v1194, 4
      %v1197 = vrot.slane %v670, 5
      %v1198 = vsel %vm1135, %v1196, %v1197
      %v1199 = vrot.slane %v671, 5
      %v1200 = vrot.slane %v1199, 4
      %v1201 = vrot.slane %v672, 5
      %v1202 = vsel %vm1135, %v1200, %v1201
      %v1203 = vrot.slane %v1201, 4
      %v1204 = vrot.slane %v673, 5
      %v1205 = vsel %vm1135, %v1203, %v1204
      %v1206 = vrot.slane %v674, 5
      %v1207 = vrot.slane %v1206, 4
      %v1208 = vrot.slane %v675, 5
      %v1209 = vsel %vm1135, %v1207, %v1208
      %v1210 = vrot.slane %v1208, 4
      %v1211 = vrot.slane %v676, 5
      %v1212 = vsel %vm1135, %v1210, %v1211
      %v1213 = vrot.slane %v677, 5
      %v1214 = vrot.slane %v1213, 4
      %v1215 = vrot.slane %v678, 5
      %v1216 = vsel %vm1135, %v1214, %v1215
      %v1217 = vrot.slane %v1215, 4
      %v1218 = vrot.slane %v679, 5
      %v1219 = vsel %vm1135, %v1217, %v1218
      %v1220 = vrot.slane %v680, 5
      %v1221 = vrot.slane %v1220, 4
      %v1222 = vrot.slane %v681, 5
      %v1223 = vsel %vm1135, %v1221, %v1222
      %v1224 = vrot.slane %v1222, 4
      %v1225 = vrot.slane %v682, 5
      %v1226 = vsel %vm1135, %v1224, %v1225
      %v1227 = vrot.slane %v683, 5
      %v1228 = vrot.slane %v1227, 4
      %v1229 = vrot.slane %v684, 5
      %v1230 = vsel %vm1135, %v1228, %v1229
      %v1231 = vrot.slane %v1229, 4
      %v1232 = vrot.slane %v685, 5
      %v1233 = vsel %vm1135, %v1231, %v1232
      %v1234 = vrot.slane %v686, 5
      %v1235 = vrot.slane %v1234, 4
      %v1236 = vrot.slane %v687, 5
      %v1237 = vsel %vm1135, %v1235, %v1236
      %v1238 = vrot.slane %v1236, 4
      %v1239 = vrot.slane %v688, 5
      %v1240 = vsel %vm1135, %v1238, %v1239
      %v1241 = vrot.slane %v689, 5
      %v1242 = vrot.slane %v1241, 4
      %v1243 = vrot.slane %v690, 5
      %v1244 = vsel %vm1135, %v1242, %v1243
      %v1245 = vrot.slane %v1243, 4
      %v1246 = vrot.slane %v691, 5
      %v1247 = vsel %vm1135, %v1245, %v1246
      %v1248 = vunpack.c.l.b16 %v644
      %v1249 = vunpack.c.l.b16 %v645
      %v1250 = vunpack.c.l.b16 %v647
      %v1251 = vunpack.c.l.b16 %v648
      %v1252 = vunpack.c.l.b16 %v650
      %v1253 = vunpack.c.l.b16 %v651
      %v1254 = vunpack.c.l.b16 %v653
      %v1255 = vunpack.c.l.b16 %v654
      %v1256 = vunpack.c.l.b16 %v656
      %v1257 = vunpack.c.l.b16 %v657
      %v1258 = vunpack.c.l.b16 %v659
      %v1259 = vunpack.c.l.b16 %v660
      %v1260 = vunpack.c.l.b16 %v662
      %v1261 = vunpack.c.l.b16 %v663
      %v1262 = vunpack.c.l.b16 %v665
      %v1263 = vunpack.c.l.b16 %v666
      %v1264 = vunpack.c.l.b16 %v668
      %v1265 = vunpack.c.l.b16 %v669
      %v1266 = vunpack.c.l.b16 %v671
      %v1267 = vunpack.c.l.b16 %v672
      %v1268 = vunpack.c.l.b16 %v674
      %v1269 = vunpack.c.l.b16 %v675
      %v1270 = vunpack.c.l.b16 %v677
      %v1271 = vunpack.c.l.b16 %v678
      %v1272 = vunpack.c.l.b16 %v680
      %v1273 = vunpack.c.l.b16 %v681
      %v1274 = vunpack.c.l.b16 %v683
      %v1275 = vunpack.c.l.b16 %v684
      %v1276 = vunpack.c.l.b16 %v686
      %v1277 = vunpack.c.l.b16 %v687
      %v1278 = vunpack.c.l.b16 %v689
      %v1279 = vunpack.c.l.b16 %v690
      %v1280 = vpack.c.b16 %v1249, %v1248
      %v1281 = vpack.c.b16 %v1251, %v1250
      %v1282 = vpack.c.b16 %v1253, %v1252
      %v1283 = vpack.c.b16 %v1255, %v1254
      %v1284 = vpack.c.b16 %v1257, %v1256
      %v1285 = vpack.c.b16 %v1259, %v1258
      %v1286 = vpack.c.b16 %v1261, %v1260
      %v1287 = vpack.c.b16 %v1263, %v1262
      %v1288 = vpack.c.b16 %v1265, %v1264
      %v1289 = vpack.c.b16 %v1267, %v1266
      %v1290 = vpack.c.b16 %v1269, %v1268
      %v1291 = vpack.c.b16 %v1271, %v1270
      %v1292 = vpack.c.b16 %v1273, %v1272
      %v1293 = vpack.c.b16 %v1275, %v1274
      %v1294 = vpack.c.b16 %v1277, %v1276
      %v1295 = vpack.c.b16 %v1279, %v1278
      %v1296 = vunpack.c.l.b16 %v714
      %v1297 = vunpack.c.l.b16 %v724
      %v1298 = vunpack.c.l.b16 %v738
      %v1299 = vunpack.c.l.b16 %v748
      %v1300 = vunpack.c.l.b16 %v762
      %v1301 = vunpack.c.l.b16 %v772
      %v1302 = vunpack.c.l.b16 %v786
      %v1303 = vunpack.c.l.b16 %v796
      %v1304 = vunpack.c.l.b16 %v810
      %v1305 = vunpack.c.l.b16 %v820
      %v1306 = vunpack.c.l.b16 %v834
      %v1307 = vunpack.c.l.b16 %v844
      %v1308 = vunpack.c.l.b16 %v858
      %v1309 = vunpack.c.l.b16 %v868
      %v1310 = vunpack.c.l.b16 %v882
      %v1311 = vunpack.c.l.b16 %v892
      %v1312 = vunpack.c.l.b16 %v906
      %v1313 = vunpack.c.l.b16 %v916
      %v1314 = vunpack.c.l.b16 %v930
      %v1315 = vunpack.c.l.b16 %v940
      %v1316 = vunpack.c.l.b16 %v954
      %v1317 = vunpack.c.l.b16 %v964
      %v1318 = vunpack.c.l.b16 %v978
      %v1319 = vunpack.c.l.b16 %v988
      %v1320 = vunpack.c.l.b16 %v1002
      %v1321 = vunpack.c.l.b16 %v1012
      %v1322 = vunpack.c.l.b16 %v1026
      %v1323 = vunpack.c.l.b16 %v1036
      %v1324 = vunpack.c.l.b16 %v1050
      %v1325 = vunpack.c.l.b16 %v1060
      %v1326 = vunpack.c.l.b16 %v1074
      %v1327 = vunpack.c.l.b16 %v1084
      %v1328 = vpack.c.b16 %v1297, %v1296
      %v1329 = vpack.c.b16 %v1299, %v1298
      %v1330 = vpack.c.b16 %v1301, %v1300
      %v1331 = vpack.c.b16 %v1303, %v1302
      %v1332 = vpack.c.b16 %v1305, %v1304
      %v1333 = vpack.c.b16 %v1307, %v1306
      %v1334 = vpack.c.b16 %v1309, %v1308
      %v1335 = vpack.c.b16 %v1311, %v1310
      %v1336 = vpack.c.b16 %v1313, %v1312
      %v1337 = vpack.c.b16 %v1315, %v1314
      %v1338 = vpack.c.b16 %v1317, %v1316
      %v1339 = vpack.c.b16 %v1319, %v1318
      %v1340 = vpack.c.b16 %v1321, %v1320
      %v1341 = vpack.c.b16 %v1323, %v1322
      %v1342 = vpack.c.b16 %v1325, %v1324
      %v1343 = vpack.c.b16 %v1327, %v1326
      %1344 = vrot.lane.b32.xlu0 %v1328, 64
      %v1345 = vpop.permute.xlu0 %1344
      %1346 = vrot.lane.b32.xlu0 %v1329, 64
      %v1347 = vpop.permute.xlu0 %1346
      %1348 = vrot.lane.b32.xlu0 %v1330, 64
      %v1349 = vpop.permute.xlu0 %1348
      %1350 = vrot.lane.b32.xlu0 %v1331, 64
      %v1351 = vpop.permute.xlu0 %1350
      %1352 = vrot.lane.b32.xlu0 %v1332, 64
      %v1353 = vpop.permute.xlu0 %1352
      %1354 = vrot.lane.b32.xlu0 %v1333, 64
      %v1355 = vpop.permute.xlu0 %1354
      %1356 = vrot.lane.b32.xlu0 %v1334, 64
      %v1357 = vpop.permute.xlu0 %1356
      %1358 = vrot.lane.b32.xlu0 %v1335, 64
      %v1359 = vpop.permute.xlu0 %1358
      %1360 = vrot.lane.b32.xlu0 %v1336, 64
      %v1361 = vpop.permute.xlu0 %1360
      %1362 = vrot.lane.b32.xlu0 %v1337, 64
      %v1363 = vpop.permute.xlu0 %1362
      %1364 = vrot.lane.b32.xlu0 %v1338, 64
      %v1365 = vpop.permute.xlu0 %1364
      %1366 = vrot.lane.b32.xlu0 %v1339, 64
      %v1367 = vpop.permute.xlu0 %1366
      %1368 = vrot.lane.b32.xlu0 %v1340, 64
      %v1369 = vpop.permute.xlu0 %1368
      %1370 = vrot.lane.b32.xlu0 %v1341, 64
      %v1371 = vpop.permute.xlu0 %1370
      %1372 = vrot.lane.b32.xlu0 %v1342, 64
      %v1373 = vpop.permute.xlu0 %1372
      %1374 = vrot.lane.b32.xlu0 %v1343, 64
      %v1375 = vpop.permute.xlu0 %1374
      %v1376 = vunpack.c.l.b16 %v1139
      %v1377 = vunpack.c.l.b16 %v1142
      %v1378 = vunpack.c.l.b16 %v1146
      %v1379 = vunpack.c.l.b16 %v1149
      %v1380 = vunpack.c.l.b16 %v1153
      %v1381 = vunpack.c.l.b16 %v1156
      %v1382 = vunpack.c.l.b16 %v1160
      %v1383 = vunpack.c.l.b16 %v1163
      %v1384 = vunpack.c.l.b16 %v1167
      %v1385 = vunpack.c.l.b16 %v1170
      %v1386 = vunpack.c.l.b16 %v1174
      %v1387 = vunpack.c.l.b16 %v1177
      %v1388 = vunpack.c.l.b16 %v1181
      %v1389 = vunpack.c.l.b16 %v1184
      %v1390 = vunpack.c.l.b16 %v1188
      %v1391 = vunpack.c.l.b16 %v1191
      %v1392 = vunpack.c.l.b16 %v1195
      %v1393 = vunpack.c.l.b16 %v1198
      %v1394 = vunpack.c.l.b16 %v1202
      %v1395 = vunpack.c.l.b16 %v1205
      %v1396 = vunpack.c.l.b16 %v1209
      %v1397 = vunpack.c.l.b16 %v1212
      %v1398 = vunpack.c.l.b16 %v1216
      %v1399 = vunpack.c.l.b16 %v1219
      %v1400 = vunpack.c.l.b16 %v1223
      %v1401 = vunpack.c.l.b16 %v1226
      %v1402 = vunpack.c.l.b16 %v1230
      %v1403 = vunpack.c.l.b16 %v1233
      %v1404 = vunpack.c.l.b16 %v1237
      %v1405 = vunpack.c.l.b16 %v1240
      %v1406 = vunpack.c.l.b16 %v1244
      %v1407 = vunpack.c.l.b16 %v1247
      %v1408 = vpack.c.b16 %v1377, %v1376
      %v1409 = vpack.c.b16 %v1379, %v1378
      %v1410 = vpack.c.b16 %v1381, %v1380
      %v1411 = vpack.c.b16 %v1383, %v1382
      %v1412 = vpack.c.b16 %v1385, %v1384
      %v1413 = vpack.c.b16 %v1387, %v1386
      %v1414 = vpack.c.b16 %v1389, %v1388
      %v1415 = vpack.c.b16 %v1391, %v1390
      %v1416 = vpack.c.b16 %v1393, %v1392
      %v1417 = vpack.c.b16 %v1395, %v1394
      %v1418 = vpack.c.b16 %v1397, %v1396
      %v1419 = vpack.c.b16 %v1399, %v1398
      %v1420 = vpack.c.b16 %v1401, %v1400
      %v1421 = vpack.c.b16 %v1403, %v1402
      %v1422 = vpack.c.b16 %v1405, %v1404
      %v1423 = vpack.c.b16 %v1407, %v1406
      %vm1424 = vcmask 523264
      %v1427 = vsel %vm1424, %v1280, %v1345
      %v1431 = vsel %vm1424, %v1281, %v1347
      %v1435 = vsel %vm1424, %v1282, %v1349
      %v1439 = vsel %vm1424, %v1283, %v1351
      %v1443 = vsel %vm1424, %v1284, %v1353
      %v1447 = vsel %vm1424, %v1285, %v1355
      %v1451 = vsel %vm1424, %v1286, %v1357
      %v1455 = vsel %vm1424, %v1287, %v1359
      %v1459 = vsel %vm1424, %v1288, %v1361
      %v1463 = vsel %vm1424, %v1289, %v1363
      %v1467 = vsel %vm1424, %v1290, %v1365
      %v1471 = vsel %vm1424, %v1291, %v1367
      %v1475 = vsel %vm1424, %v1292, %v1369
      %v1479 = vsel %vm1424, %v1293, %v1371
      %v1483 = vsel %vm1424, %v1294, %v1373
      %v1487 = vsel %vm1424, %v1295, %v1375
      %v1489 = vld [vmem:[%s1] sm:$0xf]
      %v1490 = vld [vmem:[%s1 + $0x4] sm:$0xf]
      %v1491 = vld [vmem:[%s1 + $0x8] sm:$0xf]
      %v1492 = vld [vmem:[%s1 + $0xc] sm:$0xf]
      %v1493 = vld [vmem:[%s1 + $0x10] sm:$0xf]
      %v1494 = vld [vmem:[%s1 + $0x14] sm:$0xf]
      %v1495 = vld [vmem:[%s1 + $0x18] sm:$0xf]
      %v1496 = vld [vmem:[%s1 + $0x1c] sm:$0xf]
      %v1497 = vld [vmem:[%s1 + $0x20] sm:$0xf]
      %v1498 = vld [vmem:[%s1 + $0x24] sm:$0xf]
      %v1499 = vld [vmem:[%s1 + $0x28] sm:$0xf]
      %v1500 = vld [vmem:[%s1 + $0x2c] sm:$0xf]
      %v1501 = vld [vmem:[%s1 + $0x30] sm:$0xf]
      %v1502 = vld [vmem:[%s1 + $0x34] sm:$0xf]
      %v1503 = vld [vmem:[%s1 + $0x38] sm:$0xf]
      %v1504 = vld [vmem:[%s1 + $0x3c] sm:$0xf]
      %v1505 = vld [vmem:[%s1 + $0x40] sm:$0xf]
      %v1506 = vld [vmem:[%s1 + $0x44] sm:$0xf]
      %v1507 = vld [vmem:[%s1 + $0x48] sm:$0xf]
      %v1508 = vld [vmem:[%s1 + $0x4c] sm:$0xf]
      %v1509 = vld [vmem:[%s1 + $0x50] sm:$0xf]
      %v1510 = vld [vmem:[%s1 + $0x54] sm:$0xf]
      %v1511 = vld [vmem:[%s1 + $0x58] sm:$0xf]
      %v1512 = vld [vmem:[%s1 + $0x5c] sm:$0xf]
      %v1514 = vshrl.u32 %v692, 16
      %v1516 = vrot.slane %v1514, 4
      %v1517 = vshll.u32 %v692, 16
      %v1519 = vrot.slane %v1517, 5
      %v1520 = vor.u32 %v1516, %v1519
      %v1521 = vrot.slane %v1520, 4
      %v1523 = vshll.u32 %v693, 16
      %v1525 = vrot.slane %v1523, 5
      %v1526 = vsel %vm700, %v1521, %v1525
      %v1527 = vshrl.u32 %v693, 16
      %v1529 = vrot.slane %v1527, 4
      %v1530 = vor.u32 %v1529, %v1525
      %v1531 = vrot.slane %v1530, 4
      %v1533 = vshll.u32 %v694, 16
      %v1535 = vrot.slane %v1533, 5
      %v1536 = vsel %vm700, %v1531, %v1535
      %v1540 = vrot.slane %v692, 5
      %v1541 = vrot.slane %v1540, 4
      %v1542 = vrot.slane %v693, 5
      %v1543 = vsel %vm1135, %v1541, %v1542
      %v1544 = vrot.slane %v1542, 4
      %v1545 = vrot.slane %v694, 5
      %v1546 = vsel %vm1135, %v1544, %v1545
      %v1547 = vunpack.c.l.b16 %v692
      %v1548 = vunpack.c.l.b16 %v693
      %v1549 = vpack.c.b16 %v1548, %v1547
      %v1550 = vunpack.c.l.b16 %v1526
      %v1551 = vunpack.c.l.b16 %v1536
      %v1552 = vpack.c.b16 %v1551, %v1550
      %1553 = vrot.lane.b32.xlu0 %v1552, 64
      %v1554 = vpop.permute.xlu0 %1553
      %v1555 = vunpack.c.l.b16 %v1543
      %v1556 = vunpack.c.l.b16 %v1546
      %v1557 = vpack.c.b16 %v1556, %v1555
      %v1560 = vsel %vm1424, %v1549, %v1554
      %s1562 = scalar_lea.vmem %s1, 96
      %v1563 = vld [vmem:[%s1562] sm:$0xf]
      %v1564 = vld [vmem:[%s1562 + $0x4] sm:$0xf]
      %v1565 = vld [vmem:[%s1562 + $0x8] sm:$0xf]
      %v1566 = vld [vmem:[%s1562 + $0xc] sm:$0xf]
      %v1567 = vld [vmem:[%s1562 + $0x10] sm:$0xf]
      %v1568 = vld [vmem:[%s1562 + $0x14] sm:$0xf]
      %v1569 = vld [vmem:[%s1562 + $0x18] sm:$0xf]
      %v1570 = vld [vmem:[%s1562 + $0x1c] sm:$0xf]
      %v1571 = vld [vmem:[%s1562 + $0x20] sm:$0xf]
      %v1572 = vld [vmem:[%s1562 + $0x24] sm:$0xf]
      %v1573 = vld [vmem:[%s1562 + $0x28] sm:$0xf]
      %v1574 = vld [vmem:[%s1562 + $0x2c] sm:$0xf]
      %v1575 = vld [vmem:[%s1562 + $0x30] sm:$0xf]
      %v1576 = vld [vmem:[%s1562 + $0x34] sm:$0xf]
      %v1577 = vld [vmem:[%s1562 + $0x38] sm:$0xf]
      %v1578 = vld [vmem:[%s1562 + $0x3c] sm:$0xf]
      %v1579 = vld [vmem:[%s1562 + $0x40] sm:$0xf]
      %v1580 = vld [vmem:[%s1562 + $0x44] sm:$0xf]
      %v1581 = vld [vmem:[%s1562 + $0x48] sm:$0xf]
      %v1582 = vld [vmem:[%s1562 + $0x4c] sm:$0xf]
      %v1583 = vld [vmem:[%s1562 + $0x50] sm:$0xf]
      %v1584 = vld [vmem:[%s1562 + $0x54] sm:$0xf]
      %v1585 = vld [vmem:[%s1562 + $0x58] sm:$0xf]
      %v1586 = vld [vmem:[%s1562 + $0x5c] sm:$0xf]
      %v1611 = vunpack.c.l.b16 %v1563
      %v1612 = vunpack.c.l.b16 %v1564
      %v1613 = vunpack.c.l.b16 %v1565
      %v1614 = vunpack.c.l.b16 %v1566
      %v1615 = vunpack.c.l.b16 %v1567
      %v1616 = vunpack.c.l.b16 %v1568
      %v1617 = vunpack.c.l.b16 %v1569
      %v1618 = vunpack.c.l.b16 %v1570
      %v1619 = vunpack.c.l.b16 %v1571
      %v1620 = vunpack.c.l.b16 %v1572
      %v1621 = vunpack.c.l.b16 %v1573
      %v1622 = vunpack.c.l.b16 %v1574
      %v1623 = vunpack.c.l.b16 %v1575
      %v1624 = vunpack.c.l.b16 %v1576
      %v1625 = vunpack.c.l.b16 %v1577
      %v1626 = vunpack.c.l.b16 %v1578
      %v1627 = vunpack.c.l.b16 %v1579
      %v1628 = vunpack.c.l.b16 %v1580
      %v1629 = vunpack.c.l.b16 %v1581
      %v1630 = vunpack.c.l.b16 %v1582
      %v1631 = vunpack.c.l.b16 %v1583
      %v1632 = vunpack.c.l.b16 %v1584
      %v1633 = vunpack.c.l.b16 %v1585
      %v1634 = vunpack.c.l.b16 %v1586
      %v1635 = vpack.c.b16 %v1612, %v1611
      %v1636 = vpack.c.b16 %v1614, %v1613
      %v1637 = vpack.c.b16 %v1616, %v1615
      %v1638 = vpack.c.b16 %v1618, %v1617
      %v1639 = vpack.c.b16 %v1620, %v1619
      %v1640 = vpack.c.b16 %v1622, %v1621
      %v1641 = vpack.c.b16 %v1624, %v1623
      %v1642 = vpack.c.b16 %v1626, %v1625
      %v1643 = vpack.c.b16 %v1628, %v1627
      %v1644 = vpack.c.b16 %v1630, %v1629
      %v1645 = vpack.c.b16 %v1632, %v1631
      %v1646 = vpack.c.b16 %v1634, %v1633
      %v1660 = vsel %vm1424, %v1409, 0
      %v1663 = vsel %vm1424, %v1410, 0
      %v1666 = vsel %vm1424, %v1411, 0
      %v1669 = vsel %vm1424, %v1412, 0
      %v1672 = vsel %vm1424, %v1413, 0
      %v1675 = vsel %vm1424, %v1414, 0
      %v1678 = vsel %vm1424, %v1415, 0
      %v1681 = vsel %vm1424, %v1416, 0
      %v1684 = vsel %vm1424, %v1417, 0
      %v1687 = vsel %vm1424, %v1418, 0
      %v1690 = vsel %vm1424, %v1419, 0
      %v1693 = vsel %vm1424, %v1420, 0
      %v1696 = vsel %vm1424, %v1421, 0
      %v1699 = vsel %vm1424, %v1422, 0
      %v1702 = vsel %vm1424, %v1423, 0
      %v1705 = vsel %vm1424, %v1557, 0
      %1707 = vmatprep.subr.bf16.mxu0 0
      %1708 = vmatpush1.bf16.msra.mxu0 %v1642
      %1709 = vmatprep.subr.bf16.mxu0 0
      %1710 = vmatpush1.bf16.msra.mxu0 %v1641
      %1711 = vmatprep.subr.bf16.mxu0 0
      %1712 = vmatpush1.bf16.msra.mxu0 %v1640
      %1713 = vmatprep.subr.bf16.mxu0 0
      %1714 = vmatpush1.bf16.msra.mxu0 %v1639
      %1715 = vmatprep.subr.bf16.mxu0 0
      %1716 = vmatpush1.bf16.msra.mxu0 %v1638
      %1717 = vmatprep.subr.bf16.mxu0 0
      %1718 = vmatpush1.bf16.msra.mxu0 %v1637
      %1719 = vmatprep.subr.bf16.mxu0 0
      %1720 = vmatpush1.bf16.msra.mxu0 %v1636
      %1721 = vmatprep.subr.bf16.mxu0 0
      %1722 = vmatpush1.bf16.msra.mxu0 %v1635
      %1723 = vmatprep.subr.bf16.mxu0 0
      %1724 = vmatpush2.bf16.msra.mxu0 0
      %1725 = vmatprep.subr.bf16.mxu0 0
      %1726 = vmatpush2.bf16.msra.mxu0 0
      %1727 = vmatprep.subr.bf16.mxu0 0
      %1728 = vmatpush2.bf16.msra.mxu0 0
      %1729 = vmatprep.subr.bf16.mxu0 0
      %1730 = vmatpush2.bf16.msra.mxu0 0
      %1731 = vmatprep.subr.bf16.mxu0 0
      %1732 = vmatpush2.bf16.msra.mxu0 %v1646
      %1733 = vmatprep.subr.bf16.mxu0 0
      %1734 = vmatpush2.bf16.msra.mxu0 %v1645
      %1735 = vmatprep.subr.bf16.mxu0 0
      %1736 = vmatpush2.bf16.msra.mxu0 %v1644
      %1737 = vmatprep.subr.bf16.mxu0 0
      %1738 = vmatpush2.bf16.msra.mxu0 %v1643
      %1739 = vmatprep.mubr.bf16.mxu0 %v1660
      %1740 = vmatmul.mubr.bf16.gmra.mxu0 %v1431
      %v1741 = vpop.f32.mrf.mxu0
      %v1742 = vadd.f32 0.0, %v1741
      %v1743 = vpop.f32.mrf.mxu0
      %v1744 = vpop.f32.mrf.mxu0
      %v1745 = vadd.f32 0.0, %v1744
      %v1746 = vpop.f32.mrf.mxu0
      %1747 = vmatprep.mubr.bf16.mxu0 %v1663
      %1748 = vmatmul.mubr.bf16.gmra.mxu0 %v1435
      %v1749 = vpop.f32.mrf.mxu0
      %v1750 = vadd.f32 0.0, %v1749
      %v1751 = vpop.f32.mrf.mxu0
      %v1752 = vpop.f32.mrf.mxu0
      %v1753 = vadd.f32 0.0, %v1752
      %v1754 = vpop.f32.mrf.mxu0
      %1755 = vmatprep.mubr.bf16.mxu0 %v1666
      %1756 = vmatmul.mubr.bf16.gmra.mxu0 %v1439
      %v1757 = vpop.f32.mrf.mxu0
      %v1758 = vadd.f32 0.0, %v1757
      %v1759 = vpop.f32.mrf.mxu0
      %v1760 = vpop.f32.mrf.mxu0
      %v1761 = vadd.f32 0.0, %v1760
      %v1762 = vpop.f32.mrf.mxu0
      %1763 = vmatprep.mubr.bf16.mxu0 %v1669
      %1764 = vmatmul.mubr.bf16.gmra.mxu0 %v1443
      %v1765 = vpop.f32.mrf.mxu0
      %v1766 = vadd.f32 0.0, %v1765
      %v1767 = vpop.f32.mrf.mxu0
      %v1768 = vpop.f32.mrf.mxu0
      %v1769 = vadd.f32 0.0, %v1768
      %v1770 = vpop.f32.mrf.mxu0
      %1771 = vmatprep.mubr.bf16.mxu0 %v1672
      %1772 = vmatmul.mubr.bf16.gmra.mxu0 %v1447
      %v1773 = vpop.f32.mrf.mxu0
      %v1774 = vadd.f32 0.0, %v1773
      %v1775 = vpop.f32.mrf.mxu0
      %v1776 = vpop.f32.mrf.mxu0
      %v1777 = vadd.f32 0.0, %v1776
      %v1778 = vpop.f32.mrf.mxu0
      %1779 = vmatprep.mubr.bf16.mxu0 %v1675
      %1780 = vmatmul.mubr.bf16.gmra.mxu0 %v1451
      %v1781 = vpop.f32.mrf.mxu0
      %v1782 = vadd.f32 0.0, %v1781
      %v1783 = vpop.f32.mrf.mxu0
      %v1784 = vpop.f32.mrf.mxu0
      %v1785 = vadd.f32 0.0, %v1784
      %v1786 = vpop.f32.mrf.mxu0
      %1787 = vmatprep.mubr.bf16.mxu0 %v1678
      %1788 = vmatmul.mubr.bf16.gmra.mxu0 %v1455
      %v1789 = vpop.f32.mrf.mxu0
      %v1790 = vadd.f32 0.0, %v1789
      %v1791 = vpop.f32.mrf.mxu0
      %v1792 = vpop.f32.mrf.mxu0
      %v1793 = vadd.f32 0.0, %v1792
      %v1794 = vpop.f32.mrf.mxu0
      %1795 = vmatprep.mubr.bf16.mxu0 %v1681
      %1796 = vmatmul.mubr.bf16.gmra.mxu0 %v1459
      %v1797 = vpop.f32.mrf.mxu0
      %v1798 = vadd.f32 0.0, %v1797
      %v1799 = vpop.f32.mrf.mxu0
      %v1800 = vpop.f32.mrf.mxu0
      %v1801 = vadd.f32 0.0, %v1800
      %v1802 = vpop.f32.mrf.mxu0
      %1803 = vmatprep.mubr.bf16.mxu0 %v1684
      %1804 = vmatmul.mubr.bf16.gmra.mxu0 %v1463
      %v1805 = vpop.f32.mrf.mxu0
      %v1806 = vadd.f32 0.0, %v1805
      %v1807 = vpop.f32.mrf.mxu0
      %v1808 = vpop.f32.mrf.mxu0
      %v1809 = vadd.f32 0.0, %v1808
      %v1810 = vpop.f32.mrf.mxu0
      %1811 = vmatprep.mubr.bf16.mxu0 %v1687
      %1812 = vmatmul.mubr.bf16.gmra.mxu0 %v1467
      %v1813 = vpop.f32.mrf.mxu0
      %v1814 = vadd.f32 0.0, %v1813
      %v1815 = vpop.f32.mrf.mxu0
      %v1816 = vpop.f32.mrf.mxu0
      %v1817 = vadd.f32 0.0, %v1816
      %v1818 = vpop.f32.mrf.mxu0
      %1819 = vmatprep.mubr.bf16.mxu0 %v1690
      %1820 = vmatmul.mubr.bf16.gmra.mxu0 %v1471
      %v1821 = vpop.f32.mrf.mxu0
      %v1822 = vadd.f32 0.0, %v1821
      %v1823 = vpop.f32.mrf.mxu0
      %v1824 = vpop.f32.mrf.mxu0
      %v1825 = vadd.f32 0.0, %v1824
      %v1826 = vpop.f32.mrf.mxu0
      %1827 = vmatprep.mubr.bf16.mxu0 %v1693
      %1828 = vmatmul.mubr.bf16.gmra.mxu0 %v1475
      %v1829 = vpop.f32.mrf.mxu0
      %v1830 = vadd.f32 0.0, %v1829
      %v1831 = vpop.f32.mrf.mxu0
      %v1832 = vpop.f32.mrf.mxu0
      %v1833 = vadd.f32 0.0, %v1832
      %v1834 = vpop.f32.mrf.mxu0
      %1835 = vmatprep.mubr.bf16.mxu0 %v1696
      %1836 = vmatmul.mubr.bf16.gmra.mxu0 %v1479
      %v1837 = vpop.f32.mrf.mxu0
      %v1838 = vadd.f32 0.0, %v1837
      %v1839 = vpop.f32.mrf.mxu0
      %v1840 = vpop.f32.mrf.mxu0
      %v1841 = vadd.f32 0.0, %v1840
      %v1842 = vpop.f32.mrf.mxu0
      %1843 = vmatprep.mubr.bf16.mxu0 %v1699
      %1844 = vmatmul.mubr.bf16.gmra.mxu0 %v1483
      %v1845 = vpop.f32.mrf.mxu0
      %v1846 = vadd.f32 0.0, %v1845
      %v1847 = vpop.f32.mrf.mxu0
      %v1848 = vpop.f32.mrf.mxu0
      %v1849 = vadd.f32 0.0, %v1848
      %v1850 = vpop.f32.mrf.mxu0
      %1851 = vmatprep.mubr.bf16.mxu0 %v1702
      %1852 = vmatmul.mubr.bf16.gmra.mxu0 %v1487
      %v1853 = vpop.f32.mrf.mxu0
      %v1854 = vadd.f32 0.0, %v1853
      %v1855 = vpop.f32.mrf.mxu0
      %v1856 = vpop.f32.mrf.mxu0
      %v1857 = vadd.f32 0.0, %v1856
      %v1858 = vpop.f32.mrf.mxu0
      %1859 = vmatprep.mubr.bf16.mxu0 %v1705
      %1860 = vmatmul.mubr.bf16.gmra.mxu0 %v1560
      %v1861 = vpop.f32.mrf.mxu0
      %v1862 = vadd.f32 0.0, %v1861
      %v1863 = vpop.f32.mrf.mxu0
      %v1864 = vpop.f32.mrf.mxu0
      %v1865 = vadd.f32 0.0, %v1864
      %v1866 = vpop.f32.mrf.mxu0
      %1867 = vdwg.mxu0
      %v1892 = vunpack.c.l.b16 %v1489
      %v1893 = vunpack.c.l.b16 %v1490
      %v1894 = vunpack.c.l.b16 %v1491
      %v1895 = vunpack.c.l.b16 %v1492
      %v1896 = vunpack.c.l.b16 %v1493
      %v1897 = vunpack.c.l.b16 %v1494
      %v1898 = vunpack.c.l.b16 %v1495
      %v1899 = vunpack.c.l.b16 %v1496
      %v1900 = vunpack.c.l.b16 %v1497
      %v1901 = vunpack.c.l.b16 %v1498
      %v1902 = vunpack.c.l.b16 %v1499
      %v1903 = vunpack.c.l.b16 %v1500
      %v1904 = vunpack.c.l.b16 %v1501
      %v1905 = vunpack.c.l.b16 %v1502
      %v1906 = vunpack.c.l.b16 %v1503
      %v1907 = vunpack.c.l.b16 %v1504
      %v1908 = vunpack.c.l.b16 %v1505
      %v1909 = vunpack.c.l.b16 %v1506
      %v1910 = vunpack.c.l.b16 %v1507
      %v1911 = vunpack.c.l.b16 %v1508
      %v1912 = vunpack.c.l.b16 %v1509
      %v1913 = vunpack.c.l.b16 %v1510
      %v1914 = vunpack.c.l.b16 %v1511
      %v1915 = vunpack.c.l.b16 %v1512
      %v1916 = vpack.c.b16 %v1893, %v1892
      %v1917 = vpack.c.b16 %v1895, %v1894
      %v1918 = vpack.c.b16 %v1897, %v1896
      %v1919 = vpack.c.b16 %v1899, %v1898
      %v1920 = vpack.c.b16 %v1901, %v1900
      %v1921 = vpack.c.b16 %v1903, %v1902
      %v1922 = vpack.c.b16 %v1905, %v1904
      %v1923 = vpack.c.b16 %v1907, %v1906
      %v1924 = vpack.c.b16 %v1909, %v1908
      %v1925 = vpack.c.b16 %v1911, %v1910
      %v1926 = vpack.c.b16 %v1913, %v1912
      %v1927 = vpack.c.b16 %v1915, %v1914
      %v1941 = vsel %vm1424, %v1408, 0
      %1943 = vmatprep.subr.bf16.mxu0 0
      %1944 = vmatpush1.bf16.msra.mxu0 %v1923
      %1945 = vmatprep.subr.bf16.mxu0 0
      %1946 = vmatpush1.bf16.msra.mxu0 %v1922
      %1947 = vmatprep.subr.bf16.mxu0 0
      %1948 = vmatpush1.bf16.msra.mxu0 %v1921
      %1949 = vmatprep.subr.bf16.mxu0 0
      %1950 = vmatpush1.bf16.msra.mxu0 %v1920
      %1951 = vmatprep.subr.bf16.mxu0 0
      %1952 = vmatpush1.bf16.msra.mxu0 %v1919
      %1953 = vmatprep.subr.bf16.mxu0 0
      %1954 = vmatpush1.bf16.msra.mxu0 %v1918
      %1955 = vmatprep.subr.bf16.mxu0 0
      %1956 = vmatpush1.bf16.msra.mxu0 %v1917
      %1957 = vmatprep.subr.bf16.mxu0 0
      %1958 = vmatpush1.bf16.msra.mxu0 %v1916
      %1959 = vmatprep.subr.bf16.mxu0 0
      %1960 = vmatpush2.bf16.msra.mxu0 0
      %1961 = vmatprep.subr.bf16.mxu0 0
      %1962 = vmatpush2.bf16.msra.mxu0 0
      %1963 = vmatprep.subr.bf16.mxu0 0
      %1964 = vmatpush2.bf16.msra.mxu0 0
      %1965 = vmatprep.subr.bf16.mxu0 0
      %1966 = vmatpush2.bf16.msra.mxu0 0
      %1967 = vmatprep.subr.bf16.mxu0 0
      %1968 = vmatpush2.bf16.msra.mxu0 %v1927
      %1969 = vmatprep.subr.bf16.mxu0 0
      %1970 = vmatpush2.bf16.msra.mxu0 %v1926
      %1971 = vmatprep.subr.bf16.mxu0 0
      %1972 = vmatpush2.bf16.msra.mxu0 %v1925
      %1973 = vmatprep.subr.bf16.mxu0 0
      %1974 = vmatpush2.bf16.msra.mxu0 %v1924
      %1975 = vmatprep.mubr.bf16.mxu0 %v1941
      %1976 = vmatmul.mubr.bf16.gmra.mxu0 %v1427
      %v1977 = vpop.f32.mrf.mxu0
      %v1978 = vadd.f32 %v1742, %v1977
      %v1979 = vpop.f32.mrf.mxu0
      %v1980 = vpop.f32.mrf.mxu0
      %v1981 = vadd.f32 %v1745, %v1980
      %v1982 = vpop.f32.mrf.mxu0
      %1983 = vmatprep.mubr.bf16.mxu0 %v1660
      %1984 = vmatmul.mubr.bf16.gmra.mxu0 %v1431
      %v1985 = vpop.f32.mrf.mxu0
      %v1986 = vadd.f32 %v1750, %v1985
      %v1987 = vpop.f32.mrf.mxu0
      %v1988 = vpop.f32.mrf.mxu0
      %v1989 = vadd.f32 %v1753, %v1988
      %v1990 = vpop.f32.mrf.mxu0
      %1991 = vmatprep.mubr.bf16.mxu0 %v1663
      %1992 = vmatmul.mubr.bf16.gmra.mxu0 %v1435
      %v1993 = vpop.f32.mrf.mxu0
      %v1994 = vadd.f32 %v1758, %v1993
      %v1995 = vpop.f32.mrf.mxu0
      %v1996 = vpop.f32.mrf.mxu0
      %v1997 = vadd.f32 %v1761, %v1996
      %v1998 = vpop.f32.mrf.mxu0
      %1999 = vmatprep.mubr.bf16.mxu0 %v1666
      %2000 = vmatmul.mubr.bf16.gmra.mxu0 %v1439
      %v2001 = vpop.f32.mrf.mxu0
      %v2002 = vadd.f32 %v1766, %v2001
      %v2003 = vpop.f32.mrf.mxu0
      %v2004 = vpop.f32.mrf.mxu0
      %v2005 = vadd.f32 %v1769, %v2004
      %v2006 = vpop.f32.mrf.mxu0
      %2007 = vmatprep.mubr.bf16.mxu0 %v1669
      %2008 = vmatmul.mubr.bf16.gmra.mxu0 %v1443
      %v2009 = vpop.f32.mrf.mxu0
      %v2010 = vadd.f32 %v1774, %v2009
      %v2011 = vpop.f32.mrf.mxu0
      %v2012 = vpop.f32.mrf.mxu0
      %v2013 = vadd.f32 %v1777, %v2012
      %v2014 = vpop.f32.mrf.mxu0
      %2015 = vmatprep.mubr.bf16.mxu0 %v1672
      %2016 = vmatmul.mubr.bf16.gmra.mxu0 %v1447
      %v2017 = vpop.f32.mrf.mxu0
      %v2018 = vadd.f32 %v1782, %v2017
      %v2019 = vpop.f32.mrf.mxu0
      %v2020 = vpop.f32.mrf.mxu0
      %v2021 = vadd.f32 %v1785, %v2020
      %v2022 = vpop.f32.mrf.mxu0
      %2023 = vmatprep.mubr.bf16.mxu0 %v1675
      %2024 = vmatmul.mubr.bf16.gmra.mxu0 %v1451
      %v2025 = vpop.f32.mrf.mxu0
      %v2026 = vadd.f32 %v1790, %v2025
      %v2027 = vpop.f32.mrf.mxu0
      %v2028 = vpop.f32.mrf.mxu0
      %v2029 = vadd.f32 %v1793, %v2028
      %v2030 = vpop.f32.mrf.mxu0
      %2031 = vmatprep.mubr.bf16.mxu0 %v1678
      %2032 = vmatmul.mubr.bf16.gmra.mxu0 %v1455
      %v2033 = vpop.f32.mrf.mxu0
      %v2034 = vadd.f32 %v1798, %v2033
      %v2035 = vpop.f32.mrf.mxu0
      %v2036 = vpop.f32.mrf.mxu0
      %v2037 = vadd.f32 %v1801, %v2036
      %v2038 = vpop.f32.mrf.mxu0
      %2039 = vmatprep.mubr.bf16.mxu0 %v1681
      %2040 = vmatmul.mubr.bf16.gmra.mxu0 %v1459
      %v2041 = vpop.f32.mrf.mxu0
      %v2042 = vadd.f32 %v1806, %v2041
      %v2043 = vpop.f32.mrf.mxu0
      %v2044 = vpop.f32.mrf.mxu0
      %v2045 = vadd.f32 %v1809, %v2044
      %v2046 = vpop.f32.mrf.mxu0
      %2047 = vmatprep.mubr.bf16.mxu0 %v1684
      %2048 = vmatmul.mubr.bf16.gmra.mxu0 %v1463
      %v2049 = vpop.f32.mrf.mxu0
      %v2050 = vadd.f32 %v1814, %v2049
      %v2051 = vpop.f32.mrf.mxu0
      %v2052 = vpop.f32.mrf.mxu0
      %v2053 = vadd.f32 %v1817, %v2052
      %v2054 = vpop.f32.mrf.mxu0
      %2055 = vmatprep.mubr.bf16.mxu0 %v1687
      %2056 = vmatmul.mubr.bf16.gmra.mxu0 %v1467
      %v2057 = vpop.f32.mrf.mxu0
      %v2058 = vadd.f32 %v1822, %v2057
      %v2059 = vpop.f32.mrf.mxu0
      %v2060 = vpop.f32.mrf.mxu0
      %v2061 = vadd.f32 %v1825, %v2060
      %v2062 = vpop.f32.mrf.mxu0
      %2063 = vmatprep.mubr.bf16.mxu0 %v1690
      %2064 = vmatmul.mubr.bf16.gmra.mxu0 %v1471
      %v2065 = vpop.f32.mrf.mxu0
      %v2066 = vadd.f32 %v1830, %v2065
      %v2067 = vpop.f32.mrf.mxu0
      %v2068 = vpop.f32.mrf.mxu0
      %v2069 = vadd.f32 %v1833, %v2068
      %v2070 = vpop.f32.mrf.mxu0
      %2071 = vmatprep.mubr.bf16.mxu0 %v1693
      %2072 = vmatmul.mubr.bf16.gmra.mxu0 %v1475
      %v2073 = vpop.f32.mrf.mxu0
      %v2074 = vadd.f32 %v1838, %v2073
      %v2075 = vpop.f32.mrf.mxu0
      %v2076 = vpop.f32.mrf.mxu0
      %v2077 = vadd.f32 %v1841, %v2076
      %v2078 = vpop.f32.mrf.mxu0
      %2079 = vmatprep.mubr.bf16.mxu0 %v1696
      %2080 = vmatmul.mubr.bf16.gmra.mxu0 %v1479
      %v2081 = vpop.f32.mrf.mxu0
      %v2082 = vadd.f32 %v1846, %v2081
      %v2083 = vpop.f32.mrf.mxu0
      %v2084 = vpop.f32.mrf.mxu0
      %v2085 = vadd.f32 %v1849, %v2084
      %v2086 = vpop.f32.mrf.mxu0
      %2087 = vmatprep.mubr.bf16.mxu0 %v1699
      %2088 = vmatmul.mubr.bf16.gmra.mxu0 %v1483
      %v2089 = vpop.f32.mrf.mxu0
      %v2090 = vadd.f32 %v1854, %v2089
      %v2091 = vpop.f32.mrf.mxu0
      %v2092 = vpop.f32.mrf.mxu0
      %v2093 = vadd.f32 %v1857, %v2092
      %v2094 = vpop.f32.mrf.mxu0
      %2095 = vmatprep.mubr.bf16.mxu0 %v1702
      %2096 = vmatmul.mubr.bf16.gmra.mxu0 %v1487
      %v2097 = vpop.f32.mrf.mxu0
      %v2098 = vadd.f32 %v1862, %v2097
      %v2099 = vpop.f32.mrf.mxu0
      %v2100 = vpop.f32.mrf.mxu0
      %v2101 = vadd.f32 %v1865, %v2100
      %v2102 = vpop.f32.mrf.mxu0
      %2103 = vdwg.mxu0
      %v2105 = vshrl.u32 %v695, 16
      %v2107 = vrot.slane %v2105, 4
      %v2108 = vshll.u32 %v695, 16
      %v2110 = vrot.slane %v2108, 5
      %v2111 = vor.u32 %v2107, %v2110
      %v2112 = vrot.slane %v2111, 4
      %v2114 = vshll.u32 %v696, 16
      %v2116 = vrot.slane %v2114, 5
      %v2117 = vsel %vm700, %v2112, %v2116
      %v2118 = vshrl.u32 %v696, 16
      %v2120 = vrot.slane %v2118, 4
      %v2121 = vor.u32 %v2120, %v2116
      %v2122 = vrot.slane %v2121, 4
      %v2124 = vshll.u32 %v697, 16
      %v2126 = vrot.slane %v2124, 5
      %v2127 = vsel %vm700, %v2122, %v2126
      %v2131 = vrot.slane %v695, 5
      %v2132 = vrot.slane %v2131, 4
      %v2133 = vrot.slane %v696, 5
      %v2134 = vsel %vm1135, %v2132, %v2133
      %v2135 = vrot.slane %v2133, 4
      %v2136 = vrot.slane %v697, 5
      %v2137 = vsel %vm1135, %v2135, %v2136
      %v2138 = vunpack.c.l.b16 %v695
      %v2139 = vunpack.c.l.b16 %v696
      %v2140 = vpack.c.b16 %v2139, %v2138
      %v2141 = vunpack.c.l.b16 %v2117
      %v2142 = vunpack.c.l.b16 %v2127
      %v2143 = vpack.c.b16 %v2142, %v2141
      %2144 = vrot.lane.b32.xlu0 %v2143, 64
      %v2145 = vpop.permute.xlu0 %2144
      %v2146 = vunpack.c.l.b16 %v2134
      %v2147 = vunpack.c.l.b16 %v2137
      %v2148 = vpack.c.b16 %v2147, %v2146
      %v2151 = vsel %vm1424, %v2140, %v2145
      %s2153 = scalar_lea.vmem %s1, 192
      %v2154 = vld [vmem:[%s2153] sm:$0xf]
      %v2155 = vld [vmem:[%s2153 + $0x4] sm:$0xf]
      %v2156 = vld [vmem:[%s2153 + $0x8] sm:$0xf]
      %v2157 = vld [vmem:[%s2153 + $0xc] sm:$0xf]
      %v2158 = vld [vmem:[%s2153 + $0x10] sm:$0xf]
      %v2159 = vld [vmem:[%s2153 + $0x14] sm:$0xf]
      %v2160 = vld [vmem:[%s2153 + $0x18] sm:$0xf]
      %v2161 = vld [vmem:[%s2153 + $0x1c] sm:$0xf]
      %v2162 = vld [vmem:[%s2153 + $0x20] sm:$0xf]
      %v2163 = vld [vmem:[%s2153 + $0x24] sm:$0xf]
      %v2164 = vld [vmem:[%s2153 + $0x28] sm:$0xf]
      %v2165 = vld [vmem:[%s2153 + $0x2c] sm:$0xf]
      %v2166 = vld [vmem:[%s2153 + $0x30] sm:$0xf]
      %v2167 = vld [vmem:[%s2153 + $0x34] sm:$0xf]
      %v2168 = vld [vmem:[%s2153 + $0x38] sm:$0xf]
      %v2169 = vld [vmem:[%s2153 + $0x3c] sm:$0xf]
      %v2170 = vld [vmem:[%s2153 + $0x40] sm:$0xf]
      %v2171 = vld [vmem:[%s2153 + $0x44] sm:$0xf]
      %v2172 = vld [vmem:[%s2153 + $0x48] sm:$0xf]
      %v2173 = vld [vmem:[%s2153 + $0x4c] sm:$0xf]
      %v2174 = vld [vmem:[%s2153 + $0x50] sm:$0xf]
      %v2175 = vld [vmem:[%s2153 + $0x54] sm:$0xf]
      %v2176 = vld [vmem:[%s2153 + $0x58] sm:$0xf]
      %v2177 = vld [vmem:[%s2153 + $0x5c] sm:$0xf]
      %v2202 = vunpack.c.l.b16 %v2154
      %v2203 = vunpack.c.l.b16 %v2155
      %v2204 = vunpack.c.l.b16 %v2156
      %v2205 = vunpack.c.l.b16 %v2157
      %v2206 = vunpack.c.l.b16 %v2158
      %v2207 = vunpack.c.l.b16 %v2159
      %v2208 = vunpack.c.l.b16 %v2160
      %v2209 = vunpack.c.l.b16 %v2161
      %v2210 = vunpack.c.l.b16 %v2162
      %v2211 = vunpack.c.l.b16 %v2163
      %v2212 = vunpack.c.l.b16 %v2164
      %v2213 = vunpack.c.l.b16 %v2165
      %v2214 = vunpack.c.l.b16 %v2166
      %v2215 = vunpack.c.l.b16 %v2167
      %v2216 = vunpack.c.l.b16 %v2168
      %v2217 = vunpack.c.l.b16 %v2169
      %v2218 = vunpack.c.l.b16 %v2170
      %v2219 = vunpack.c.l.b16 %v2171
      %v2220 = vunpack.c.l.b16 %v2172
      %v2221 = vunpack.c.l.b16 %v2173
      %v2222 = vunpack.c.l.b16 %v2174
      %v2223 = vunpack.c.l.b16 %v2175
      %v2224 = vunpack.c.l.b16 %v2176
      %v2225 = vunpack.c.l.b16 %v2177
      %v2226 = vpack.c.b16 %v2203, %v2202
      %v2227 = vpack.c.b16 %v2205, %v2204
      %v2228 = vpack.c.b16 %v2207, %v2206
      %v2229 = vpack.c.b16 %v2209, %v2208
      %v2230 = vpack.c.b16 %v2211, %v2210
      %v2231 = vpack.c.b16 %v2213, %v2212
      %v2232 = vpack.c.b16 %v2215, %v2214
      %v2233 = vpack.c.b16 %v2217, %v2216
      %v2234 = vpack.c.b16 %v2219, %v2218
      %v2235 = vpack.c.b16 %v2221, %v2220
      %v2236 = vpack.c.b16 %v2223, %v2222
      %v2237 = vpack.c.b16 %v2225, %v2224
      %v2251 = vsel %vm1424, %v2148, 0
      %2253 = vmatprep.subr.bf16.mxu0 0
      %2254 = vmatpush1.bf16.msra.mxu0 %v2233
      %2255 = vmatprep.subr.bf16.mxu0 0
      %2256 = vmatpush1.bf16.msra.mxu0 %v2232
      %2257 = vmatprep.subr.bf16.mxu0 0
      %2258 = vmatpush1.bf16.msra.mxu0 %v2231
      %2259 = vmatprep.subr.bf16.mxu0 0
      %2260 = vmatpush1.bf16.msra.mxu0 %v2230
      %2261 = vmatprep.subr.bf16.mxu0 0
      %2262 = vmatpush1.bf16.msra.mxu0 %v2229
      %2263 = vmatprep.subr.bf16.mxu0 0
      %2264 = vmatpush1.bf16.msra.mxu0 %v2228
      %2265 = vmatprep.subr.bf16.mxu0 0
      %2266 = vmatpush1.bf16.msra.mxu0 %v2227
      %2267 = vmatprep.subr.bf16.mxu0 0
      %2268 = vmatpush1.bf16.msra.mxu0 %v2226
      %2269 = vmatprep.subr.bf16.mxu0 0
      %2270 = vmatpush2.bf16.msra.mxu0 0
      %2271 = vmatprep.subr.bf16.mxu0 0
      %2272 = vmatpush2.bf16.msra.mxu0 0
      %2273 = vmatprep.subr.bf16.mxu0 0
      %2274 = vmatpush2.bf16.msra.mxu0 0
      %2275 = vmatprep.subr.bf16.mxu0 0
      %2276 = vmatpush2.bf16.msra.mxu0 0
      %2277 = vmatprep.subr.bf16.mxu0 0
      %2278 = vmatpush2.bf16.msra.mxu0 %v2237
      %2279 = vmatprep.subr.bf16.mxu0 0
      %2280 = vmatpush2.bf16.msra.mxu0 %v2236
      %2281 = vmatprep.subr.bf16.mxu0 0
      %2282 = vmatpush2.bf16.msra.mxu0 %v2235
      %2283 = vmatprep.subr.bf16.mxu0 0
      %2284 = vmatpush2.bf16.msra.mxu0 %v2234
      %2285 = vmatprep.mubr.bf16.mxu0 %v1663
      %2286 = vmatmul.mubr.bf16.gmra.mxu0 %v1435
      %v2287 = vpop.f32.mrf.mxu0
      %v2288 = vadd.f32 0.0, %v2287
      %v2289 = vpop.f32.mrf.mxu0
      %v2290 = vpop.f32.mrf.mxu0
      %v2291 = vadd.f32 0.0, %v2290
      %v2292 = vpop.f32.mrf.mxu0
      %2293 = vmatprep.mubr.bf16.mxu0 %v1666
      %2294 = vmatmul.mubr.bf16.gmra.mxu0 %v1439
      %v2295 = vpop.f32.mrf.mxu0
      %v2296 = vadd.f32 0.0, %v2295
      %v2297 = vpop.f32.mrf.mxu0
      %v2298 = vpop.f32.mrf.mxu0
      %v2299 = vadd.f32 0.0, %v2298
      %v2300 = vpop.f32.mrf.mxu0
      %2301 = vmatprep.mubr.bf16.mxu0 %v1669
      %2302 = vmatmul.mubr.bf16.gmra.mxu0 %v1443
      %v2303 = vpop.f32.mrf.mxu0
      %v2304 = vadd.f32 0.0, %v2303
      %v2305 = vpop.f32.mrf.mxu0
      %v2306 = vpop.f32.mrf.mxu0
      %v2307 = vadd.f32 0.0, %v2306
      %v2308 = vpop.f32.mrf.mxu0
      %2309 = vmatprep.mubr.bf16.mxu0 %v1672
      %2310 = vmatmul.mubr.bf16.gmra.mxu0 %v1447
      %v2311 = vpop.f32.mrf.mxu0
      %v2312 = vadd.f32 0.0, %v2311
      %v2313 = vpop.f32.mrf.mxu0
      %v2314 = vpop.f32.mrf.mxu0
      %v2315 = vadd.f32 0.0, %v2314
      %v2316 = vpop.f32.mrf.mxu0
      %2317 = vmatprep.mubr.bf16.mxu0 %v1675
      %2318 = vmatmul.mubr.bf16.gmra.mxu0 %v1451
      %v2319 = vpop.f32.mrf.mxu0
      %v2320 = vadd.f32 0.0, %v2319
      %v2321 = vpop.f32.mrf.mxu0
      %v2322 = vpop.f32.mrf.mxu0
      %v2323 = vadd.f32 0.0, %v2322
      %v2324 = vpop.f32.mrf.mxu0
      %2325 = vmatprep.mubr.bf16.mxu0 %v1678
      %2326 = vmatmul.mubr.bf16.gmra.mxu0 %v1455
      %v2327 = vpop.f32.mrf.mxu0
      %v2328 = vadd.f32 0.0, %v2327
      %v2329 = vpop.f32.mrf.mxu0
      %v2330 = vpop.f32.mrf.mxu0
      %v2331 = vadd.f32 0.0, %v2330
      %v2332 = vpop.f32.mrf.mxu0
      %2333 = vmatprep.mubr.bf16.mxu0 %v1681
      %2334 = vmatmul.mubr.bf16.gmra.mxu0 %v1459
      %v2335 = vpop.f32.mrf.mxu0
      %v2336 = vadd.f32 0.0, %v2335
      %v2337 = vpop.f32.mrf.mxu0
      %v2338 = vpop.f32.mrf.mxu0
      %v2339 = vadd.f32 0.0, %v2338
      %v2340 = vpop.f32.mrf.mxu0
      %2341 = vmatprep.mubr.bf16.mxu0 %v1684
      %2342 = vmatmul.mubr.bf16.gmra.mxu0 %v1463
      %v2343 = vpop.f32.mrf.mxu0
      %v2344 = vadd.f32 0.0, %v2343
      %v2345 = vpop.f32.mrf.mxu0
      %v2346 = vpop.f32.mrf.mxu0
      %v2347 = vadd.f32 0.0, %v2346
      %v2348 = vpop.f32.mrf.mxu0
      %2349 = vmatprep.mubr.bf16.mxu0 %v1687
      %2350 = vmatmul.mubr.bf16.gmra.mxu0 %v1467
      %v2351 = vpop.f32.mrf.mxu0
      %v2352 = vadd.f32 0.0, %v2351
      %v2353 = vpop.f32.mrf.mxu0
      %v2354 = vpop.f32.mrf.mxu0
      %v2355 = vadd.f32 0.0, %v2354
      %v2356 = vpop.f32.mrf.mxu0
      %2357 = vmatprep.mubr.bf16.mxu0 %v1690
      %2358 = vmatmul.mubr.bf16.gmra.mxu0 %v1471
      %v2359 = vpop.f32.mrf.mxu0
      %v2360 = vadd.f32 0.0, %v2359
      %v2361 = vpop.f32.mrf.mxu0
      %v2362 = vpop.f32.mrf.mxu0
      %v2363 = vadd.f32 0.0, %v2362
      %v2364 = vpop.f32.mrf.mxu0
      %2365 = vmatprep.mubr.bf16.mxu0 %v1693
      %2366 = vmatmul.mubr.bf16.gmra.mxu0 %v1475
      %v2367 = vpop.f32.mrf.mxu0
      %v2368 = vadd.f32 0.0, %v2367
      %v2369 = vpop.f32.mrf.mxu0
      %v2370 = vpop.f32.mrf.mxu0
      %v2371 = vadd.f32 0.0, %v2370
      %v2372 = vpop.f32.mrf.mxu0
      %2373 = vmatprep.mubr.bf16.mxu0 %v1696
      %2374 = vmatmul.mubr.bf16.gmra.mxu0 %v1479
      %v2375 = vpop.f32.mrf.mxu0
      %v2376 = vadd.f32 0.0, %v2375
      %v2377 = vpop.f32.mrf.mxu0
      %v2378 = vpop.f32.mrf.mxu0
      %v2379 = vadd.f32 0.0, %v2378
      %v2380 = vpop.f32.mrf.mxu0
      %2381 = vmatprep.mubr.bf16.mxu0 %v1699
      %2382 = vmatmul.mubr.bf16.gmra.mxu0 %v1483
      %v2383 = vpop.f32.mrf.mxu0
      %v2384 = vadd.f32 0.0, %v2383
      %v2385 = vpop.f32.mrf.mxu0
      %v2386 = vpop.f32.mrf.mxu0
      %v2387 = vadd.f32 0.0, %v2386
      %v2388 = vpop.f32.mrf.mxu0
      %2389 = vmatprep.mubr.bf16.mxu0 %v1702
      %2390 = vmatmul.mubr.bf16.gmra.mxu0 %v1487
      %v2391 = vpop.f32.mrf.mxu0
      %v2392 = vadd.f32 0.0, %v2391
      %v2393 = vpop.f32.mrf.mxu0
      %v2394 = vpop.f32.mrf.mxu0
      %v2395 = vadd.f32 0.0, %v2394
      %v2396 = vpop.f32.mrf.mxu0
      %2397 = vmatprep.mubr.bf16.mxu0 %v1705
      %2398 = vmatmul.mubr.bf16.gmra.mxu0 %v1560
      %v2399 = vpop.f32.mrf.mxu0
      %v2400 = vadd.f32 0.0, %v2399
      %v2401 = vpop.f32.mrf.mxu0
      %v2402 = vpop.f32.mrf.mxu0
      %v2403 = vadd.f32 0.0, %v2402
      %v2404 = vpop.f32.mrf.mxu0
      %2405 = vmatprep.mubr.bf16.mxu0 %v2251
      %2406 = vmatmul.mubr.bf16.gmra.mxu0 %v2151
      %v2407 = vpop.f32.mrf.mxu0
      %v2408 = vadd.f32 0.0, %v2407
      %v2409 = vpop.f32.mrf.mxu0
      %v2410 = vpop.f32.mrf.mxu0
      %v2411 = vadd.f32 0.0, %v2410
      %v2412 = vpop.f32.mrf.mxu0
      %2413 = vdwg.mxu0
      %v2414 = vadd.f32 %v1978, %v2288
      %v2415 = vadd.f32 %v1981, %v2291
      %v2416 = vadd.f32 %v1986, %v2296
      %v2417 = vadd.f32 %v1989, %v2299
      %v2418 = vadd.f32 %v1994, %v2304
      %v2419 = vadd.f32 %v1997, %v2307
      %v2420 = vadd.f32 %v2002, %v2312
      %v2421 = vadd.f32 %v2005, %v2315
      %v2422 = vadd.f32 %v2010, %v2320
      %v2423 = vadd.f32 %v2013, %v2323
      %v2424 = vadd.f32 %v2018, %v2328
      %v2425 = vadd.f32 %v2021, %v2331
      %v2426 = vadd.f32 %v2026, %v2336
      %v2427 = vadd.f32 %v2029, %v2339
      %v2428 = vadd.f32 %v2034, %v2344
      %v2429 = vadd.f32 %v2037, %v2347
      %v2430 = vadd.f32 %v2042, %v2352
      %v2431 = vadd.f32 %v2045, %v2355
      %v2432 = vadd.f32 %v2050, %v2360
      %v2433 = vadd.f32 %v2053, %v2363
      %v2434 = vadd.f32 %v2058, %v2368
      %v2435 = vadd.f32 %v2061, %v2371
      %v2436 = vadd.f32 %v2066, %v2376
      %v2437 = vadd.f32 %v2069, %v2379
      %v2438 = vadd.f32 %v2074, %v2384
      %v2439 = vadd.f32 %v2077, %v2387
      %v2440 = vadd.f32 %v2082, %v2392
      %v2441 = vadd.f32 %v2085, %v2395
      %v2442 = vadd.f32 %v2090, %v2400
      %v2443 = vadd.f32 %v2093, %v2403
      %v2444 = vadd.f32 %v2098, %v2408
      %v2445 = vadd.f32 %v2101, %v2411
      %2446 = vmatprep.subr.mxu0 0.0
      %2447 = vmatpush1.msra.mxu0 %v2429
      %2448 = vmatprep.subr.mxu0 0.0
      %2449 = vmatpush1.msra.mxu0 %v2428
      %2450 = vmatprep.subr.mxu0 0.0
      %2451 = vmatpush1.msra.mxu0 %v2427
      %2452 = vmatprep.subr.mxu0 0.0
      %2453 = vmatpush1.msra.mxu0 %v2426
      %2454 = vmatprep.subr.mxu0 0.0
      %2455 = vmatpush1.msra.mxu0 %v2425
      %2456 = vmatprep.subr.mxu0 0.0
      %2457 = vmatpush1.msra.mxu0 %v2424
      %2458 = vmatprep.subr.mxu0 0.0
      %2459 = vmatpush1.msra.mxu0 %v2423
      %2460 = vmatprep.subr.mxu0 0.0
      %2461 = vmatpush1.msra.mxu0 %v2422
      %2462 = vmatprep.subr.mxu0 0.0
      %2463 = vmatpush1.msra.mxu0 %v2421
      %2464 = vmatprep.subr.mxu0 0.0
      %2465 = vmatpush1.msra.mxu0 %v2420
      %2466 = vmatprep.subr.mxu0 0.0
      %2467 = vmatpush1.msra.mxu0 %v2419
      %2468 = vmatprep.subr.mxu0 0.0
      %2469 = vmatpush1.msra.mxu0 %v2418
      %2470 = vmatprep.subr.mxu0 0.0
      %2471 = vmatpush1.msra.mxu0 %v2417
      %2472 = vmatprep.subr.mxu0 0.0
      %2473 = vmatpush1.msra.mxu0 %v2416
      %2474 = vmatprep.subr.mxu0 0.0
      %2475 = vmatpush1.msra.mxu0 %v2415
      %2476 = vmatprep.subr.mxu0 0.0
      %2477 = vmatpush1.msra.mxu0 %v2414
      %2478 = vmatprep.subr.mxu0 0.0
      %2479 = vmatpush2.msra.mxu0 %v2445
      %2480 = vmatprep.subr.mxu0 0.0
      %2481 = vmatpush2.msra.mxu0 %v2444
      %2482 = vmatprep.subr.mxu0 0.0
      %2483 = vmatpush2.msra.mxu0 %v2443
      %2484 = vmatprep.subr.mxu0 0.0
      %2485 = vmatpush2.msra.mxu0 %v2442
      %2486 = vmatprep.subr.mxu0 0.0
      %2487 = vmatpush2.msra.mxu0 %v2441
      %2488 = vmatprep.subr.mxu0 0.0
      %2489 = vmatpush2.msra.mxu0 %v2440
      %2490 = vmatprep.subr.mxu0 0.0
      %2491 = vmatpush2.msra.mxu0 %v2439
      %2492 = vmatprep.subr.mxu0 0.0
      %2493 = vmatpush2.msra.mxu0 %v2438
      %2494 = vmatprep.subr.mxu0 0.0
      %2495 = vmatpush2.msra.mxu0 %v2437
      %2496 = vmatprep.subr.mxu0 0.0
      %2497 = vmatpush2.msra.mxu0 %v2436
      %2498 = vmatprep.subr.mxu0 0.0
      %2499 = vmatpush2.msra.mxu0 %v2435
      %2500 = vmatprep.subr.mxu0 0.0
      %2501 = vmatpush2.msra.mxu0 %v2434
      %2502 = vmatprep.subr.mxu0 0.0
      %2503 = vmatpush2.msra.mxu0 %v2433
      %2504 = vmatprep.subr.mxu0 0.0
      %2505 = vmatpush2.msra.mxu0 %v2432
      %2506 = vmatprep.subr.mxu0 0.0
      %2507 = vmatpush2.msra.mxu0 %v2431
      %2508 = vmatprep.subr.mxu0 0.0
      %2509 = vmatpush2.msra.mxu0 %v2430
      %2510 = vmatprep.mubr.f32.mxu0 1.0
      %2511 = vmatmul.mubr.f32.gmra.mxu0 1.0
      %v2512 = vpop.f32.mrf.mxu0
      %v2513 = vadd.f32 0.0, %v2512
      %v2514 = vpop.f32.mrf.mxu0
      %2515 = vdwg.mxu0
      %v2516 = vmul.f32 %v2414, %v2414
      %v2517 = vmul.f32 %v2415, %v2415
      %v2518 = vmul.f32 %v2416, %v2416
      %v2519 = vmul.f32 %v2417, %v2417
      %v2520 = vmul.f32 %v2418, %v2418
      %v2521 = vmul.f32 %v2419, %v2419
      %v2522 = vmul.f32 %v2420, %v2420
      %v2523 = vmul.f32 %v2421, %v2421
      %v2524 = vmul.f32 %v2422, %v2422
      %v2525 = vmul.f32 %v2423, %v2423
      %v2526 = vmul.f32 %v2424, %v2424
      %v2527 = vmul.f32 %v2425, %v2425
      %v2528 = vmul.f32 %v2426, %v2426
      %v2529 = vmul.f32 %v2427, %v2427
      %v2530 = vmul.f32 %v2428, %v2428
      %v2531 = vmul.f32 %v2429, %v2429
      %v2532 = vmul.f32 %v2430, %v2430
      %v2533 = vmul.f32 %v2431, %v2431
      %v2534 = vmul.f32 %v2432, %v2432
      %v2535 = vmul.f32 %v2433, %v2433
      %v2536 = vmul.f32 %v2434, %v2434
      %v2537 = vmul.f32 %v2435, %v2435
      %v2538 = vmul.f32 %v2436, %v2436
      %v2539 = vmul.f32 %v2437, %v2437
      %v2540 = vmul.f32 %v2438, %v2438
      %v2541 = vmul.f32 %v2439, %v2439
      %v2542 = vmul.f32 %v2440, %v2440
      %v2543 = vmul.f32 %v2441, %v2441
      %v2544 = vmul.f32 %v2442, %v2442
      %v2545 = vmul.f32 %v2443, %v2443
      %v2546 = vmul.f32 %v2444, %v2444
      %v2547 = vmul.f32 %v2445, %v2445
      %2548 = vmatprep.subr.mxu0 0.0
      %2549 = vmatpush1.msra.mxu0 %v2531
      %2550 = vmatprep.subr.mxu0 0.0
      %2551 = vmatpush1.msra.mxu0 %v2530
      %2552 = vmatprep.subr.mxu0 0.0
      %2553 = vmatpush1.msra.mxu0 %v2529
      %2554 = vmatprep.subr.mxu0 0.0
      %2555 = vmatpush1.msra.mxu0 %v2528
      %2556 = vmatprep.subr.mxu0 0.0
      %2557 = vmatpush1.msra.mxu0 %v2527
      %2558 = vmatprep.subr.mxu0 0.0
      %2559 = vmatpush1.msra.mxu0 %v2526
      %2560 = vmatprep.subr.mxu0 0.0
      %2561 = vmatpush1.msra.mxu0 %v2525
      %2562 = vmatprep.subr.mxu0 0.0
      %2563 = vmatpush1.msra.mxu0 %v2524
      %2564 = vmatprep.subr.mxu0 0.0
      %2565 = vmatpush1.msra.mxu0 %v2523
      %2566 = vmatprep.subr.mxu0 0.0
      %2567 = vmatpush1.msra.mxu0 %v2522
      %2568 = vmatprep.subr.mxu0 0.0
      %2569 = vmatpush1.msra.mxu0 %v2521
      %2570 = vmatprep.subr.mxu0 0.0
      %2571 = vmatpush1.msra.mxu0 %v2520
      %2572 = vmatprep.subr.mxu0 0.0
      %2573 = vmatpush1.msra.mxu0 %v2519
      %2574 = vmatprep.subr.mxu0 0.0
      %2575 = vmatpush1.msra.mxu0 %v2518
      %2576 = vmatprep.subr.mxu0 0.0
      %2577 = vmatpush1.msra.mxu0 %v2517
      %2578 = vmatprep.subr.mxu0 0.0
      %2579 = vmatpush1.msra.mxu0 %v2516
      %2580 = vmatprep.subr.mxu0 0.0
      %2581 = vmatpush2.msra.mxu0 %v2547
      %2582 = vmatprep.subr.mxu0 0.0
      %2583 = vmatpush2.msra.mxu0 %v2546
      %2584 = vmatprep.subr.mxu0 0.0
      %2585 = vmatpush2.msra.mxu0 %v2545
      %2586 = vmatprep.subr.mxu0 0.0
      %2587 = vmatpush2.msra.mxu0 %v2544
      %2588 = vmatprep.subr.mxu0 0.0
      %2589 = vmatpush2.msra.mxu0 %v2543
      %2590 = vmatprep.subr.mxu0 0.0
      %2591 = vmatpush2.msra.mxu0 %v2542
      %2592 = vmatprep.subr.mxu0 0.0
      %2593 = vmatpush2.msra.mxu0 %v2541
      %2594 = vmatprep.subr.mxu0 0.0
      %2595 = vmatpush2.msra.mxu0 %v2540
      %2596 = vmatprep.subr.mxu0 0.0
      %2597 = vmatpush2.msra.mxu0 %v2539
      %2598 = vmatprep.subr.mxu0 0.0
      %2599 = vmatpush2.msra.mxu0 %v2538
      %2600 = vmatprep.subr.mxu0 0.0
      %2601 = vmatpush2.msra.mxu0 %v2537
      %2602 = vmatprep.subr.mxu0 0.0
      %2603 = vmatpush2.msra.mxu0 %v2536
      %2604 = vmatprep.subr.mxu0 0.0
      %2605 = vmatpush2.msra.mxu0 %v2535
      %2606 = vmatprep.subr.mxu0 0.0
      %2607 = vmatpush2.msra.mxu0 %v2534
      %2608 = vmatprep.subr.mxu0 0.0
      %2609 = vmatpush2.msra.mxu0 %v2533
      %2610 = vmatprep.subr.mxu0 0.0
      %2611 = vmatpush2.msra.mxu0 %v2532
      %2612 = vmatprep.mubr.f32.mxu0 1.0
      %2613 = vmatmul.mubr.f32.gmra.mxu0 1.0
      %v2614 = vpop.f32.mrf.mxu0
      %v2615 = vadd.f32 0.0, %v2614
      %v2616 = vpop.f32.mrf.mxu0
      %2617 = vdwg.mxu0
      %v2619 = vrot.slane %v2615, 7
      %vm2621 = vcmask 1040384
      %v2622 = vsel %vm2621, %v2513, %v2619
      %vm2623 = vcmask 517120
      %2624 = vst.msk [vmem:[%s181] sm:$0x3] %vm2623, %v2622
      %2625 = vst.msk [vmem:[%s177] sm:$0xff] %vm1424, %v2414
      %2626 = vst.msk [vmem:[%s177 + $0x8] sm:$0xff] %vm1424, %v2415
      %2627 = vst.msk [vmem:[%s177 + $0x10] sm:$0xff] %vm1424, %v2416
      %2628 = vst.msk [vmem:[%s177 + $0x18] sm:$0xff] %vm1424, %v2417
      %2629 = vst.msk [vmem:[%s177 + $0x20] sm:$0xff] %vm1424, %v2418
      %2630 = vst.msk [vmem:[%s177 + $0x28] sm:$0xff] %vm1424, %v2419
      %2631 = vst.msk [vmem:[%s177 + $0x30] sm:$0xff] %vm1424, %v2420
      %2632 = vst.msk [vmem:[%s177 + $0x38] sm:$0xff] %vm1424, %v2421
      %2633 = vst.msk [vmem:[%s177 + $0x40] sm:$0xff] %vm1424, %v2422
      %2634 = vst.msk [vmem:[%s177 + $0x48] sm:$0xff] %vm1424, %v2423
      %2635 = vst.msk [vmem:[%s177 + $0x50] sm:$0xff] %vm1424, %v2424
      %2636 = vst.msk [vmem:[%s177 + $0x58] sm:$0xff] %vm1424, %v2425
      %2637 = vst.msk [vmem:[%s177 + $0x60] sm:$0xff] %vm1424, %v2426
      %2638 = vst.msk [vmem:[%s177 + $0x68] sm:$0xff] %vm1424, %v2427
      %2639 = vst.msk [vmem:[%s177 + $0x70] sm:$0xff] %vm1424, %v2428
      %2640 = vst.msk [vmem:[%s177 + $0x78] sm:$0xff] %vm1424, %v2429
      %2641 = vst.msk [vmem:[%s177 + $0x80] sm:$0xff] %vm1424, %v2430
      %2642 = vst.msk [vmem:[%s177 + $0x88] sm:$0xff] %vm1424, %v2431
      %2643 = vst.msk [vmem:[%s177 + $0x90] sm:$0xff] %vm1424, %v2432
      %2644 = vst.msk [vmem:[%s177 + $0x98] sm:$0xff] %vm1424, %v2433
      %2645 = vst.msk [vmem:[%s177 + $0xa0] sm:$0xff] %vm1424, %v2434
      %2646 = vst.msk [vmem:[%s177 + $0xa8] sm:$0xff] %vm1424, %v2435
      %2647 = vst.msk [vmem:[%s177 + $0xb0] sm:$0xff] %vm1424, %v2436
      %2648 = vst.msk [vmem:[%s177 + $0xb8] sm:$0xff] %vm1424, %v2437
      %2649 = vst.msk [vmem:[%s177 + $0xc0] sm:$0xff] %vm1424, %v2438
      %2650 = vst.msk [vmem:[%s177 + $0xc8] sm:$0xff] %vm1424, %v2439
      %2651 = vst.msk [vmem:[%s177 + $0xd0] sm:$0xff] %vm1424, %v2440
      %2652 = vst.msk [vmem:[%s177 + $0xd8] sm:$0xff] %vm1424, %v2441
      %2653 = vst.msk [vmem:[%s177 + $0xe0] sm:$0xff] %vm1424, %v2442
      %2654 = vst.msk [vmem:[%s177 + $0xe8] sm:$0xff] %vm1424, %v2443
      %2655 = vst.msk [vmem:[%s177 + $0xf0] sm:$0xff] %vm1424, %v2444
      %2656 = vst.msk [vmem:[%s177 + $0xf8] sm:$0xff] %vm1424, %v2445
      %p2657 = scmp.lt.s32.totalorder %s15, 3
      %s2658 = scalar_select %p2657, %s15, 3
      %s2659 = smul.addr %s2658, 32
      %s2660 = smul.addr %s2659, 8
      %s2661 = scalar_lea.vmem %s2, %s2660
      %p2662 = scmp.lt.s32.totalorder %s15, 3
      %s2663 = scalar_select %p2662, %s15, 3
      %s2664 = smul.addr %s2663, 2
      %s2665 = scalar_lea.vmem %s3, %s2664
      // Predicated region
      $region29: #{residual_block_nhwc.3} parent=27 // pred_check
        %p2666 = pneg %p80
      $region30: #{residual_block_nhwc.3} parent=27 // pred_check_branch
        %2668 = sbr.rel (%p2666) target = $region32
      $region31: #{residual_block_nhwc.3} parent=27 // pred_region
        _
      $region32: #{residual_block_nhwc.3} parent=27 // pred_fallthru
        _
      // Predicated region
      $region33: #{residual_block_nhwc.3} parent=27 // pred_check
        %p2669 = pneg %p106
      $region34: #{residual_block_nhwc.3} parent=27 // pred_check_branch
        %2671 = sbr.rel (%p2669) target = $region36
      $region35: #{residual_block_nhwc.3} parent=27 // pred_region
        _
      $region36: #{residual_block_nhwc.3} parent=27 // pred_fallthru
        _
    $region28: #{residual_block_nhwc.3} parent=5 // pred_fallthru
      _
    %p2672 = scmp.le.s32.totalorder 2, %s10
    // Predicated region
    $region37: #{residual_block_nhwc.3} parent=5 // pred_check
      %p2673 = pneg %p2672
    $region38: #{residual_block_nhwc.3} parent=5 // pred_check_branch
      %2675 = sbr.rel (%p2673) target = $region40
    $region39: #{residual_block_nhwc.3} parent=5 // pred_region
      %s2676 = ssub.s32 %s10, 2
      // Predicated region
      $region41: #{residual_block_nhwc.3} parent=39 // pred_check
        %p2677 = pneg %p86
      $region42: #{residual_block_nhwc.3} parent=39 // pred_check_branch
        %2679 = sbr.rel (%p2677) target = $region44
      $region43: #{residual_block_nhwc.3} parent=39 // pred_region
        %p2680 = scmp.lt.s32.totalorder %s16, 3
        %s2681 = scalar_select %p2680, %s16, 3
        %s2682 = smul.addr %s2681, 32
        %s2683 = smul.addr %s2682, 8
        %s2684 = scalar_lea.vmem %s2, %s2683
      $region44: #{residual_block_nhwc.3} parent=39 // pred_fallthru
        _
      // Predicated region
      $region45: #{residual_block_nhwc.3} parent=39 // pred_check
        %p2685 = pneg %p112
      $region46: #{residual_block_nhwc.3} parent=39 // pred_check_branch
        %2687 = sbr.rel (%p2685) target = $region48
      $region47: #{residual_block_nhwc.3} parent=39 // pred_region
        %p2688 = scmp.lt.s32.totalorder %s16, 3
        %s2689 = scalar_select %p2688, %s16, 3
        %s2690 = smul.addr %s2689, 2
        %s2691 = scalar_lea.vmem %s3, %s2690
      $region48: #{residual_block_nhwc.3} parent=39 // pred_fallthru
        _
    $region40: #{residual_block_nhwc.3} parent=5 // pred_fallthru
      _
  $region6: #{residual_block_nhwc.3} parent=0 // loop_footer
    %s14 = sadd.s32 1, %s10
  $region7: #{residual_block_nhwc.3} parent=0 // loop_footer_branch
    %9 = sbr.rel target = $region3
  $region8: #{residual_block_nhwc.3} parent=0 // loop_exit
    _

</llo_original>
